<compile_context>
chip_gen: v5e
topology: v5e:2x2
jax: 0.10.0
libtpu: 0.0.40
codegen_flags: <defaults>
</compile_context>

<pallas_src>
import jax
import jax.numpy as jnp
from jax.experimental import pallas as pl
from jax.experimental.pallas import tpu as pltpu


# ---------------------------------------------------------------------------
# Fused kernel: per-chunk gather+mean prologue, then vocab-tiled projection.
# ---------------------------------------------------------------------------
def _cbow_fused_kernel(idx_ref, emb_hbm, w_ref, b_ref, out_ref,
                       rows_ref, mean_ref, sem_ref):
    # idx_ref : SMEM (B, C) int32   (scalar-prefetch operand)
    # emb_hbm : HBM  (V, D) f32     (never copied wholesale)
    # w_ref   : VMEM (D, TN) bf16   (streamed / auto double-buffered per tile)
    # b_ref   : VMEM (1, TN) f32
    # out_ref : VMEM (B, TN) f32
    # rows_ref: VMEM (B*C, D) f32   gathered-rows scratch
    # mean_ref: VMEM (B, D) bf16    cached MXU LHS (resident across vocab tiles)
    # sem_ref : DMA semaphores, one per gathered row
    B, C = idx_ref.shape
    V = emb_hbm.shape[0]

    # Prologue: gather the B*C embedding rows and cache the bf16 mean.  Runs
    # once per outer chunk (inner tile index == 0), so each TensorCore on a
    # megacore part initializes its own copy; later tiles reuse mean_ref.
    @pl.when(pl.program_id(1) == 0)
    def _prologue():
        copies = []
        for t in range(C):
            for bi in range(B):
                r = t * B + bi
                row_id = idx_ref[bi, t]
                # DMA-safety clamp (diverges from PyTorch, which raises on OOB ids).
                row_id = jnp.minimum(jnp.maximum(row_id, 0), V - 1)
                cp = pltpu.make_async_copy(
                    emb_hbm.at[pl.ds(row_id, 1), :],   # (1, D) row in HBM
                    rows_ref.at[pl.ds(r, 1), :],       # (1, D) slot in VMEM
                    sem_ref.at[r],                     # dedicated semaphore per copy
                )
                cp.start()
                copies.append(cp)
        for cp in copies:
            cp.wait()
        # TODO(synk): dedup repeated token ids before issuing DMAs if B*C grows large.

        # Mean over the context dimension: tree-add the C (B, D) slabs in f32,
        # then cast ONCE to bf16 for the MXU LHS.
        parts = [rows_ref[pl.ds(t * B, B), :] for t in range(C)]
        while len(parts) > 1:
            nxt = [parts[i] + parts[i + 1] for i in range(0, len(parts) - 1, 2)]
            if len(parts) % 2:
                nxt.append(parts[-1])
            parts = nxt
        mean_ref[...] = (parts[0] * (1.0 / C)).astype(jnp.bfloat16)

    # Vocab-tiled projection: bf16 x bf16 on the MXU, f32 accumulation, f32 bias.
    out_ref[...] = (
        jnp.dot(mean_ref[...], w_ref[...], preferred_element_type=jnp.float32)
        + b_ref[...]
    )


# ---------------------------------------------------------------------------
# One-time (init) parameter prep: transpose, bf16-cast, pad to the tile grid.
# ---------------------------------------------------------------------------
def prepare_cbow_params(fc_weight, fc_bias, *, tn=1024):
    """fc_weight: (V, D) nn.Linear weight; fc_bias: (V,).

    Returns (w_t_bf16 (D, v_pad), bias (1, v_pad), V).  Padding happens here,
    once, so the per-call forward never copies the full weight through HBM.
    """
    assert tn % 128 == 0
    V, D = fc_weight.shape
    n_tiles = pl.cdiv(V, tn)
    if n_tiles > 1 and n_tiles % 2:
        n_tiles += 1  # even tile count -> clean 2-way chunk split across TensorCores
    v_pad = n_tiles * tn

    w_t = jnp.transpose(fc_weight).astype(jnp.bfloat16)        # (D, V) bf16 stream
    bias2 = jnp.asarray(fc_bias, jnp.float32).reshape(1, V)
    if v_pad != V:
        w_t = jnp.pad(w_t, ((0, 0), (0, v_pad - V)))
        bias2 = jnp.pad(bias2, ((0, 0), (0, v_pad - V)))
    return w_t, bias2, V


# ---------------------------------------------------------------------------
# Forward wrapper.
# ---------------------------------------------------------------------------
def cbow_forward(idx, emb_table, w_t_bf16, bias, *, vocab_size=None, tn=1024):
    """out = mean(emb_table[idx], axis=1) @ w_t + bias

    idx       : (B, C) int32
    emb_table : (V, D) f32        (stays in HBM; only referenced rows gathered)
    w_t_bf16  : (D, v_pad) bf16   (from prepare_cbow_params)
    bias      : (1, v_pad) f32
    returns   : (B, vocab_size) f32
    """
    assert tn % 128 == 0
    B, C = idx.shape
    V_emb, D = emb_table.shape
    D_w, v_pad = w_t_bf16.shape
    assert D_w == D and bias.shape == (1, v_pad)
    assert v_pad % tn == 0, "pad W/bias to a multiple of tn at init (prepare_cbow_params)"

    n_tiles = v_pad // tn
    # Outer "parallel" axis of 2 so each v7x TensorCore owns one contiguous chunk
    # of vocab tiles (no-op on single-core v5e/v6e).
    n_chunks = 2 if (n_tiles >= 2 and n_tiles % 2 == 0) else 1
    tiles_per_chunk = n_tiles // n_chunks

    # VMEM budget for this tile plan (double-buffered W/bias/out + scratch);
    # keep it under v7x's 64 MiB physical budget.
    vmem_bytes = (
        2 * D * tn * 2          # W tiles (bf16, double-buffered)
        + 2 * tn * 4            # bias tiles
        + 2 * B * tn * 4        # out tiles
        + B * C * D * 4         # gathered rows scratch
        + B * D * 2             # bf16 mean scratch
    )
    vmem_limit = min(max(4 * vmem_bytes, 32 * 1024 * 1024), 48 * 1024 * 1024)

    out = pl.pallas_call(
        _cbow_fused_kernel,
        out_shape=jax.ShapeDtypeStruct((B, v_pad), jnp.float32),
        grid_spec=pltpu.PrefetchScalarGridSpec(
            num_scalar_prefetch=1,                      # idx -> SMEM, passed to index_maps
            grid=(n_chunks, tiles_per_chunk),
            in_specs=[
                pl.BlockSpec(memory_space=pl.ANY),      # embedding table stays in HBM
                pl.BlockSpec((D, tn), lambda c, j, idx_ref: (0, c * tiles_per_chunk + j)),
                pl.BlockSpec((1, tn), lambda c, j, idx_ref: (0, c * tiles_per_chunk + j)),
            ],
            out_specs=pl.BlockSpec((B, tn), lambda c, j, idx_ref: (0, c * tiles_per_chunk + j)),
            scratch_shapes=[
                pltpu.VMEM((B * C, D), jnp.float32),    # gathered rows
                pltpu.VMEM((B, D), jnp.bfloat16),       # cached bf16 mean (MXU LHS)
                pltpu.SemaphoreType.DMA((B * C,)),      # one sem per row DMA
            ],
        ),
        compiler_params=pltpu.CompilerParams(
            dimension_semantics=("parallel", "arbitrary"),
            vmem_limit_bytes=vmem_limit,
        ),
        cost_estimate=pl.CostEstimate(
            flops=2 * B * D * v_pad,
            transcendentals=0,
            bytes_accessed=D * v_pad * 2 + B * v_pad * 4 + v_pad * 4 + B * C * D * 4,
        ),
    )(idx, emb_table, w_t_bf16, bias)

    if vocab_size is not None and vocab_size != v_pad:
        out = out[:, :vocab_size]   # note: this slice is an HBM copy; avoid by tn | V
    return out


def reference_forward(idx, emb_table, w_t, bias):
    # Pure-JAX f32 reference mirroring the PyTorch module.
    emb = emb_table[idx]                  # (B, C, D)
    mean = jnp.mean(emb, axis=1)          # (B, D)
    return mean @ w_t + bias              # (B, V)


if __name__ == "__main__":
    vocab_size = 2048
    d_model = 256
    batch = 8        # kernel is B-agnostic: larger batches amortize the W stream for free
    context = 4
    tn = 1024        # lane-dense vocab tile; 2 tiles -> one per TensorCore on v7x

    key = jax.random.PRNGKey(0)
    k_emb, k_w, k_b, k_idx = jax.random.split(key, 4)

    # nn.Embedding default init: N(0, 1)
    emb_table = jax.random.normal(k_emb, (vocab_size, d_model), dtype=jnp.float32)

    # nn.Linear default init: U(-1/sqrt(fan_in), 1/sqrt(fan_in))
    bound = 1.0 / (d_model ** 0.5)
    fc_w = jax.random.uniform(k_w, (vocab_size, d_model), jnp.float32, -bound, bound)
    fc_b = jax.random.uniform(k_b, (vocab_size,), jnp.float32, -bound, bound)

    idx = jax.random.randint(k_idx, (batch, context), 0, vocab_size, dtype=jnp.int32)

    # One-time param prep (transpose + bf16 cast + pad); not a per-call cost.
    w_t_bf16, bias_pad, V = prepare_cbow_params(fc_w, fc_b, tn=tn)

    out = cbow_forward(idx, emb_table, w_t_bf16, bias_pad, vocab_size=V, tn=tn)
    out = jax.block_until_ready(out)

    ref = reference_forward(idx, emb_table, jnp.transpose(fc_w), fc_b.reshape(1, -1))
    assert out.shape == (batch, vocab_size)
    # Tolerance sized for bf16 weights / bf16 mean with f32 MXU accumulation.
    assert jnp.allclose(out, ref, atol=3e-2, rtol=3e-2), "mismatch vs reference"

    print("KERNEL_OK")
</pallas_src>

<mosaic_0001>
module attributes {stable_mosaic.version = 11 : i64} {
  func.func @_cbow_fused_kernel(%arg0: i32, %arg1: i32, %arg2: memref<8x4xi32, #tpu.memory_space<smem>>, %arg3: memref<2048x256xf32, #tpu.memory_space<any>>, %arg4: memref<256x1024xbf16, #tpu.memory_space<vmem>>, %arg5: memref<1x1024xf32, #tpu.memory_space<vmem>>, %arg6: memref<8x1024xf32, #tpu.memory_space<vmem>>, %arg7: memref<32x256xf32, #tpu.memory_space<vmem>>, %arg8: memref<8x256xbf16, #tpu.memory_space<vmem>>, %arg9: memref<32x!tpu.dma_semaphore, #tpu.memory_space<semaphore_mem>>) attributes {dimension_semantics = [#tpu.dimension_semantics<parallel>, #tpu.dimension_semantics<arbitrary>], iteration_bounds = array<i64: 2, 1>, scalar_prefetch = 1 : i64, scratch_operands = 3 : i64, tpu.core_type = #tpu.core_type<tc>, window_params = [{}, {transform_indices = @transform_1, window_bounds = array<i64: 256, 1024>}, {transform_indices = @transform_2, window_bounds = array<i64: 1, 1024>}, {transform_indices = @transform_3, window_bounds = array<i64: 8, 1024>}]} {
    %c0_i32 = arith.constant 0 : i32
    %0 = arith.cmpi eq, %arg1, %c0_i32 : i32
    %1 = arith.extui %0 : i1 to i32
    %c0_i32_0 = arith.constant 0 : i32
    %2 = arith.cmpi ne, %1, %c0_i32_0 : i32
    scf.if %2 {
      %c0_8 = arith.constant 0 : index
      %c0_9 = arith.constant 0 : index
      %10 = memref.load %arg2[%c0_8, %c0_9] : memref<8x4xi32, #tpu.memory_space<smem>>
      %c0_i32_10 = arith.constant 0 : i32
      %11 = arith.maxsi %10, %c0_i32_10 : i32
      %c2047_i32 = arith.constant 2047 : i32
      %12 = arith.minsi %11, %c2047_i32 : i32
      %c0_i32_11 = arith.constant 0 : i32
      %c0_i32_12 = arith.constant 0 : i32
      %13 = tpu.memref_slice %arg3[%12, %c0_i32_12] : memref<2048x256xf32, #tpu.memory_space<any>> -> memref<1x256xf32, #tpu.memory_space<any>>
      %c0_i32_13 = arith.constant 0 : i32
      %c0_i32_14 = arith.constant 0 : i32
      %14 = tpu.memref_slice %arg7[%c0_i32_13, %c0_i32_14] : memref<32x256xf32, #tpu.memory_space<vmem>> -> memref<1x256xf32, #tpu.memory_space<vmem>>
      %15 = tpu.memref_slice %arg9[%c0_i32_11] : memref<32x!tpu.dma_semaphore, #tpu.memory_space<semaphore_mem>> -> memref<1x!tpu.dma_semaphore, #tpu.memory_space<semaphore_mem>>
      %16 = tpu.memref_squeeze %15 : memref<1x!tpu.dma_semaphore, #tpu.memory_space<semaphore_mem>> -> memref<!tpu.dma_semaphore, #tpu.memory_space<semaphore_mem>>
      tpu.enqueue_dma source(%13 : memref<1x256xf32, #tpu.memory_space<any>>) target(%14 : memref<1x256xf32, #tpu.memory_space<vmem>>) target_semaphore(%16 : memref<!tpu.dma_semaphore, #tpu.memory_space<semaphore_mem>>)
      %c1 = arith.constant 1 : index
      %c0_15 = arith.constant 0 : index
      %17 = memref.load %arg2[%c1, %c0_15] : memref<8x4xi32, #tpu.memory_space<smem>>
      %c0_i32_16 = arith.constant 0 : i32
      %18 = arith.maxsi %17, %c0_i32_16 : i32
      %c2047_i32_17 = arith.constant 2047 : i32
      %19 = arith.minsi %18, %c2047_i32_17 : i32
      %c1_i32 = arith.constant 1 : i32
      %c0_i32_18 = arith.constant 0 : i32
      %20 = tpu.memref_slice %arg3[%19, %c0_i32_18] : memref<2048x256xf32, #tpu.memory_space<any>> -> memref<1x256xf32, #tpu.memory_space<any>>
      %c1_i32_19 = arith.constant 1 : i32
      %c0_i32_20 = arith.constant 0 : i32
      %21 = tpu.memref_slice %arg7[%c1_i32_19, %c0_i32_20] : memref<32x256xf32, #tpu.memory_space<vmem>> -> memref<1x256xf32, #tpu.memory_space<vmem>>
      %22 = tpu.memref_slice %arg9[%c1_i32] : memref<32x!tpu.dma_semaphore, #tpu.memory_space<semaphore_mem>> -> memref<1x!tpu.dma_semaphore, #tpu.memory_space<semaphore_mem>>
      %23 = tpu.memref_squeeze %22 : memref<1x!tpu.dma_semaphore, #tpu.memory_space<semaphore_mem>> -> memref<!tpu.dma_semaphore, #tpu.memory_space<semaphore_mem>>
      tpu.enqueue_dma source(%20 : memref<1x256xf32, #tpu.memory_space<any>>) target(%21 : memref<1x256xf32, #tpu.memory_space<vmem>>) target_semaphore(%23 : memref<!tpu.dma_semaphore, #tpu.memory_space<semaphore_mem>>)
      %c2 = arith.constant 2 : index
      %c0_21 = arith.constant 0 : index
      %24 = memref.load %arg2[%c2, %c0_21] : memref<8x4xi32, #tpu.memory_space<smem>>
      %c0_i32_22 = arith.constant 0 : i32
      %25 = arith.maxsi %24, %c0_i32_22 : i32
      %c2047_i32_23 = arith.constant 2047 : i32
      %26 = arith.minsi %25, %c2047_i32_23 : i32
      %c2_i32 = arith.constant 2 : i32
      %c0_i32_24 = arith.constant 0 : i32
      %27 = tpu.memref_slice %arg3[%26, %c0_i32_24] : memref<2048x256xf32, #tpu.memory_space<any>> -> memref<1x256xf32, #tpu.memory_space<any>>
      %c2_i32_25 = arith.constant 2 : i32
      %c0_i32_26 = arith.constant 0 : i32
      %28 = tpu.memref_slice %arg7[%c2_i32_25, %c0_i32_26] : memref<32x256xf32, #tpu.memory_space<vmem>> -> memref<1x256xf32, #tpu.memory_space<vmem>>
      %29 = tpu.memref_slice %arg9[%c2_i32] : memref<32x!tpu.dma_semaphore, #tpu.memory_space<semaphore_mem>> -> memref<1x!tpu.dma_semaphore, #tpu.memory_space<semaphore_mem>>
      %30 = tpu.memref_squeeze %29 : memref<1x!tpu.dma_semaphore, #tpu.memory_space<semaphore_mem>> -> memref<!tpu.dma_semaphore, #tpu.memory_space<semaphore_mem>>
      tpu.enqueue_dma source(%27 : memref<1x256xf32, #tpu.memory_space<any>>) target(%28 : memref<1x256xf32, #tpu.memory_space<vmem>>) target_semaphore(%30 : memref<!tpu.dma_semaphore, #tpu.memory_space<semaphore_mem>>)
      %c3 = arith.constant 3 : index
      %c0_27 = arith.constant 0 : index
      %31 = memref.load %arg2[%c3, %c0_27] : memref<8x4xi32, #tpu.memory_space<smem>>
      %c0_i32_28 = arith.constant 0 : i32
      %32 = arith.maxsi %31, %c0_i32_28 : i32
      %c2047_i32_29 = arith.constant 2047 : i32
      %33 = arith.minsi %32, %c2047_i32_29 : i32
      %c3_i32 = arith.constant 3 : i32
      %c0_i32_30 = arith.constant 0 : i32
      %34 = tpu.memref_slice %arg3[%33, %c0_i32_30] : memref<2048x256xf32, #tpu.memory_space<any>> -> memref<1x256xf32, #tpu.memory_space<any>>
      %c3_i32_31 = arith.constant 3 : i32
      %c0_i32_32 = arith.constant 0 : i32
      %35 = tpu.memref_slice %arg7[%c3_i32_31, %c0_i32_32] : memref<32x256xf32, #tpu.memory_space<vmem>> -> memref<1x256xf32, #tpu.memory_space<vmem>>
      %36 = tpu.memref_slice %arg9[%c3_i32] : memref<32x!tpu.dma_semaphore, #tpu.memory_space<semaphore_mem>> -> memref<1x!tpu.dma_semaphore, #tpu.memory_space<semaphore_mem>>
      %37 = tpu.memref_squeeze %36 : memref<1x!tpu.dma_semaphore, #tpu.memory_space<semaphore_mem>> -> memref<!tpu.dma_semaphore, #tpu.memory_space<semaphore_mem>>
      tpu.enqueue_dma source(%34 : memref<1x256xf32, #tpu.memory_space<any>>) target(%35 : memref<1x256xf32, #tpu.memory_space<vmem>>) target_semaphore(%37 : memref<!tpu.dma_semaphore, #tpu.memory_space<semaphore_mem>>)
      %c4 = arith.constant 4 : index
      %c0_33 = arith.constant 0 : index
      %38 = memref.load %arg2[%c4, %c0_33] : memref<8x4xi32, #tpu.memory_space<smem>>
      %c0_i32_34 = arith.constant 0 : i32
      %39 = arith.maxsi %38, %c0_i32_34 : i32
      %c2047_i32_35 = arith.constant 2047 : i32
      %40 = arith.minsi %39, %c2047_i32_35 : i32
      %c4_i32 = arith.constant 4 : i32
      %c0_i32_36 = arith.constant 0 : i32
      %41 = tpu.memref_slice %arg3[%40, %c0_i32_36] : memref<2048x256xf32, #tpu.memory_space<any>> -> memref<1x256xf32, #tpu.memory_space<any>>
      %c4_i32_37 = arith.constant 4 : i32
      %c0_i32_38 = arith.constant 0 : i32
      %42 = tpu.memref_slice %arg7[%c4_i32_37, %c0_i32_38] : memref<32x256xf32, #tpu.memory_space<vmem>> -> memref<1x256xf32, #tpu.memory_space<vmem>>
      %43 = tpu.memref_slice %arg9[%c4_i32] : memref<32x!tpu.dma_semaphore, #tpu.memory_space<semaphore_mem>> -> memref<1x!tpu.dma_semaphore, #tpu.memory_space<semaphore_mem>>
      %44 = tpu.memref_squeeze %43 : memref<1x!tpu.dma_semaphore, #tpu.memory_space<semaphore_mem>> -> memref<!tpu.dma_semaphore, #tpu.memory_space<semaphore_mem>>
      tpu.enqueue_dma source(%41 : memref<1x256xf32, #tpu.memory_space<any>>) target(%42 : memref<1x256xf32, #tpu.memory_space<vmem>>) target_semaphore(%44 : memref<!tpu.dma_semaphore, #tpu.memory_space<semaphore_mem>>)
      %c5 = arith.constant 5 : index
      %c0_39 = arith.constant 0 : index
      %45 = memref.load %arg2[%c5, %c0_39] : memref<8x4xi32, #tpu.memory_space<smem>>
      %c0_i32_40 = arith.constant 0 : i32
      %46 = arith.maxsi %45, %c0_i32_40 : i32
      %c2047_i32_41 = arith.constant 2047 : i32
      %47 = arith.minsi %46, %c2047_i32_41 : i32
      %c5_i32 = arith.constant 5 : i32
      %c0_i32_42 = arith.constant 0 : i32
      %48 = tpu.memref_slice %arg3[%47, %c0_i32_42] : memref<2048x256xf32, #tpu.memory_space<any>> -> memref<1x256xf32, #tpu.memory_space<any>>
      %c5_i32_43 = arith.constant 5 : i32
      %c0_i32_44 = arith.constant 0 : i32
      %49 = tpu.memref_slice %arg7[%c5_i32_43, %c0_i32_44] : memref<32x256xf32, #tpu.memory_space<vmem>> -> memref<1x256xf32, #tpu.memory_space<vmem>>
      %50 = tpu.memref_slice %arg9[%c5_i32] : memref<32x!tpu.dma_semaphore, #tpu.memory_space<semaphore_mem>> -> memref<1x!tpu.dma_semaphore, #tpu.memory_space<semaphore_mem>>
      %51 = tpu.memref_squeeze %50 : memref<1x!tpu.dma_semaphore, #tpu.memory_space<semaphore_mem>> -> memref<!tpu.dma_semaphore, #tpu.memory_space<semaphore_mem>>
      tpu.enqueue_dma source(%48 : memref<1x256xf32, #tpu.memory_space<any>>) target(%49 : memref<1x256xf32, #tpu.memory_space<vmem>>) target_semaphore(%51 : memref<!tpu.dma_semaphore, #tpu.memory_space<semaphore_mem>>)
      %c6 = arith.constant 6 : index
      %c0_45 = arith.constant 0 : index
      %52 = memref.load %arg2[%c6, %c0_45] : memref<8x4xi32, #tpu.memory_space<smem>>
      %c0_i32_46 = arith.constant 0 : i32
      %53 = arith.maxsi %52, %c0_i32_46 : i32
      %c2047_i32_47 = arith.constant 2047 : i32
      %54 = arith.minsi %53, %c2047_i32_47 : i32
      %c6_i32 = arith.constant 6 : i32
      %c0_i32_48 = arith.constant 0 : i32
      %55 = tpu.memref_slice %arg3[%54, %c0_i32_48] : memref<2048x256xf32, #tpu.memory_space<any>> -> memref<1x256xf32, #tpu.memory_space<any>>
      %c6_i32_49 = arith.constant 6 : i32
      %c0_i32_50 = arith.constant 0 : i32
      %56 = tpu.memref_slice %arg7[%c6_i32_49, %c0_i32_50] : memref<32x256xf32, #tpu.memory_space<vmem>> -> memref<1x256xf32, #tpu.memory_space<vmem>>
      %57 = tpu.memref_slice %arg9[%c6_i32] : memref<32x!tpu.dma_semaphore, #tpu.memory_space<semaphore_mem>> -> memref<1x!tpu.dma_semaphore, #tpu.memory_space<semaphore_mem>>
      %58 = tpu.memref_squeeze %57 : memref<1x!tpu.dma_semaphore, #tpu.memory_space<semaphore_mem>> -> memref<!tpu.dma_semaphore, #tpu.memory_space<semaphore_mem>>
      tpu.enqueue_dma source(%55 : memref<1x256xf32, #tpu.memory_space<any>>) target(%56 : memref<1x256xf32, #tpu.memory_space<vmem>>) target_semaphore(%58 : memref<!tpu.dma_semaphore, #tpu.memory_space<semaphore_mem>>)
      %c7 = arith.constant 7 : index
      %c0_51 = arith.constant 0 : index
      %59 = memref.load %arg2[%c7, %c0_51] : memref<8x4xi32, #tpu.memory_space<smem>>
      %c0_i32_52 = arith.constant 0 : i32
      %60 = arith.maxsi %59, %c0_i32_52 : i32
      %c2047_i32_53 = arith.constant 2047 : i32
      %61 = arith.minsi %60, %c2047_i32_53 : i32
      %c7_i32 = arith.constant 7 : i32
      %c0_i32_54 = arith.constant 0 : i32
      %62 = tpu.memref_slice %arg3[%61, %c0_i32_54] : memref<2048x256xf32, #tpu.memory_space<any>> -> memref<1x256xf32, #tpu.memory_space<any>>
      %c7_i32_55 = arith.constant 7 : i32
      %c0_i32_56 = arith.constant 0 : i32
      %63 = tpu.memref_slice %arg7[%c7_i32_55, %c0_i32_56] : memref<32x256xf32, #tpu.memory_space<vmem>> -> memref<1x256xf32, #tpu.memory_space<vmem>>
      %64 = tpu.memref_slice %arg9[%c7_i32] : memref<32x!tpu.dma_semaphore, #tpu.memory_space<semaphore_mem>> -> memref<1x!tpu.dma_semaphore, #tpu.memory_space<semaphore_mem>>
      %65 = tpu.memref_squeeze %64 : memref<1x!tpu.dma_semaphore, #tpu.memory_space<semaphore_mem>> -> memref<!tpu.dma_semaphore, #tpu.memory_space<semaphore_mem>>
      tpu.enqueue_dma source(%62 : memref<1x256xf32, #tpu.memory_space<any>>) target(%63 : memref<1x256xf32, #tpu.memory_space<vmem>>) target_semaphore(%65 : memref<!tpu.dma_semaphore, #tpu.memory_space<semaphore_mem>>)
      %c0_57 = arith.constant 0 : index
      %c1_58 = arith.constant 1 : index
      %66 = memref.load %arg2[%c0_57, %c1_58] : memref<8x4xi32, #tpu.memory_space<smem>>
      %c0_i32_59 = arith.constant 0 : i32
      %67 = arith.maxsi %66, %c0_i32_59 : i32
      %c2047_i32_60 = arith.constant 2047 : i32
      %68 = arith.minsi %67, %c2047_i32_60 : i32
      %c8_i32 = arith.constant 8 : i32
      %c0_i32_61 = arith.constant 0 : i32
      %69 = tpu.memref_slice %arg3[%68, %c0_i32_61] : memref<2048x256xf32, #tpu.memory_space<any>> -> memref<1x256xf32, #tpu.memory_space<any>>
      %c8_i32_62 = arith.constant 8 : i32
      %c0_i32_63 = arith.constant 0 : i32
      %70 = tpu.memref_slice %arg7[%c8_i32_62, %c0_i32_63] : memref<32x256xf32, #tpu.memory_space<vmem>> -> memref<1x256xf32, #tpu.memory_space<vmem>>
      %71 = tpu.memref_slice %arg9[%c8_i32] : memref<32x!tpu.dma_semaphore, #tpu.memory_space<semaphore_mem>> -> memref<1x!tpu.dma_semaphore, #tpu.memory_space<semaphore_mem>>
      %72 = tpu.memref_squeeze %71 : memref<1x!tpu.dma_semaphore, #tpu.memory_space<semaphore_mem>> -> memref<!tpu.dma_semaphore, #tpu.memory_space<semaphore_mem>>
      tpu.enqueue_dma source(%69 : memref<1x256xf32, #tpu.memory_space<any>>) target(%70 : memref<1x256xf32, #tpu.memory_space<vmem>>) target_semaphore(%72 : memref<!tpu.dma_semaphore, #tpu.memory_space<semaphore_mem>>)
      %c1_64 = arith.constant 1 : index
      %c1_65 = arith.constant 1 : index
      %73 = memref.load %arg2[%c1_64, %c1_65] : memref<8x4xi32, #tpu.memory_space<smem>>
      %c0_i32_66 = arith.constant 0 : i32
      %74 = arith.maxsi %73, %c0_i32_66 : i32
      %c2047_i32_67 = arith.constant 2047 : i32
      %75 = arith.minsi %74, %c2047_i32_67 : i32
      %c9_i32 = arith.constant 9 : i32
      %c0_i32_68 = arith.constant 0 : i32
      %76 = tpu.memref_slice %arg3[%75, %c0_i32_68] : memref<2048x256xf32, #tpu.memory_space<any>> -> memref<1x256xf32, #tpu.memory_space<any>>
      %c9_i32_69 = arith.constant 9 : i32
      %c0_i32_70 = arith.constant 0 : i32
      %77 = tpu.memref_slice %arg7[%c9_i32_69, %c0_i32_70] : memref<32x256xf32, #tpu.memory_space<vmem>> -> memref<1x256xf32, #tpu.memory_space<vmem>>
      %78 = tpu.memref_slice %arg9[%c9_i32] : memref<32x!tpu.dma_semaphore, #tpu.memory_space<semaphore_mem>> -> memref<1x!tpu.dma_semaphore, #tpu.memory_space<semaphore_mem>>
      %79 = tpu.memref_squeeze %78 : memref<1x!tpu.dma_semaphore, #tpu.memory_space<semaphore_mem>> -> memref<!tpu.dma_semaphore, #tpu.memory_space<semaphore_mem>>
      tpu.enqueue_dma source(%76 : memref<1x256xf32, #tpu.memory_space<any>>) target(%77 : memref<1x256xf32, #tpu.memory_space<vmem>>) target_semaphore(%79 : memref<!tpu.dma_semaphore, #tpu.memory_space<semaphore_mem>>)
      %c2_71 = arith.constant 2 : index
      %c1_72 = arith.constant 1 : index
      %80 = memref.load %arg2[%c2_71, %c1_72] : memref<8x4xi32, #tpu.memory_space<smem>>
      %c0_i32_73 = arith.constant 0 : i32
      %81 = arith.maxsi %80, %c0_i32_73 : i32
      %c2047_i32_74 = arith.constant 2047 : i32
      %82 = arith.minsi %81, %c2047_i32_74 : i32
      %c10_i32 = arith.constant 10 : i32
      %c0_i32_75 = arith.constant 0 : i32
      %83 = tpu.memref_slice %arg3[%82, %c0_i32_75] : memref<2048x256xf32, #tpu.memory_space<any>> -> memref<1x256xf32, #tpu.memory_space<any>>
      %c10_i32_76 = arith.constant 10 : i32
      %c0_i32_77 = arith.constant 0 : i32
      %84 = tpu.memref_slice %arg7[%c10_i32_76, %c0_i32_77] : memref<32x256xf32, #tpu.memory_space<vmem>> -> memref<1x256xf32, #tpu.memory_space<vmem>>
      %85 = tpu.memref_slice %arg9[%c10_i32] : memref<32x!tpu.dma_semaphore, #tpu.memory_space<semaphore_mem>> -> memref<1x!tpu.dma_semaphore, #tpu.memory_space<semaphore_mem>>
      %86 = tpu.memref_squeeze %85 : memref<1x!tpu.dma_semaphore, #tpu.memory_space<semaphore_mem>> -> memref<!tpu.dma_semaphore, #tpu.memory_space<semaphore_mem>>
      tpu.enqueue_dma source(%83 : memref<1x256xf32, #tpu.memory_space<any>>) target(%84 : memref<1x256xf32, #tpu.memory_space<vmem>>) target_semaphore(%86 : memref<!tpu.dma_semaphore, #tpu.memory_space<semaphore_mem>>)
      %c3_78 = arith.constant 3 : index
      %c1_79 = arith.constant 1 : index
      %87 = memref.load %arg2[%c3_78, %c1_79] : memref<8x4xi32, #tpu.memory_space<smem>>
      %c0_i32_80 = arith.constant 0 : i32
      %88 = arith.maxsi %87, %c0_i32_80 : i32
      %c2047_i32_81 = arith.constant 2047 : i32
      %89 = arith.minsi %88, %c2047_i32_81 : i32
      %c11_i32 = arith.constant 11 : i32
      %c0_i32_82 = arith.constant 0 : i32
      %90 = tpu.memref_slice %arg3[%89, %c0_i32_82] : memref<2048x256xf32, #tpu.memory_space<any>> -> memref<1x256xf32, #tpu.memory_space<any>>
      %c11_i32_83 = arith.constant 11 : i32
      %c0_i32_84 = arith.constant 0 : i32
      %91 = tpu.memref_slice %arg7[%c11_i32_83, %c0_i32_84] : memref<32x256xf32, #tpu.memory_space<vmem>> -> memref<1x256xf32, #tpu.memory_space<vmem>>
      %92 = tpu.memref_slice %arg9[%c11_i32] : memref<32x!tpu.dma_semaphore, #tpu.memory_space<semaphore_mem>> -> memref<1x!tpu.dma_semaphore, #tpu.memory_space<semaphore_mem>>
      %93 = tpu.memref_squeeze %92 : memref<1x!tpu.dma_semaphore, #tpu.memory_space<semaphore_mem>> -> memref<!tpu.dma_semaphore, #tpu.memory_space<semaphore_mem>>
      tpu.enqueue_dma source(%90 : memref<1x256xf32, #tpu.memory_space<any>>) target(%91 : memref<1x256xf32, #tpu.memory_space<vmem>>) target_semaphore(%93 : memref<!tpu.dma_semaphore, #tpu.memory_space<semaphore_mem>>)
      %c4_85 = arith.constant 4 : index
      %c1_86 = arith.constant 1 : index
      %94 = memref.load %arg2[%c4_85, %c1_86] : memref<8x4xi32, #tpu.memory_space<smem>>
      %c0_i32_87 = arith.constant 0 : i32
      %95 = arith.maxsi %94, %c0_i32_87 : i32
      %c2047_i32_88 = arith.constant 2047 : i32
      %96 = arith.minsi %95, %c2047_i32_88 : i32
      %c12_i32 = arith.constant 12 : i32
      %c0_i32_89 = arith.constant 0 : i32
      %97 = tpu.memref_slice %arg3[%96, %c0_i32_89] : memref<2048x256xf32, #tpu.memory_space<any>> -> memref<1x256xf32, #tpu.memory_space<any>>
      %c12_i32_90 = arith.constant 12 : i32
      %c0_i32_91 = arith.constant 0 : i32
      %98 = tpu.memref_slice %arg7[%c12_i32_90, %c0_i32_91] : memref<32x256xf32, #tpu.memory_space<vmem>> -> memref<1x256xf32, #tpu.memory_space<vmem>>
      %99 = tpu.memref_slice %arg9[%c12_i32] : memref<32x!tpu.dma_semaphore, #tpu.memory_space<semaphore_mem>> -> memref<1x!tpu.dma_semaphore, #tpu.memory_space<semaphore_mem>>
      %100 = tpu.memref_squeeze %99 : memref<1x!tpu.dma_semaphore, #tpu.memory_space<semaphore_mem>> -> memref<!tpu.dma_semaphore, #tpu.memory_space<semaphore_mem>>
      tpu.enqueue_dma source(%97 : memref<1x256xf32, #tpu.memory_space<any>>) target(%98 : memref<1x256xf32, #tpu.memory_space<vmem>>) target_semaphore(%100 : memref<!tpu.dma_semaphore, #tpu.memory_space<semaphore_mem>>)
      %c5_92 = arith.constant 5 : index
      %c1_93 = arith.constant 1 : index
      %101 = memref.load %arg2[%c5_92, %c1_93] : memref<8x4xi32, #tpu.memory_space<smem>>
      %c0_i32_94 = arith.constant 0 : i32
      %102 = arith.maxsi %101, %c0_i32_94 : i32
      %c2047_i32_95 = arith.constant 2047 : i32
      %103 = arith.minsi %102, %c2047_i32_95 : i32
      %c13_i32 = arith.constant 13 : i32
      %c0_i32_96 = arith.constant 0 : i32
      %104 = tpu.memref_slice %arg3[%103, %c0_i32_96] : memref<2048x256xf32, #tpu.memory_space<any>> -> memref<1x256xf32, #tpu.memory_space<any>>
      %c13_i32_97 = arith.constant 13 : i32
      %c0_i32_98 = arith.constant 0 : i32
      %105 = tpu.memref_slice %arg7[%c13_i32_97, %c0_i32_98] : memref<32x256xf32, #tpu.memory_space<vmem>> -> memref<1x256xf32, #tpu.memory_space<vmem>>
      %106 = tpu.memref_slice %arg9[%c13_i32] : memref<32x!tpu.dma_semaphore, #tpu.memory_space<semaphore_mem>> -> memref<1x!tpu.dma_semaphore, #tpu.memory_space<semaphore_mem>>
      %107 = tpu.memref_squeeze %106 : memref<1x!tpu.dma_semaphore, #tpu.memory_space<semaphore_mem>> -> memref<!tpu.dma_semaphore, #tpu.memory_space<semaphore_mem>>
      tpu.enqueue_dma source(%104 : memref<1x256xf32, #tpu.memory_space<any>>) target(%105 : memref<1x256xf32, #tpu.memory_space<vmem>>) target_semaphore(%107 : memref<!tpu.dma_semaphore, #tpu.memory_space<semaphore_mem>>)
      %c6_99 = arith.constant 6 : index
      %c1_100 = arith.constant 1 : index
      %108 = memref.load %arg2[%c6_99, %c1_100] : memref<8x4xi32, #tpu.memory_space<smem>>
      %c0_i32_101 = arith.constant 0 : i32
      %109 = arith.maxsi %108, %c0_i32_101 : i32
      %c2047_i32_102 = arith.constant 2047 : i32
      %110 = arith.minsi %109, %c2047_i32_102 : i32
      %c14_i32 = arith.constant 14 : i32
      %c0_i32_103 = arith.constant 0 : i32
      %111 = tpu.memref_slice %arg3[%110, %c0_i32_103] : memref<2048x256xf32, #tpu.memory_space<any>> -> memref<1x256xf32, #tpu.memory_space<any>>
      %c14_i32_104 = arith.constant 14 : i32
      %c0_i32_105 = arith.constant 0 : i32
      %112 = tpu.memref_slice %arg7[%c14_i32_104, %c0_i32_105] : memref<32x256xf32, #tpu.memory_space<vmem>> -> memref<1x256xf32, #tpu.memory_space<vmem>>
      %113 = tpu.memref_slice %arg9[%c14_i32] : memref<32x!tpu.dma_semaphore, #tpu.memory_space<semaphore_mem>> -> memref<1x!tpu.dma_semaphore, #tpu.memory_space<semaphore_mem>>
      %114 = tpu.memref_squeeze %113 : memref<1x!tpu.dma_semaphore, #tpu.memory_space<semaphore_mem>> -> memref<!tpu.dma_semaphore, #tpu.memory_space<semaphore_mem>>
      tpu.enqueue_dma source(%111 : memref<1x256xf32, #tpu.memory_space<any>>) target(%112 : memref<1x256xf32, #tpu.memory_space<vmem>>) target_semaphore(%114 : memref<!tpu.dma_semaphore, #tpu.memory_space<semaphore_mem>>)
      %c7_106 = arith.constant 7 : index
      %c1_107 = arith.constant 1 : index
      %115 = memref.load %arg2[%c7_106, %c1_107] : memref<8x4xi32, #tpu.memory_space<smem>>
      %c0_i32_108 = arith.constant 0 : i32
      %116 = arith.maxsi %115, %c0_i32_108 : i32
      %c2047_i32_109 = arith.constant 2047 : i32
      %117 = arith.minsi %116, %c2047_i32_109 : i32
      %c15_i32 = arith.constant 15 : i32
      %c0_i32_110 = arith.constant 0 : i32
      %118 = tpu.memref_slice %arg3[%117, %c0_i32_110] : memref<2048x256xf32, #tpu.memory_space<any>> -> memref<1x256xf32, #tpu.memory_space<any>>
      %c15_i32_111 = arith.constant 15 : i32
      %c0_i32_112 = arith.constant 0 : i32
      %119 = tpu.memref_slice %arg7[%c15_i32_111, %c0_i32_112] : memref<32x256xf32, #tpu.memory_space<vmem>> -> memref<1x256xf32, #tpu.memory_space<vmem>>
      %120 = tpu.memref_slice %arg9[%c15_i32] : memref<32x!tpu.dma_semaphore, #tpu.memory_space<semaphore_mem>> -> memref<1x!tpu.dma_semaphore, #tpu.memory_space<semaphore_mem>>
      %121 = tpu.memref_squeeze %120 : memref<1x!tpu.dma_semaphore, #tpu.memory_space<semaphore_mem>> -> memref<!tpu.dma_semaphore, #tpu.memory_space<semaphore_mem>>
      tpu.enqueue_dma source(%118 : memref<1x256xf32, #tpu.memory_space<any>>) target(%119 : memref<1x256xf32, #tpu.memory_space<vmem>>) target_semaphore(%121 : memref<!tpu.dma_semaphore, #tpu.memory_space<semaphore_mem>>)
      %c0_113 = arith.constant 0 : index
      %c2_114 = arith.constant 2 : index
      %122 = memref.load %arg2[%c0_113, %c2_114] : memref<8x4xi32, #tpu.memory_space<smem>>
      %c0_i32_115 = arith.constant 0 : i32
      %123 = arith.maxsi %122, %c0_i32_115 : i32
      %c2047_i32_116 = arith.constant 2047 : i32
      %124 = arith.minsi %123, %c2047_i32_116 : i32
      %c16_i32 = arith.constant 16 : i32
      %c0_i32_117 = arith.constant 0 : i32
      %125 = tpu.memref_slice %arg3[%124, %c0_i32_117] : memref<2048x256xf32, #tpu.memory_space<any>> -> memref<1x256xf32, #tpu.memory_space<any>>
      %c16_i32_118 = arith.constant 16 : i32
      %c0_i32_119 = arith.constant 0 : i32
      %126 = tpu.memref_slice %arg7[%c16_i32_118, %c0_i32_119] : memref<32x256xf32, #tpu.memory_space<vmem>> -> memref<1x256xf32, #tpu.memory_space<vmem>>
      %127 = tpu.memref_slice %arg9[%c16_i32] : memref<32x!tpu.dma_semaphore, #tpu.memory_space<semaphore_mem>> -> memref<1x!tpu.dma_semaphore, #tpu.memory_space<semaphore_mem>>
      %128 = tpu.memref_squeeze %127 : memref<1x!tpu.dma_semaphore, #tpu.memory_space<semaphore_mem>> -> memref<!tpu.dma_semaphore, #tpu.memory_space<semaphore_mem>>
      tpu.enqueue_dma source(%125 : memref<1x256xf32, #tpu.memory_space<any>>) target(%126 : memref<1x256xf32, #tpu.memory_space<vmem>>) target_semaphore(%128 : memref<!tpu.dma_semaphore, #tpu.memory_space<semaphore_mem>>)
      %c1_120 = arith.constant 1 : index
      %c2_121 = arith.constant 2 : index
      %129 = memref.load %arg2[%c1_120, %c2_121] : memref<8x4xi32, #tpu.memory_space<smem>>
      %c0_i32_122 = arith.constant 0 : i32
      %130 = arith.maxsi %129, %c0_i32_122 : i32
      %c2047_i32_123 = arith.constant 2047 : i32
      %131 = arith.minsi %130, %c2047_i32_123 : i32
      %c17_i32 = arith.constant 17 : i32
      %c0_i32_124 = arith.constant 0 : i32
      %132 = tpu.memref_slice %arg3[%131, %c0_i32_124] : memref<2048x256xf32, #tpu.memory_space<any>> -> memref<1x256xf32, #tpu.memory_space<any>>
      %c17_i32_125 = arith.constant 17 : i32
      %c0_i32_126 = arith.constant 0 : i32
      %133 = tpu.memref_slice %arg7[%c17_i32_125, %c0_i32_126] : memref<32x256xf32, #tpu.memory_space<vmem>> -> memref<1x256xf32, #tpu.memory_space<vmem>>
      %134 = tpu.memref_slice %arg9[%c17_i32] : memref<32x!tpu.dma_semaphore, #tpu.memory_space<semaphore_mem>> -> memref<1x!tpu.dma_semaphore, #tpu.memory_space<semaphore_mem>>
      %135 = tpu.memref_squeeze %134 : memref<1x!tpu.dma_semaphore, #tpu.memory_space<semaphore_mem>> -> memref<!tpu.dma_semaphore, #tpu.memory_space<semaphore_mem>>
      tpu.enqueue_dma source(%132 : memref<1x256xf32, #tpu.memory_space<any>>) target(%133 : memref<1x256xf32, #tpu.memory_space<vmem>>) target_semaphore(%135 : memref<!tpu.dma_semaphore, #tpu.memory_space<semaphore_mem>>)
      %c2_127 = arith.constant 2 : index
      %c2_128 = arith.constant 2 : index
      %136 = memref.load %arg2[%c2_127, %c2_128] : memref<8x4xi32, #tpu.memory_space<smem>>
      %c0_i32_129 = arith.constant 0 : i32
      %137 = arith.maxsi %136, %c0_i32_129 : i32
      %c2047_i32_130 = arith.constant 2047 : i32
      %138 = arith.minsi %137, %c2047_i32_130 : i32
      %c18_i32 = arith.constant 18 : i32
      %c0_i32_131 = arith.constant 0 : i32
      %139 = tpu.memref_slice %arg3[%138, %c0_i32_131] : memref<2048x256xf32, #tpu.memory_space<any>> -> memref<1x256xf32, #tpu.memory_space<any>>
      %c18_i32_132 = arith.constant 18 : i32
      %c0_i32_133 = arith.constant 0 : i32
      %140 = tpu.memref_slice %arg7[%c18_i32_132, %c0_i32_133] : memref<32x256xf32, #tpu.memory_space<vmem>> -> memref<1x256xf32, #tpu.memory_space<vmem>>
      %141 = tpu.memref_slice %arg9[%c18_i32] : memref<32x!tpu.dma_semaphore, #tpu.memory_space<semaphore_mem>> -> memref<1x!tpu.dma_semaphore, #tpu.memory_space<semaphore_mem>>
      %142 = tpu.memref_squeeze %141 : memref<1x!tpu.dma_semaphore, #tpu.memory_space<semaphore_mem>> -> memref<!tpu.dma_semaphore, #tpu.memory_space<semaphore_mem>>
      tpu.enqueue_dma source(%139 : memref<1x256xf32, #tpu.memory_space<any>>) target(%140 : memref<1x256xf32, #tpu.memory_space<vmem>>) target_semaphore(%142 : memref<!tpu.dma_semaphore, #tpu.memory_space<semaphore_mem>>)
      %c3_134 = arith.constant 3 : index
      %c2_135 = arith.constant 2 : index
      %143 = memref.load %arg2[%c3_134, %c2_135] : memref<8x4xi32, #tpu.memory_space<smem>>
      %c0_i32_136 = arith.constant 0 : i32
      %144 = arith.maxsi %143, %c0_i32_136 : i32
      %c2047_i32_137 = arith.constant 2047 : i32
      %145 = arith.minsi %144, %c2047_i32_137 : i32
      %c19_i32 = arith.constant 19 : i32
      %c0_i32_138 = arith.constant 0 : i32
      %146 = tpu.memref_slice %arg3[%145, %c0_i32_138] : memref<2048x256xf32, #tpu.memory_space<any>> -> memref<1x256xf32, #tpu.memory_space<any>>
      %c19_i32_139 = arith.constant 19 : i32
      %c0_i32_140 = arith.constant 0 : i32
      %147 = tpu.memref_slice %arg7[%c19_i32_139, %c0_i32_140] : memref<32x256xf32, #tpu.memory_space<vmem>> -> memref<1x256xf32, #tpu.memory_space<vmem>>
      %148 = tpu.memref_slice %arg9[%c19_i32] : memref<32x!tpu.dma_semaphore, #tpu.memory_space<semaphore_mem>> -> memref<1x!tpu.dma_semaphore, #tpu.memory_space<semaphore_mem>>
      %149 = tpu.memref_squeeze %148 : memref<1x!tpu.dma_semaphore, #tpu.memory_space<semaphore_mem>> -> memref<!tpu.dma_semaphore, #tpu.memory_space<semaphore_mem>>
      tpu.enqueue_dma source(%146 : memref<1x256xf32, #tpu.memory_space<any>>) target(%147 : memref<1x256xf32, #tpu.memory_space<vmem>>) target_semaphore(%149 : memref<!tpu.dma_semaphore, #tpu.memory_space<semaphore_mem>>)
      %c4_141 = arith.constant 4 : index
      %c2_142 = arith.constant 2 : index
      %150 = memref.load %arg2[%c4_141, %c2_142] : memref<8x4xi32, #tpu.memory_space<smem>>
      %c0_i32_143 = arith.constant 0 : i32
      %151 = arith.maxsi %150, %c0_i32_143 : i32
      %c2047_i32_144 = arith.constant 2047 : i32
      %152 = arith.minsi %151, %c2047_i32_144 : i32
      %c20_i32 = arith.constant 20 : i32
      %c0_i32_145 = arith.constant 0 : i32
      %153 = tpu.memref_slice %arg3[%152, %c0_i32_145] : memref<2048x256xf32, #tpu.memory_space<any>> -> memref<1x256xf32, #tpu.memory_space<any>>
      %c20_i32_146 = arith.constant 20 : i32
      %c0_i32_147 = arith.constant 0 : i32
      %154 = tpu.memref_slice %arg7[%c20_i32_146, %c0_i32_147] : memref<32x256xf32, #tpu.memory_space<vmem>> -> memref<1x256xf32, #tpu.memory_space<vmem>>
      %155 = tpu.memref_slice %arg9[%c20_i32] : memref<32x!tpu.dma_semaphore, #tpu.memory_space<semaphore_mem>> -> memref<1x!tpu.dma_semaphore, #tpu.memory_space<semaphore_mem>>
      %156 = tpu.memref_squeeze %155 : memref<1x!tpu.dma_semaphore, #tpu.memory_space<semaphore_mem>> -> memref<!tpu.dma_semaphore, #tpu.memory_space<semaphore_mem>>
      tpu.enqueue_dma source(%153 : memref<1x256xf32, #tpu.memory_space<any>>) target(%154 : memref<1x256xf32, #tpu.memory_space<vmem>>) target_semaphore(%156 : memref<!tpu.dma_semaphore, #tpu.memory_space<semaphore_mem>>)
      %c5_148 = arith.constant 5 : index
      %c2_149 = arith.constant 2 : index
      %157 = memref.load %arg2[%c5_148, %c2_149] : memref<8x4xi32, #tpu.memory_space<smem>>
      %c0_i32_150 = arith.constant 0 : i32
      %158 = arith.maxsi %157, %c0_i32_150 : i32
      %c2047_i32_151 = arith.constant 2047 : i32
      %159 = arith.minsi %158, %c2047_i32_151 : i32
      %c21_i32 = arith.constant 21 : i32
      %c0_i32_152 = arith.constant 0 : i32
      %160 = tpu.memref_slice %arg3[%159, %c0_i32_152] : memref<2048x256xf32, #tpu.memory_space<any>> -> memref<1x256xf32, #tpu.memory_space<any>>
      %c21_i32_153 = arith.constant 21 : i32
      %c0_i32_154 = arith.constant 0 : i32
      %161 = tpu.memref_slice %arg7[%c21_i32_153, %c0_i32_154] : memref<32x256xf32, #tpu.memory_space<vmem>> -> memref<1x256xf32, #tpu.memory_space<vmem>>
      %162 = tpu.memref_slice %arg9[%c21_i32] : memref<32x!tpu.dma_semaphore, #tpu.memory_space<semaphore_mem>> -> memref<1x!tpu.dma_semaphore, #tpu.memory_space<semaphore_mem>>
      %163 = tpu.memref_squeeze %162 : memref<1x!tpu.dma_semaphore, #tpu.memory_space<semaphore_mem>> -> memref<!tpu.dma_semaphore, #tpu.memory_space<semaphore_mem>>
      tpu.enqueue_dma source(%160 : memref<1x256xf32, #tpu.memory_space<any>>) target(%161 : memref<1x256xf32, #tpu.memory_space<vmem>>) target_semaphore(%163 : memref<!tpu.dma_semaphore, #tpu.memory_space<semaphore_mem>>)
      %c6_155 = arith.constant 6 : index
      %c2_156 = arith.constant 2 : index
      %164 = memref.load %arg2[%c6_155, %c2_156] : memref<8x4xi32, #tpu.memory_space<smem>>
      %c0_i32_157 = arith.constant 0 : i32
      %165 = arith.maxsi %164, %c0_i32_157 : i32
      %c2047_i32_158 = arith.constant 2047 : i32
      %166 = arith.minsi %165, %c2047_i32_158 : i32
      %c22_i32 = arith.constant 22 : i32
      %c0_i32_159 = arith.constant 0 : i32
      %167 = tpu.memref_slice %arg3[%166, %c0_i32_159] : memref<2048x256xf32, #tpu.memory_space<any>> -> memref<1x256xf32, #tpu.memory_space<any>>
      %c22_i32_160 = arith.constant 22 : i32
      %c0_i32_161 = arith.constant 0 : i32
      %168 = tpu.memref_slice %arg7[%c22_i32_160, %c0_i32_161] : memref<32x256xf32, #tpu.memory_space<vmem>> -> memref<1x256xf32, #tpu.memory_space<vmem>>
      %169 = tpu.memref_slice %arg9[%c22_i32] : memref<32x!tpu.dma_semaphore, #tpu.memory_space<semaphore_mem>> -> memref<1x!tpu.dma_semaphore, #tpu.memory_space<semaphore_mem>>
      %170 = tpu.memref_squeeze %169 : memref<1x!tpu.dma_semaphore, #tpu.memory_space<semaphore_mem>> -> memref<!tpu.dma_semaphore, #tpu.memory_space<semaphore_mem>>
      tpu.enqueue_dma source(%167 : memref<1x256xf32, #tpu.memory_space<any>>) target(%168 : memref<1x256xf32, #tpu.memory_space<vmem>>) target_semaphore(%170 : memref<!tpu.dma_semaphore, #tpu.memory_space<semaphore_mem>>)
      %c7_162 = arith.constant 7 : index
      %c2_163 = arith.constant 2 : index
      %171 = memref.load %arg2[%c7_162, %c2_163] : memref<8x4xi32, #tpu.memory_space<smem>>
      %c0_i32_164 = arith.constant 0 : i32
      %172 = arith.maxsi %171, %c0_i32_164 : i32
      %c2047_i32_165 = arith.constant 2047 : i32
      %173 = arith.minsi %172, %c2047_i32_165 : i32
      %c23_i32 = arith.constant 23 : i32
      %c0_i32_166 = arith.constant 0 : i32
      %174 = tpu.memref_slice %arg3[%173, %c0_i32_166] : memref<2048x256xf32, #tpu.memory_space<any>> -> memref<1x256xf32, #tpu.memory_space<any>>
      %c23_i32_167 = arith.constant 23 : i32
      %c0_i32_168 = arith.constant 0 : i32
      %175 = tpu.memref_slice %arg7[%c23_i32_167, %c0_i32_168] : memref<32x256xf32, #tpu.memory_space<vmem>> -> memref<1x256xf32, #tpu.memory_space<vmem>>
      %176 = tpu.memref_slice %arg9[%c23_i32] : memref<32x!tpu.dma_semaphore, #tpu.memory_space<semaphore_mem>> -> memref<1x!tpu.dma_semaphore, #tpu.memory_space<semaphore_mem>>
      %177 = tpu.memref_squeeze %176 : memref<1x!tpu.dma_semaphore, #tpu.memory_space<semaphore_mem>> -> memref<!tpu.dma_semaphore, #tpu.memory_space<semaphore_mem>>
      tpu.enqueue_dma source(%174 : memref<1x256xf32, #tpu.memory_space<any>>) target(%175 : memref<1x256xf32, #tpu.memory_space<vmem>>) target_semaphore(%177 : memref<!tpu.dma_semaphore, #tpu.memory_space<semaphore_mem>>)
      %c0_169 = arith.constant 0 : index
      %c3_170 = arith.constant 3 : index
      %178 = memref.load %arg2[%c0_169, %c3_170] : memref<8x4xi32, #tpu.memory_space<smem>>
      %c0_i32_171 = arith.constant 0 : i32
      %179 = arith.maxsi %178, %c0_i32_171 : i32
      %c2047_i32_172 = arith.constant 2047 : i32
      %180 = arith.minsi %179, %c2047_i32_172 : i32
      %c24_i32 = arith.constant 24 : i32
      %c0_i32_173 = arith.constant 0 : i32
      %181 = tpu.memref_slice %arg3[%180, %c0_i32_173] : memref<2048x256xf32, #tpu.memory_space<any>> -> memref<1x256xf32, #tpu.memory_space<any>>
      %c24_i32_174 = arith.constant 24 : i32
      %c0_i32_175 = arith.constant 0 : i32
      %182 = tpu.memref_slice %arg7[%c24_i32_174, %c0_i32_175] : memref<32x256xf32, #tpu.memory_space<vmem>> -> memref<1x256xf32, #tpu.memory_space<vmem>>
      %183 = tpu.memref_slice %arg9[%c24_i32] : memref<32x!tpu.dma_semaphore, #tpu.memory_space<semaphore_mem>> -> memref<1x!tpu.dma_semaphore, #tpu.memory_space<semaphore_mem>>
      %184 = tpu.memref_squeeze %183 : memref<1x!tpu.dma_semaphore, #tpu.memory_space<semaphore_mem>> -> memref<!tpu.dma_semaphore, #tpu.memory_space<semaphore_mem>>
      tpu.enqueue_dma source(%181 : memref<1x256xf32, #tpu.memory_space<any>>) target(%182 : memref<1x256xf32, #tpu.memory_space<vmem>>) target_semaphore(%184 : memref<!tpu.dma_semaphore, #tpu.memory_space<semaphore_mem>>)
      %c1_176 = arith.constant 1 : index
      %c3_177 = arith.constant 3 : index
      %185 = memref.load %arg2[%c1_176, %c3_177] : memref<8x4xi32, #tpu.memory_space<smem>>
      %c0_i32_178 = arith.constant 0 : i32
      %186 = arith.maxsi %185, %c0_i32_178 : i32
      %c2047_i32_179 = arith.constant 2047 : i32
      %187 = arith.minsi %186, %c2047_i32_179 : i32
      %c25_i32 = arith.constant 25 : i32
      %c0_i32_180 = arith.constant 0 : i32
      %188 = tpu.memref_slice %arg3[%187, %c0_i32_180] : memref<2048x256xf32, #tpu.memory_space<any>> -> memref<1x256xf32, #tpu.memory_space<any>>
      %c25_i32_181 = arith.constant 25 : i32
      %c0_i32_182 = arith.constant 0 : i32
      %189 = tpu.memref_slice %arg7[%c25_i32_181, %c0_i32_182] : memref<32x256xf32, #tpu.memory_space<vmem>> -> memref<1x256xf32, #tpu.memory_space<vmem>>
      %190 = tpu.memref_slice %arg9[%c25_i32] : memref<32x!tpu.dma_semaphore, #tpu.memory_space<semaphore_mem>> -> memref<1x!tpu.dma_semaphore, #tpu.memory_space<semaphore_mem>>
      %191 = tpu.memref_squeeze %190 : memref<1x!tpu.dma_semaphore, #tpu.memory_space<semaphore_mem>> -> memref<!tpu.dma_semaphore, #tpu.memory_space<semaphore_mem>>
      tpu.enqueue_dma source(%188 : memref<1x256xf32, #tpu.memory_space<any>>) target(%189 : memref<1x256xf32, #tpu.memory_space<vmem>>) target_semaphore(%191 : memref<!tpu.dma_semaphore, #tpu.memory_space<semaphore_mem>>)
      %c2_183 = arith.constant 2 : index
      %c3_184 = arith.constant 3 : index
      %192 = memref.load %arg2[%c2_183, %c3_184] : memref<8x4xi32, #tpu.memory_space<smem>>
      %c0_i32_185 = arith.constant 0 : i32
      %193 = arith.maxsi %192, %c0_i32_185 : i32
      %c2047_i32_186 = arith.constant 2047 : i32
      %194 = arith.minsi %193, %c2047_i32_186 : i32
      %c26_i32 = arith.constant 26 : i32
      %c0_i32_187 = arith.constant 0 : i32
      %195 = tpu.memref_slice %arg3[%194, %c0_i32_187] : memref<2048x256xf32, #tpu.memory_space<any>> -> memref<1x256xf32, #tpu.memory_space<any>>
      %c26_i32_188 = arith.constant 26 : i32
      %c0_i32_189 = arith.constant 0 : i32
      %196 = tpu.memref_slice %arg7[%c26_i32_188, %c0_i32_189] : memref<32x256xf32, #tpu.memory_space<vmem>> -> memref<1x256xf32, #tpu.memory_space<vmem>>
      %197 = tpu.memref_slice %arg9[%c26_i32] : memref<32x!tpu.dma_semaphore, #tpu.memory_space<semaphore_mem>> -> memref<1x!tpu.dma_semaphore, #tpu.memory_space<semaphore_mem>>
      %198 = tpu.memref_squeeze %197 : memref<1x!tpu.dma_semaphore, #tpu.memory_space<semaphore_mem>> -> memref<!tpu.dma_semaphore, #tpu.memory_space<semaphore_mem>>
      tpu.enqueue_dma source(%195 : memref<1x256xf32, #tpu.memory_space<any>>) target(%196 : memref<1x256xf32, #tpu.memory_space<vmem>>) target_semaphore(%198 : memref<!tpu.dma_semaphore, #tpu.memory_space<semaphore_mem>>)
      %c3_190 = arith.constant 3 : index
      %c3_191 = arith.constant 3 : index
      %199 = memref.load %arg2[%c3_190, %c3_191] : memref<8x4xi32, #tpu.memory_space<smem>>
      %c0_i32_192 = arith.constant 0 : i32
      %200 = arith.maxsi %199, %c0_i32_192 : i32
      %c2047_i32_193 = arith.constant 2047 : i32
      %201 = arith.minsi %200, %c2047_i32_193 : i32
      %c27_i32 = arith.constant 27 : i32
      %c0_i32_194 = arith.constant 0 : i32
      %202 = tpu.memref_slice %arg3[%201, %c0_i32_194] : memref<2048x256xf32, #tpu.memory_space<any>> -> memref<1x256xf32, #tpu.memory_space<any>>
      %c27_i32_195 = arith.constant 27 : i32
      %c0_i32_196 = arith.constant 0 : i32
      %203 = tpu.memref_slice %arg7[%c27_i32_195, %c0_i32_196] : memref<32x256xf32, #tpu.memory_space<vmem>> -> memref<1x256xf32, #tpu.memory_space<vmem>>
      %204 = tpu.memref_slice %arg9[%c27_i32] : memref<32x!tpu.dma_semaphore, #tpu.memory_space<semaphore_mem>> -> memref<1x!tpu.dma_semaphore, #tpu.memory_space<semaphore_mem>>
      %205 = tpu.memref_squeeze %204 : memref<1x!tpu.dma_semaphore, #tpu.memory_space<semaphore_mem>> -> memref<!tpu.dma_semaphore, #tpu.memory_space<semaphore_mem>>
      tpu.enqueue_dma source(%202 : memref<1x256xf32, #tpu.memory_space<any>>) target(%203 : memref<1x256xf32, #tpu.memory_space<vmem>>) target_semaphore(%205 : memref<!tpu.dma_semaphore, #tpu.memory_space<semaphore_mem>>)
      %c4_197 = arith.constant 4 : index
      %c3_198 = arith.constant 3 : index
      %206 = memref.load %arg2[%c4_197, %c3_198] : memref<8x4xi32, #tpu.memory_space<smem>>
      %c0_i32_199 = arith.constant 0 : i32
      %207 = arith.maxsi %206, %c0_i32_199 : i32
      %c2047_i32_200 = arith.constant 2047 : i32
      %208 = arith.minsi %207, %c2047_i32_200 : i32
      %c28_i32 = arith.constant 28 : i32
      %c0_i32_201 = arith.constant 0 : i32
      %209 = tpu.memref_slice %arg3[%208, %c0_i32_201] : memref<2048x256xf32, #tpu.memory_space<any>> -> memref<1x256xf32, #tpu.memory_space<any>>
      %c28_i32_202 = arith.constant 28 : i32
      %c0_i32_203 = arith.constant 0 : i32
      %210 = tpu.memref_slice %arg7[%c28_i32_202, %c0_i32_203] : memref<32x256xf32, #tpu.memory_space<vmem>> -> memref<1x256xf32, #tpu.memory_space<vmem>>
      %211 = tpu.memref_slice %arg9[%c28_i32] : memref<32x!tpu.dma_semaphore, #tpu.memory_space<semaphore_mem>> -> memref<1x!tpu.dma_semaphore, #tpu.memory_space<semaphore_mem>>
      %212 = tpu.memref_squeeze %211 : memref<1x!tpu.dma_semaphore, #tpu.memory_space<semaphore_mem>> -> memref<!tpu.dma_semaphore, #tpu.memory_space<semaphore_mem>>
      tpu.enqueue_dma source(%209 : memref<1x256xf32, #tpu.memory_space<any>>) target(%210 : memref<1x256xf32, #tpu.memory_space<vmem>>) target_semaphore(%212 : memref<!tpu.dma_semaphore, #tpu.memory_space<semaphore_mem>>)
      %c5_204 = arith.constant 5 : index
      %c3_205 = arith.constant 3 : index
      %213 = memref.load %arg2[%c5_204, %c3_205] : memref<8x4xi32, #tpu.memory_space<smem>>
      %c0_i32_206 = arith.constant 0 : i32
      %214 = arith.maxsi %213, %c0_i32_206 : i32
      %c2047_i32_207 = arith.constant 2047 : i32
      %215 = arith.minsi %214, %c2047_i32_207 : i32
      %c29_i32 = arith.constant 29 : i32
      %c0_i32_208 = arith.constant 0 : i32
      %216 = tpu.memref_slice %arg3[%215, %c0_i32_208] : memref<2048x256xf32, #tpu.memory_space<any>> -> memref<1x256xf32, #tpu.memory_space<any>>
      %c29_i32_209 = arith.constant 29 : i32
      %c0_i32_210 = arith.constant 0 : i32
      %217 = tpu.memref_slice %arg7[%c29_i32_209, %c0_i32_210] : memref<32x256xf32, #tpu.memory_space<vmem>> -> memref<1x256xf32, #tpu.memory_space<vmem>>
      %218 = tpu.memref_slice %arg9[%c29_i32] : memref<32x!tpu.dma_semaphore, #tpu.memory_space<semaphore_mem>> -> memref<1x!tpu.dma_semaphore, #tpu.memory_space<semaphore_mem>>
      %219 = tpu.memref_squeeze %218 : memref<1x!tpu.dma_semaphore, #tpu.memory_space<semaphore_mem>> -> memref<!tpu.dma_semaphore, #tpu.memory_space<semaphore_mem>>
      tpu.enqueue_dma source(%216 : memref<1x256xf32, #tpu.memory_space<any>>) target(%217 : memref<1x256xf32, #tpu.memory_space<vmem>>) target_semaphore(%219 : memref<!tpu.dma_semaphore, #tpu.memory_space<semaphore_mem>>)
      %c6_211 = arith.constant 6 : index
      %c3_212 = arith.constant 3 : index
      %220 = memref.load %arg2[%c6_211, %c3_212] : memref<8x4xi32, #tpu.memory_space<smem>>
      %c0_i32_213 = arith.constant 0 : i32
      %221 = arith.maxsi %220, %c0_i32_213 : i32
      %c2047_i32_214 = arith.constant 2047 : i32
      %222 = arith.minsi %221, %c2047_i32_214 : i32
      %c30_i32 = arith.constant 30 : i32
      %c0_i32_215 = arith.constant 0 : i32
      %223 = tpu.memref_slice %arg3[%222, %c0_i32_215] : memref<2048x256xf32, #tpu.memory_space<any>> -> memref<1x256xf32, #tpu.memory_space<any>>
      %c30_i32_216 = arith.constant 30 : i32
      %c0_i32_217 = arith.constant 0 : i32
      %224 = tpu.memref_slice %arg7[%c30_i32_216, %c0_i32_217] : memref<32x256xf32, #tpu.memory_space<vmem>> -> memref<1x256xf32, #tpu.memory_space<vmem>>
      %225 = tpu.memref_slice %arg9[%c30_i32] : memref<32x!tpu.dma_semaphore, #tpu.memory_space<semaphore_mem>> -> memref<1x!tpu.dma_semaphore, #tpu.memory_space<semaphore_mem>>
      %226 = tpu.memref_squeeze %225 : memref<1x!tpu.dma_semaphore, #tpu.memory_space<semaphore_mem>> -> memref<!tpu.dma_semaphore, #tpu.memory_space<semaphore_mem>>
      tpu.enqueue_dma source(%223 : memref<1x256xf32, #tpu.memory_space<any>>) target(%224 : memref<1x256xf32, #tpu.memory_space<vmem>>) target_semaphore(%226 : memref<!tpu.dma_semaphore, #tpu.memory_space<semaphore_mem>>)
      %c7_218 = arith.constant 7 : index
      %c3_219 = arith.constant 3 : index
      %227 = memref.load %arg2[%c7_218, %c3_219] : memref<8x4xi32, #tpu.memory_space<smem>>
      %c0_i32_220 = arith.constant 0 : i32
      %228 = arith.maxsi %227, %c0_i32_220 : i32
      %c2047_i32_221 = arith.constant 2047 : i32
      %229 = arith.minsi %228, %c2047_i32_221 : i32
      %c31_i32 = arith.constant 31 : i32
      %c0_i32_222 = arith.constant 0 : i32
      %230 = tpu.memref_slice %arg3[%229, %c0_i32_222] : memref<2048x256xf32, #tpu.memory_space<any>> -> memref<1x256xf32, #tpu.memory_space<any>>
      %c31_i32_223 = arith.constant 31 : i32
      %c0_i32_224 = arith.constant 0 : i32
      %231 = tpu.memref_slice %arg7[%c31_i32_223, %c0_i32_224] : memref<32x256xf32, #tpu.memory_space<vmem>> -> memref<1x256xf32, #tpu.memory_space<vmem>>
      %232 = tpu.memref_slice %arg9[%c31_i32] : memref<32x!tpu.dma_semaphore, #tpu.memory_space<semaphore_mem>> -> memref<1x!tpu.dma_semaphore, #tpu.memory_space<semaphore_mem>>
      %233 = tpu.memref_squeeze %232 : memref<1x!tpu.dma_semaphore, #tpu.memory_space<semaphore_mem>> -> memref<!tpu.dma_semaphore, #tpu.memory_space<semaphore_mem>>
      tpu.enqueue_dma source(%230 : memref<1x256xf32, #tpu.memory_space<any>>) target(%231 : memref<1x256xf32, #tpu.memory_space<vmem>>) target_semaphore(%233 : memref<!tpu.dma_semaphore, #tpu.memory_space<semaphore_mem>>)
      %c0_i32_225 = arith.constant 0 : i32
      %c0_i32_226 = arith.constant 0 : i32
      %234 = tpu.memref_slice %arg3[%12, %c0_i32_226] : memref<2048x256xf32, #tpu.memory_space<any>> -> memref<1x256xf32, #tpu.memory_space<any>>
      %c0_i32_227 = arith.constant 0 : i32
      %c0_i32_228 = arith.constant 0 : i32
      %235 = tpu.memref_slice %arg7[%c0_i32_227, %c0_i32_228] : memref<32x256xf32, #tpu.memory_space<vmem>> -> memref<1x256xf32, #tpu.memory_space<vmem>>
      %236 = tpu.memref_slice %arg9[%c0_i32_225] : memref<32x!tpu.dma_semaphore, #tpu.memory_space<semaphore_mem>> -> memref<1x!tpu.dma_semaphore, #tpu.memory_space<semaphore_mem>>
      %237 = tpu.memref_squeeze %236 : memref<1x!tpu.dma_semaphore, #tpu.memory_space<semaphore_mem>> -> memref<!tpu.dma_semaphore, #tpu.memory_space<semaphore_mem>>
      tpu.wait_dma2 semaphore(%237 : memref<!tpu.dma_semaphore, #tpu.memory_space<semaphore_mem>>) src(%234 : memref<1x256xf32, #tpu.memory_space<any>>) dst(%235 : memref<1x256xf32, #tpu.memory_space<vmem>>)
      %c1_i32_229 = arith.constant 1 : i32
      %c0_i32_230 = arith.constant 0 : i32
      %238 = tpu.memref_slice %arg3[%19, %c0_i32_230] : memref<2048x256xf32, #tpu.memory_space<any>> -> memref<1x256xf32, #tpu.memory_space<any>>
      %c1_i32_231 = arith.constant 1 : i32
      %c0_i32_232 = arith.constant 0 : i32
      %239 = tpu.memref_slice %arg7[%c1_i32_231, %c0_i32_232] : memref<32x256xf32, #tpu.memory_space<vmem>> -> memref<1x256xf32, #tpu.memory_space<vmem>>
      %240 = tpu.memref_slice %arg9[%c1_i32_229] : memref<32x!tpu.dma_semaphore, #tpu.memory_space<semaphore_mem>> -> memref<1x!tpu.dma_semaphore, #tpu.memory_space<semaphore_mem>>
      %241 = tpu.memref_squeeze %240 : memref<1x!tpu.dma_semaphore, #tpu.memory_space<semaphore_mem>> -> memref<!tpu.dma_semaphore, #tpu.memory_space<semaphore_mem>>
      tpu.wait_dma2 semaphore(%241 : memref<!tpu.dma_semaphore, #tpu.memory_space<semaphore_mem>>) src(%238 : memref<1x256xf32, #tpu.memory_space<any>>) dst(%239 : memref<1x256xf32, #tpu.memory_space<vmem>>)
      %c2_i32_233 = arith.constant 2 : i32
      %c0_i32_234 = arith.constant 0 : i32
      %242 = tpu.memref_slice %arg3[%26, %c0_i32_234] : memref<2048x256xf32, #tpu.memory_space<any>> -> memref<1x256xf32, #tpu.memory_space<any>>
      %c2_i32_235 = arith.constant 2 : i32
      %c0_i32_236 = arith.constant 0 : i32
      %243 = tpu.memref_slice %arg7[%c2_i32_235, %c0_i32_236] : memref<32x256xf32, #tpu.memory_space<vmem>> -> memref<1x256xf32, #tpu.memory_space<vmem>>
      %244 = tpu.memref_slice %arg9[%c2_i32_233] : memref<32x!tpu.dma_semaphore, #tpu.memory_space<semaphore_mem>> -> memref<1x!tpu.dma_semaphore, #tpu.memory_space<semaphore_mem>>
      %245 = tpu.memref_squeeze %244 : memref<1x!tpu.dma_semaphore, #tpu.memory_space<semaphore_mem>> -> memref<!tpu.dma_semaphore, #tpu.memory_space<semaphore_mem>>
      tpu.wait_dma2 semaphore(%245 : memref<!tpu.dma_semaphore, #tpu.memory_space<semaphore_mem>>) src(%242 : memref<1x256xf32, #tpu.memory_space<any>>) dst(%243 : memref<1x256xf32, #tpu.memory_space<vmem>>)
      %c3_i32_237 = arith.constant 3 : i32
      %c0_i32_238 = arith.constant 0 : i32
      %246 = tpu.memref_slice %arg3[%33, %c0_i32_238] : memref<2048x256xf32, #tpu.memory_space<any>> -> memref<1x256xf32, #tpu.memory_space<any>>
      %c3_i32_239 = arith.constant 3 : i32
      %c0_i32_240 = arith.constant 0 : i32
      %247 = tpu.memref_slice %arg7[%c3_i32_239, %c0_i32_240] : memref<32x256xf32, #tpu.memory_space<vmem>> -> memref<1x256xf32, #tpu.memory_space<vmem>>
      %248 = tpu.memref_slice %arg9[%c3_i32_237] : memref<32x!tpu.dma_semaphore, #tpu.memory_space<semaphore_mem>> -> memref<1x!tpu.dma_semaphore, #tpu.memory_space<semaphore_mem>>
      %249 = tpu.memref_squeeze %248 : memref<1x!tpu.dma_semaphore, #tpu.memory_space<semaphore_mem>> -> memref<!tpu.dma_semaphore, #tpu.memory_space<semaphore_mem>>
      tpu.wait_dma2 semaphore(%249 : memref<!tpu.dma_semaphore, #tpu.memory_space<semaphore_mem>>) src(%246 : memref<1x256xf32, #tpu.memory_space<any>>) dst(%247 : memref<1x256xf32, #tpu.memory_space<vmem>>)
      %c4_i32_241 = arith.constant 4 : i32
      %c0_i32_242 = arith.constant 0 : i32
      %250 = tpu.memref_slice %arg3[%40, %c0_i32_242] : memref<2048x256xf32, #tpu.memory_space<any>> -> memref<1x256xf32, #tpu.memory_space<any>>
      %c4_i32_243 = arith.constant 4 : i32
      %c0_i32_244 = arith.constant 0 : i32
      %251 = tpu.memref_slice %arg7[%c4_i32_243, %c0_i32_244] : memref<32x256xf32, #tpu.memory_space<vmem>> -> memref<1x256xf32, #tpu.memory_space<vmem>>
      %252 = tpu.memref_slice %arg9[%c4_i32_241] : memref<32x!tpu.dma_semaphore, #tpu.memory_space<semaphore_mem>> -> memref<1x!tpu.dma_semaphore, #tpu.memory_space<semaphore_mem>>
      %253 = tpu.memref_squeeze %252 : memref<1x!tpu.dma_semaphore, #tpu.memory_space<semaphore_mem>> -> memref<!tpu.dma_semaphore, #tpu.memory_space<semaphore_mem>>
      tpu.wait_dma2 semaphore(%253 : memref<!tpu.dma_semaphore, #tpu.memory_space<semaphore_mem>>) src(%250 : memref<1x256xf32, #tpu.memory_space<any>>) dst(%251 : memref<1x256xf32, #tpu.memory_space<vmem>>)
      %c5_i32_245 = arith.constant 5 : i32
      %c0_i32_246 = arith.constant 0 : i32
      %254 = tpu.memref_slice %arg3[%47, %c0_i32_246] : memref<2048x256xf32, #tpu.memory_space<any>> -> memref<1x256xf32, #tpu.memory_space<any>>
      %c5_i32_247 = arith.constant 5 : i32
      %c0_i32_248 = arith.constant 0 : i32
      %255 = tpu.memref_slice %arg7[%c5_i32_247, %c0_i32_248] : memref<32x256xf32, #tpu.memory_space<vmem>> -> memref<1x256xf32, #tpu.memory_space<vmem>>
      %256 = tpu.memref_slice %arg9[%c5_i32_245] : memref<32x!tpu.dma_semaphore, #tpu.memory_space<semaphore_mem>> -> memref<1x!tpu.dma_semaphore, #tpu.memory_space<semaphore_mem>>
      %257 = tpu.memref_squeeze %256 : memref<1x!tpu.dma_semaphore, #tpu.memory_space<semaphore_mem>> -> memref<!tpu.dma_semaphore, #tpu.memory_space<semaphore_mem>>
      tpu.wait_dma2 semaphore(%257 : memref<!tpu.dma_semaphore, #tpu.memory_space<semaphore_mem>>) src(%254 : memref<1x256xf32, #tpu.memory_space<any>>) dst(%255 : memref<1x256xf32, #tpu.memory_space<vmem>>)
      %c6_i32_249 = arith.constant 6 : i32
      %c0_i32_250 = arith.constant 0 : i32
      %258 = tpu.memref_slice %arg3[%54, %c0_i32_250] : memref<2048x256xf32, #tpu.memory_space<any>> -> memref<1x256xf32, #tpu.memory_space<any>>
      %c6_i32_251 = arith.constant 6 : i32
      %c0_i32_252 = arith.constant 0 : i32
      %259 = tpu.memref_slice %arg7[%c6_i32_251, %c0_i32_252] : memref<32x256xf32, #tpu.memory_space<vmem>> -> memref<1x256xf32, #tpu.memory_space<vmem>>
      %260 = tpu.memref_slice %arg9[%c6_i32_249] : memref<32x!tpu.dma_semaphore, #tpu.memory_space<semaphore_mem>> -> memref<1x!tpu.dma_semaphore, #tpu.memory_space<semaphore_mem>>
      %261 = tpu.memref_squeeze %260 : memref<1x!tpu.dma_semaphore, #tpu.memory_space<semaphore_mem>> -> memref<!tpu.dma_semaphore, #tpu.memory_space<semaphore_mem>>
      tpu.wait_dma2 semaphore(%261 : memref<!tpu.dma_semaphore, #tpu.memory_space<semaphore_mem>>) src(%258 : memref<1x256xf32, #tpu.memory_space<any>>) dst(%259 : memref<1x256xf32, #tpu.memory_space<vmem>>)
      %c7_i32_253 = arith.constant 7 : i32
      %c0_i32_254 = arith.constant 0 : i32
      %262 = tpu.memref_slice %arg3[%61, %c0_i32_254] : memref<2048x256xf32, #tpu.memory_space<any>> -> memref<1x256xf32, #tpu.memory_space<any>>
      %c7_i32_255 = arith.constant 7 : i32
      %c0_i32_256 = arith.constant 0 : i32
      %263 = tpu.memref_slice %arg7[%c7_i32_255, %c0_i32_256] : memref<32x256xf32, #tpu.memory_space<vmem>> -> memref<1x256xf32, #tpu.memory_space<vmem>>
      %264 = tpu.memref_slice %arg9[%c7_i32_253] : memref<32x!tpu.dma_semaphore, #tpu.memory_space<semaphore_mem>> -> memref<1x!tpu.dma_semaphore, #tpu.memory_space<semaphore_mem>>
      %265 = tpu.memref_squeeze %264 : memref<1x!tpu.dma_semaphore, #tpu.memory_space<semaphore_mem>> -> memref<!tpu.dma_semaphore, #tpu.memory_space<semaphore_mem>>
      tpu.wait_dma2 semaphore(%265 : memref<!tpu.dma_semaphore, #tpu.memory_space<semaphore_mem>>) src(%262 : memref<1x256xf32, #tpu.memory_space<any>>) dst(%263 : memref<1x256xf32, #tpu.memory_space<vmem>>)
      %c8_i32_257 = arith.constant 8 : i32
      %c0_i32_258 = arith.constant 0 : i32
      %266 = tpu.memref_slice %arg3[%68, %c0_i32_258] : memref<2048x256xf32, #tpu.memory_space<any>> -> memref<1x256xf32, #tpu.memory_space<any>>
      %c8_i32_259 = arith.constant 8 : i32
      %c0_i32_260 = arith.constant 0 : i32
      %267 = tpu.memref_slice %arg7[%c8_i32_259, %c0_i32_260] : memref<32x256xf32, #tpu.memory_space<vmem>> -> memref<1x256xf32, #tpu.memory_space<vmem>>
      %268 = tpu.memref_slice %arg9[%c8_i32_257] : memref<32x!tpu.dma_semaphore, #tpu.memory_space<semaphore_mem>> -> memref<1x!tpu.dma_semaphore, #tpu.memory_space<semaphore_mem>>
      %269 = tpu.memref_squeeze %268 : memref<1x!tpu.dma_semaphore, #tpu.memory_space<semaphore_mem>> -> memref<!tpu.dma_semaphore, #tpu.memory_space<semaphore_mem>>
      tpu.wait_dma2 semaphore(%269 : memref<!tpu.dma_semaphore, #tpu.memory_space<semaphore_mem>>) src(%266 : memref<1x256xf32, #tpu.memory_space<any>>) dst(%267 : memref<1x256xf32, #tpu.memory_space<vmem>>)
      %c9_i32_261 = arith.constant 9 : i32
      %c0_i32_262 = arith.constant 0 : i32
      %270 = tpu.memref_slice %arg3[%75, %c0_i32_262] : memref<2048x256xf32, #tpu.memory_space<any>> -> memref<1x256xf32, #tpu.memory_space<any>>
      %c9_i32_263 = arith.constant 9 : i32
      %c0_i32_264 = arith.constant 0 : i32
      %271 = tpu.memref_slice %arg7[%c9_i32_263, %c0_i32_264] : memref<32x256xf32, #tpu.memory_space<vmem>> -> memref<1x256xf32, #tpu.memory_space<vmem>>
      %272 = tpu.memref_slice %arg9[%c9_i32_261] : memref<32x!tpu.dma_semaphore, #tpu.memory_space<semaphore_mem>> -> memref<1x!tpu.dma_semaphore, #tpu.memory_space<semaphore_mem>>
      %273 = tpu.memref_squeeze %272 : memref<1x!tpu.dma_semaphore, #tpu.memory_space<semaphore_mem>> -> memref<!tpu.dma_semaphore, #tpu.memory_space<semaphore_mem>>
      tpu.wait_dma2 semaphore(%273 : memref<!tpu.dma_semaphore, #tpu.memory_space<semaphore_mem>>) src(%270 : memref<1x256xf32, #tpu.memory_space<any>>) dst(%271 : memref<1x256xf32, #tpu.memory_space<vmem>>)
      %c10_i32_265 = arith.constant 10 : i32
      %c0_i32_266 = arith.constant 0 : i32
      %274 = tpu.memref_slice %arg3[%82, %c0_i32_266] : memref<2048x256xf32, #tpu.memory_space<any>> -> memref<1x256xf32, #tpu.memory_space<any>>
      %c10_i32_267 = arith.constant 10 : i32
      %c0_i32_268 = arith.constant 0 : i32
      %275 = tpu.memref_slice %arg7[%c10_i32_267, %c0_i32_268] : memref<32x256xf32, #tpu.memory_space<vmem>> -> memref<1x256xf32, #tpu.memory_space<vmem>>
      %276 = tpu.memref_slice %arg9[%c10_i32_265] : memref<32x!tpu.dma_semaphore, #tpu.memory_space<semaphore_mem>> -> memref<1x!tpu.dma_semaphore, #tpu.memory_space<semaphore_mem>>
      %277 = tpu.memref_squeeze %276 : memref<1x!tpu.dma_semaphore, #tpu.memory_space<semaphore_mem>> -> memref<!tpu.dma_semaphore, #tpu.memory_space<semaphore_mem>>
      tpu.wait_dma2 semaphore(%277 : memref<!tpu.dma_semaphore, #tpu.memory_space<semaphore_mem>>) src(%274 : memref<1x256xf32, #tpu.memory_space<any>>) dst(%275 : memref<1x256xf32, #tpu.memory_space<vmem>>)
      %c11_i32_269 = arith.constant 11 : i32
      %c0_i32_270 = arith.constant 0 : i32
      %278 = tpu.memref_slice %arg3[%89, %c0_i32_270] : memref<2048x256xf32, #tpu.memory_space<any>> -> memref<1x256xf32, #tpu.memory_space<any>>
      %c11_i32_271 = arith.constant 11 : i32
      %c0_i32_272 = arith.constant 0 : i32
      %279 = tpu.memref_slice %arg7[%c11_i32_271, %c0_i32_272] : memref<32x256xf32, #tpu.memory_space<vmem>> -> memref<1x256xf32, #tpu.memory_space<vmem>>
      %280 = tpu.memref_slice %arg9[%c11_i32_269] : memref<32x!tpu.dma_semaphore, #tpu.memory_space<semaphore_mem>> -> memref<1x!tpu.dma_semaphore, #tpu.memory_space<semaphore_mem>>
      %281 = tpu.memref_squeeze %280 : memref<1x!tpu.dma_semaphore, #tpu.memory_space<semaphore_mem>> -> memref<!tpu.dma_semaphore, #tpu.memory_space<semaphore_mem>>
      tpu.wait_dma2 semaphore(%281 : memref<!tpu.dma_semaphore, #tpu.memory_space<semaphore_mem>>) src(%278 : memref<1x256xf32, #tpu.memory_space<any>>) dst(%279 : memref<1x256xf32, #tpu.memory_space<vmem>>)
      %c12_i32_273 = arith.constant 12 : i32
      %c0_i32_274 = arith.constant 0 : i32
      %282 = tpu.memref_slice %arg3[%96, %c0_i32_274] : memref<2048x256xf32, #tpu.memory_space<any>> -> memref<1x256xf32, #tpu.memory_space<any>>
      %c12_i32_275 = arith.constant 12 : i32
      %c0_i32_276 = arith.constant 0 : i32
      %283 = tpu.memref_slice %arg7[%c12_i32_275, %c0_i32_276] : memref<32x256xf32, #tpu.memory_space<vmem>> -> memref<1x256xf32, #tpu.memory_space<vmem>>
      %284 = tpu.memref_slice %arg9[%c12_i32_273] : memref<32x!tpu.dma_semaphore, #tpu.memory_space<semaphore_mem>> -> memref<1x!tpu.dma_semaphore, #tpu.memory_space<semaphore_mem>>
      %285 = tpu.memref_squeeze %284 : memref<1x!tpu.dma_semaphore, #tpu.memory_space<semaphore_mem>> -> memref<!tpu.dma_semaphore, #tpu.memory_space<semaphore_mem>>
      tpu.wait_dma2 semaphore(%285 : memref<!tpu.dma_semaphore, #tpu.memory_space<semaphore_mem>>) src(%282 : memref<1x256xf32, #tpu.memory_space<any>>) dst(%283 : memref<1x256xf32, #tpu.memory_space<vmem>>)
      %c13_i32_277 = arith.constant 13 : i32
      %c0_i32_278 = arith.constant 0 : i32
      %286 = tpu.memref_slice %arg3[%103, %c0_i32_278] : memref<2048x256xf32, #tpu.memory_space<any>> -> memref<1x256xf32, #tpu.memory_space<any>>
      %c13_i32_279 = arith.constant 13 : i32
      %c0_i32_280 = arith.constant 0 : i32
      %287 = tpu.memref_slice %arg7[%c13_i32_279, %c0_i32_280] : memref<32x256xf32, #tpu.memory_space<vmem>> -> memref<1x256xf32, #tpu.memory_space<vmem>>
      %288 = tpu.memref_slice %arg9[%c13_i32_277] : memref<32x!tpu.dma_semaphore, #tpu.memory_space<semaphore_mem>> -> memref<1x!tpu.dma_semaphore, #tpu.memory_space<semaphore_mem>>
      %289 = tpu.memref_squeeze %288 : memref<1x!tpu.dma_semaphore, #tpu.memory_space<semaphore_mem>> -> memref<!tpu.dma_semaphore, #tpu.memory_space<semaphore_mem>>
      tpu.wait_dma2 semaphore(%289 : memref<!tpu.dma_semaphore, #tpu.memory_space<semaphore_mem>>) src(%286 : memref<1x256xf32, #tpu.memory_space<any>>) dst(%287 : memref<1x256xf32, #tpu.memory_space<vmem>>)
      %c14_i32_281 = arith.constant 14 : i32
      %c0_i32_282 = arith.constant 0 : i32
      %290 = tpu.memref_slice %arg3[%110, %c0_i32_282] : memref<2048x256xf32, #tpu.memory_space<any>> -> memref<1x256xf32, #tpu.memory_space<any>>
      %c14_i32_283 = arith.constant 14 : i32
      %c0_i32_284 = arith.constant 0 : i32
      %291 = tpu.memref_slice %arg7[%c14_i32_283, %c0_i32_284] : memref<32x256xf32, #tpu.memory_space<vmem>> -> memref<1x256xf32, #tpu.memory_space<vmem>>
      %292 = tpu.memref_slice %arg9[%c14_i32_281] : memref<32x!tpu.dma_semaphore, #tpu.memory_space<semaphore_mem>> -> memref<1x!tpu.dma_semaphore, #tpu.memory_space<semaphore_mem>>
      %293 = tpu.memref_squeeze %292 : memref<1x!tpu.dma_semaphore, #tpu.memory_space<semaphore_mem>> -> memref<!tpu.dma_semaphore, #tpu.memory_space<semaphore_mem>>
      tpu.wait_dma2 semaphore(%293 : memref<!tpu.dma_semaphore, #tpu.memory_space<semaphore_mem>>) src(%290 : memref<1x256xf32, #tpu.memory_space<any>>) dst(%291 : memref<1x256xf32, #tpu.memory_space<vmem>>)
      %c15_i32_285 = arith.constant 15 : i32
      %c0_i32_286 = arith.constant 0 : i32
      %294 = tpu.memref_slice %arg3[%117, %c0_i32_286] : memref<2048x256xf32, #tpu.memory_space<any>> -> memref<1x256xf32, #tpu.memory_space<any>>
      %c15_i32_287 = arith.constant 15 : i32
      %c0_i32_288 = arith.constant 0 : i32
      %295 = tpu.memref_slice %arg7[%c15_i32_287, %c0_i32_288] : memref<32x256xf32, #tpu.memory_space<vmem>> -> memref<1x256xf32, #tpu.memory_space<vmem>>
      %296 = tpu.memref_slice %arg9[%c15_i32_285] : memref<32x!tpu.dma_semaphore, #tpu.memory_space<semaphore_mem>> -> memref<1x!tpu.dma_semaphore, #tpu.memory_space<semaphore_mem>>
      %297 = tpu.memref_squeeze %296 : memref<1x!tpu.dma_semaphore, #tpu.memory_space<semaphore_mem>> -> memref<!tpu.dma_semaphore, #tpu.memory_space<semaphore_mem>>
      tpu.wait_dma2 semaphore(%297 : memref<!tpu.dma_semaphore, #tpu.memory_space<semaphore_mem>>) src(%294 : memref<1x256xf32, #tpu.memory_space<any>>) dst(%295 : memref<1x256xf32, #tpu.memory_space<vmem>>)
      %c16_i32_289 = arith.constant 16 : i32
      %c0_i32_290 = arith.constant 0 : i32
      %298 = tpu.memref_slice %arg3[%124, %c0_i32_290] : memref<2048x256xf32, #tpu.memory_space<any>> -> memref<1x256xf32, #tpu.memory_space<any>>
      %c16_i32_291 = arith.constant 16 : i32
      %c0_i32_292 = arith.constant 0 : i32
      %299 = tpu.memref_slice %arg7[%c16_i32_291, %c0_i32_292] : memref<32x256xf32, #tpu.memory_space<vmem>> -> memref<1x256xf32, #tpu.memory_space<vmem>>
      %300 = tpu.memref_slice %arg9[%c16_i32_289] : memref<32x!tpu.dma_semaphore, #tpu.memory_space<semaphore_mem>> -> memref<1x!tpu.dma_semaphore, #tpu.memory_space<semaphore_mem>>
      %301 = tpu.memref_squeeze %300 : memref<1x!tpu.dma_semaphore, #tpu.memory_space<semaphore_mem>> -> memref<!tpu.dma_semaphore, #tpu.memory_space<semaphore_mem>>
      tpu.wait_dma2 semaphore(%301 : memref<!tpu.dma_semaphore, #tpu.memory_space<semaphore_mem>>) src(%298 : memref<1x256xf32, #tpu.memory_space<any>>) dst(%299 : memref<1x256xf32, #tpu.memory_space<vmem>>)
      %c17_i32_293 = arith.constant 17 : i32
      %c0_i32_294 = arith.constant 0 : i32
      %302 = tpu.memref_slice %arg3[%131, %c0_i32_294] : memref<2048x256xf32, #tpu.memory_space<any>> -> memref<1x256xf32, #tpu.memory_space<any>>
      %c17_i32_295 = arith.constant 17 : i32
      %c0_i32_296 = arith.constant 0 : i32
      %303 = tpu.memref_slice %arg7[%c17_i32_295, %c0_i32_296] : memref<32x256xf32, #tpu.memory_space<vmem>> -> memref<1x256xf32, #tpu.memory_space<vmem>>
      %304 = tpu.memref_slice %arg9[%c17_i32_293] : memref<32x!tpu.dma_semaphore, #tpu.memory_space<semaphore_mem>> -> memref<1x!tpu.dma_semaphore, #tpu.memory_space<semaphore_mem>>
      %305 = tpu.memref_squeeze %304 : memref<1x!tpu.dma_semaphore, #tpu.memory_space<semaphore_mem>> -> memref<!tpu.dma_semaphore, #tpu.memory_space<semaphore_mem>>
      tpu.wait_dma2 semaphore(%305 : memref<!tpu.dma_semaphore, #tpu.memory_space<semaphore_mem>>) src(%302 : memref<1x256xf32, #tpu.memory_space<any>>) dst(%303 : memref<1x256xf32, #tpu.memory_space<vmem>>)
      %c18_i32_297 = arith.constant 18 : i32
      %c0_i32_298 = arith.constant 0 : i32
      %306 = tpu.memref_slice %arg3[%138, %c0_i32_298] : memref<2048x256xf32, #tpu.memory_space<any>> -> memref<1x256xf32, #tpu.memory_space<any>>
      %c18_i32_299 = arith.constant 18 : i32
      %c0_i32_300 = arith.constant 0 : i32
      %307 = tpu.memref_slice %arg7[%c18_i32_299, %c0_i32_300] : memref<32x256xf32, #tpu.memory_space<vmem>> -> memref<1x256xf32, #tpu.memory_space<vmem>>
      %308 = tpu.memref_slice %arg9[%c18_i32_297] : memref<32x!tpu.dma_semaphore, #tpu.memory_space<semaphore_mem>> -> memref<1x!tpu.dma_semaphore, #tpu.memory_space<semaphore_mem>>
      %309 = tpu.memref_squeeze %308 : memref<1x!tpu.dma_semaphore, #tpu.memory_space<semaphore_mem>> -> memref<!tpu.dma_semaphore, #tpu.memory_space<semaphore_mem>>
      tpu.wait_dma2 semaphore(%309 : memref<!tpu.dma_semaphore, #tpu.memory_space<semaphore_mem>>) src(%306 : memref<1x256xf32, #tpu.memory_space<any>>) dst(%307 : memref<1x256xf32, #tpu.memory_space<vmem>>)
      %c19_i32_301 = arith.constant 19 : i32
      %c0_i32_302 = arith.constant 0 : i32
      %310 = tpu.memref_slice %arg3[%145, %c0_i32_302] : memref<2048x256xf32, #tpu.memory_space<any>> -> memref<1x256xf32, #tpu.memory_space<any>>
      %c19_i32_303 = arith.constant 19 : i32
      %c0_i32_304 = arith.constant 0 : i32
      %311 = tpu.memref_slice %arg7[%c19_i32_303, %c0_i32_304] : memref<32x256xf32, #tpu.memory_space<vmem>> -> memref<1x256xf32, #tpu.memory_space<vmem>>
      %312 = tpu.memref_slice %arg9[%c19_i32_301] : memref<32x!tpu.dma_semaphore, #tpu.memory_space<semaphore_mem>> -> memref<1x!tpu.dma_semaphore, #tpu.memory_space<semaphore_mem>>
      %313 = tpu.memref_squeeze %312 : memref<1x!tpu.dma_semaphore, #tpu.memory_space<semaphore_mem>> -> memref<!tpu.dma_semaphore, #tpu.memory_space<semaphore_mem>>
      tpu.wait_dma2 semaphore(%313 : memref<!tpu.dma_semaphore, #tpu.memory_space<semaphore_mem>>) src(%310 : memref<1x256xf32, #tpu.memory_space<any>>) dst(%311 : memref<1x256xf32, #tpu.memory_space<vmem>>)
      %c20_i32_305 = arith.constant 20 : i32
      %c0_i32_306 = arith.constant 0 : i32
      %314 = tpu.memref_slice %arg3[%152, %c0_i32_306] : memref<2048x256xf32, #tpu.memory_space<any>> -> memref<1x256xf32, #tpu.memory_space<any>>
      %c20_i32_307 = arith.constant 20 : i32
      %c0_i32_308 = arith.constant 0 : i32
      %315 = tpu.memref_slice %arg7[%c20_i32_307, %c0_i32_308] : memref<32x256xf32, #tpu.memory_space<vmem>> -> memref<1x256xf32, #tpu.memory_space<vmem>>
      %316 = tpu.memref_slice %arg9[%c20_i32_305] : memref<32x!tpu.dma_semaphore, #tpu.memory_space<semaphore_mem>> -> memref<1x!tpu.dma_semaphore, #tpu.memory_space<semaphore_mem>>
      %317 = tpu.memref_squeeze %316 : memref<1x!tpu.dma_semaphore, #tpu.memory_space<semaphore_mem>> -> memref<!tpu.dma_semaphore, #tpu.memory_space<semaphore_mem>>
      tpu.wait_dma2 semaphore(%317 : memref<!tpu.dma_semaphore, #tpu.memory_space<semaphore_mem>>) src(%314 : memref<1x256xf32, #tpu.memory_space<any>>) dst(%315 : memref<1x256xf32, #tpu.memory_space<vmem>>)
      %c21_i32_309 = arith.constant 21 : i32
      %c0_i32_310 = arith.constant 0 : i32
      %318 = tpu.memref_slice %arg3[%159, %c0_i32_310] : memref<2048x256xf32, #tpu.memory_space<any>> -> memref<1x256xf32, #tpu.memory_space<any>>
      %c21_i32_311 = arith.constant 21 : i32
      %c0_i32_312 = arith.constant 0 : i32
      %319 = tpu.memref_slice %arg7[%c21_i32_311, %c0_i32_312] : memref<32x256xf32, #tpu.memory_space<vmem>> -> memref<1x256xf32, #tpu.memory_space<vmem>>
      %320 = tpu.memref_slice %arg9[%c21_i32_309] : memref<32x!tpu.dma_semaphore, #tpu.memory_space<semaphore_mem>> -> memref<1x!tpu.dma_semaphore, #tpu.memory_space<semaphore_mem>>
      %321 = tpu.memref_squeeze %320 : memref<1x!tpu.dma_semaphore, #tpu.memory_space<semaphore_mem>> -> memref<!tpu.dma_semaphore, #tpu.memory_space<semaphore_mem>>
      tpu.wait_dma2 semaphore(%321 : memref<!tpu.dma_semaphore, #tpu.memory_space<semaphore_mem>>) src(%318 : memref<1x256xf32, #tpu.memory_space<any>>) dst(%319 : memref<1x256xf32, #tpu.memory_space<vmem>>)
      %c22_i32_313 = arith.constant 22 : i32
      %c0_i32_314 = arith.constant 0 : i32
      %322 = tpu.memref_slice %arg3[%166, %c0_i32_314] : memref<2048x256xf32, #tpu.memory_space<any>> -> memref<1x256xf32, #tpu.memory_space<any>>
      %c22_i32_315 = arith.constant 22 : i32
      %c0_i32_316 = arith.constant 0 : i32
      %323 = tpu.memref_slice %arg7[%c22_i32_315, %c0_i32_316] : memref<32x256xf32, #tpu.memory_space<vmem>> -> memref<1x256xf32, #tpu.memory_space<vmem>>
      %324 = tpu.memref_slice %arg9[%c22_i32_313] : memref<32x!tpu.dma_semaphore, #tpu.memory_space<semaphore_mem>> -> memref<1x!tpu.dma_semaphore, #tpu.memory_space<semaphore_mem>>
      %325 = tpu.memref_squeeze %324 : memref<1x!tpu.dma_semaphore, #tpu.memory_space<semaphore_mem>> -> memref<!tpu.dma_semaphore, #tpu.memory_space<semaphore_mem>>
      tpu.wait_dma2 semaphore(%325 : memref<!tpu.dma_semaphore, #tpu.memory_space<semaphore_mem>>) src(%322 : memref<1x256xf32, #tpu.memory_space<any>>) dst(%323 : memref<1x256xf32, #tpu.memory_space<vmem>>)
      %c23_i32_317 = arith.constant 23 : i32
      %c0_i32_318 = arith.constant 0 : i32
      %326 = tpu.memref_slice %arg3[%173, %c0_i32_318] : memref<2048x256xf32, #tpu.memory_space<any>> -> memref<1x256xf32, #tpu.memory_space<any>>
      %c23_i32_319 = arith.constant 23 : i32
      %c0_i32_320 = arith.constant 0 : i32
      %327 = tpu.memref_slice %arg7[%c23_i32_319, %c0_i32_320] : memref<32x256xf32, #tpu.memory_space<vmem>> -> memref<1x256xf32, #tpu.memory_space<vmem>>
      %328 = tpu.memref_slice %arg9[%c23_i32_317] : memref<32x!tpu.dma_semaphore, #tpu.memory_space<semaphore_mem>> -> memref<1x!tpu.dma_semaphore, #tpu.memory_space<semaphore_mem>>
      %329 = tpu.memref_squeeze %328 : memref<1x!tpu.dma_semaphore, #tpu.memory_space<semaphore_mem>> -> memref<!tpu.dma_semaphore, #tpu.memory_space<semaphore_mem>>
      tpu.wait_dma2 semaphore(%329 : memref<!tpu.dma_semaphore, #tpu.memory_space<semaphore_mem>>) src(%326 : memref<1x256xf32, #tpu.memory_space<any>>) dst(%327 : memref<1x256xf32, #tpu.memory_space<vmem>>)
      %c24_i32_321 = arith.constant 24 : i32
      %c0_i32_322 = arith.constant 0 : i32
      %330 = tpu.memref_slice %arg3[%180, %c0_i32_322] : memref<2048x256xf32, #tpu.memory_space<any>> -> memref<1x256xf32, #tpu.memory_space<any>>
      %c24_i32_323 = arith.constant 24 : i32
      %c0_i32_324 = arith.constant 0 : i32
      %331 = tpu.memref_slice %arg7[%c24_i32_323, %c0_i32_324] : memref<32x256xf32, #tpu.memory_space<vmem>> -> memref<1x256xf32, #tpu.memory_space<vmem>>
      %332 = tpu.memref_slice %arg9[%c24_i32_321] : memref<32x!tpu.dma_semaphore, #tpu.memory_space<semaphore_mem>> -> memref<1x!tpu.dma_semaphore, #tpu.memory_space<semaphore_mem>>
      %333 = tpu.memref_squeeze %332 : memref<1x!tpu.dma_semaphore, #tpu.memory_space<semaphore_mem>> -> memref<!tpu.dma_semaphore, #tpu.memory_space<semaphore_mem>>
      tpu.wait_dma2 semaphore(%333 : memref<!tpu.dma_semaphore, #tpu.memory_space<semaphore_mem>>) src(%330 : memref<1x256xf32, #tpu.memory_space<any>>) dst(%331 : memref<1x256xf32, #tpu.memory_space<vmem>>)
      %c25_i32_325 = arith.constant 25 : i32
      %c0_i32_326 = arith.constant 0 : i32
      %334 = tpu.memref_slice %arg3[%187, %c0_i32_326] : memref<2048x256xf32, #tpu.memory_space<any>> -> memref<1x256xf32, #tpu.memory_space<any>>
      %c25_i32_327 = arith.constant 25 : i32
      %c0_i32_328 = arith.constant 0 : i32
      %335 = tpu.memref_slice %arg7[%c25_i32_327, %c0_i32_328] : memref<32x256xf32, #tpu.memory_space<vmem>> -> memref<1x256xf32, #tpu.memory_space<vmem>>
      %336 = tpu.memref_slice %arg9[%c25_i32_325] : memref<32x!tpu.dma_semaphore, #tpu.memory_space<semaphore_mem>> -> memref<1x!tpu.dma_semaphore, #tpu.memory_space<semaphore_mem>>
      %337 = tpu.memref_squeeze %336 : memref<1x!tpu.dma_semaphore, #tpu.memory_space<semaphore_mem>> -> memref<!tpu.dma_semaphore, #tpu.memory_space<semaphore_mem>>
      tpu.wait_dma2 semaphore(%337 : memref<!tpu.dma_semaphore, #tpu.memory_space<semaphore_mem>>) src(%334 : memref<1x256xf32, #tpu.memory_space<any>>) dst(%335 : memref<1x256xf32, #tpu.memory_space<vmem>>)
      %c26_i32_329 = arith.constant 26 : i32
      %c0_i32_330 = arith.constant 0 : i32
      %338 = tpu.memref_slice %arg3[%194, %c0_i32_330] : memref<2048x256xf32, #tpu.memory_space<any>> -> memref<1x256xf32, #tpu.memory_space<any>>
      %c26_i32_331 = arith.constant 26 : i32
      %c0_i32_332 = arith.constant 0 : i32
      %339 = tpu.memref_slice %arg7[%c26_i32_331, %c0_i32_332] : memref<32x256xf32, #tpu.memory_space<vmem>> -> memref<1x256xf32, #tpu.memory_space<vmem>>
      %340 = tpu.memref_slice %arg9[%c26_i32_329] : memref<32x!tpu.dma_semaphore, #tpu.memory_space<semaphore_mem>> -> memref<1x!tpu.dma_semaphore, #tpu.memory_space<semaphore_mem>>
      %341 = tpu.memref_squeeze %340 : memref<1x!tpu.dma_semaphore, #tpu.memory_space<semaphore_mem>> -> memref<!tpu.dma_semaphore, #tpu.memory_space<semaphore_mem>>
      tpu.wait_dma2 semaphore(%341 : memref<!tpu.dma_semaphore, #tpu.memory_space<semaphore_mem>>) src(%338 : memref<1x256xf32, #tpu.memory_space<any>>) dst(%339 : memref<1x256xf32, #tpu.memory_space<vmem>>)
      %c27_i32_333 = arith.constant 27 : i32
      %c0_i32_334 = arith.constant 0 : i32
      %342 = tpu.memref_slice %arg3[%201, %c0_i32_334] : memref<2048x256xf32, #tpu.memory_space<any>> -> memref<1x256xf32, #tpu.memory_space<any>>
      %c27_i32_335 = arith.constant 27 : i32
      %c0_i32_336 = arith.constant 0 : i32
      %343 = tpu.memref_slice %arg7[%c27_i32_335, %c0_i32_336] : memref<32x256xf32, #tpu.memory_space<vmem>> -> memref<1x256xf32, #tpu.memory_space<vmem>>
      %344 = tpu.memref_slice %arg9[%c27_i32_333] : memref<32x!tpu.dma_semaphore, #tpu.memory_space<semaphore_mem>> -> memref<1x!tpu.dma_semaphore, #tpu.memory_space<semaphore_mem>>
      %345 = tpu.memref_squeeze %344 : memref<1x!tpu.dma_semaphore, #tpu.memory_space<semaphore_mem>> -> memref<!tpu.dma_semaphore, #tpu.memory_space<semaphore_mem>>
      tpu.wait_dma2 semaphore(%345 : memref<!tpu.dma_semaphore, #tpu.memory_space<semaphore_mem>>) src(%342 : memref<1x256xf32, #tpu.memory_space<any>>) dst(%343 : memref<1x256xf32, #tpu.memory_space<vmem>>)
      %c28_i32_337 = arith.constant 28 : i32
      %c0_i32_338 = arith.constant 0 : i32
      %346 = tpu.memref_slice %arg3[%208, %c0_i32_338] : memref<2048x256xf32, #tpu.memory_space<any>> -> memref<1x256xf32, #tpu.memory_space<any>>
      %c28_i32_339 = arith.constant 28 : i32
      %c0_i32_340 = arith.constant 0 : i32
      %347 = tpu.memref_slice %arg7[%c28_i32_339, %c0_i32_340] : memref<32x256xf32, #tpu.memory_space<vmem>> -> memref<1x256xf32, #tpu.memory_space<vmem>>
      %348 = tpu.memref_slice %arg9[%c28_i32_337] : memref<32x!tpu.dma_semaphore, #tpu.memory_space<semaphore_mem>> -> memref<1x!tpu.dma_semaphore, #tpu.memory_space<semaphore_mem>>
      %349 = tpu.memref_squeeze %348 : memref<1x!tpu.dma_semaphore, #tpu.memory_space<semaphore_mem>> -> memref<!tpu.dma_semaphore, #tpu.memory_space<semaphore_mem>>
      tpu.wait_dma2 semaphore(%349 : memref<!tpu.dma_semaphore, #tpu.memory_space<semaphore_mem>>) src(%346 : memref<1x256xf32, #tpu.memory_space<any>>) dst(%347 : memref<1x256xf32, #tpu.memory_space<vmem>>)
      %c29_i32_341 = arith.constant 29 : i32
      %c0_i32_342 = arith.constant 0 : i32
      %350 = tpu.memref_slice %arg3[%215, %c0_i32_342] : memref<2048x256xf32, #tpu.memory_space<any>> -> memref<1x256xf32, #tpu.memory_space<any>>
      %c29_i32_343 = arith.constant 29 : i32
      %c0_i32_344 = arith.constant 0 : i32
      %351 = tpu.memref_slice %arg7[%c29_i32_343, %c0_i32_344] : memref<32x256xf32, #tpu.memory_space<vmem>> -> memref<1x256xf32, #tpu.memory_space<vmem>>
      %352 = tpu.memref_slice %arg9[%c29_i32_341] : memref<32x!tpu.dma_semaphore, #tpu.memory_space<semaphore_mem>> -> memref<1x!tpu.dma_semaphore, #tpu.memory_space<semaphore_mem>>
      %353 = tpu.memref_squeeze %352 : memref<1x!tpu.dma_semaphore, #tpu.memory_space<semaphore_mem>> -> memref<!tpu.dma_semaphore, #tpu.memory_space<semaphore_mem>>
      tpu.wait_dma2 semaphore(%353 : memref<!tpu.dma_semaphore, #tpu.memory_space<semaphore_mem>>) src(%350 : memref<1x256xf32, #tpu.memory_space<any>>) dst(%351 : memref<1x256xf32, #tpu.memory_space<vmem>>)
      %c30_i32_345 = arith.constant 30 : i32
      %c0_i32_346 = arith.constant 0 : i32
      %354 = tpu.memref_slice %arg3[%222, %c0_i32_346] : memref<2048x256xf32, #tpu.memory_space<any>> -> memref<1x256xf32, #tpu.memory_space<any>>
      %c30_i32_347 = arith.constant 30 : i32
      %c0_i32_348 = arith.constant 0 : i32
      %355 = tpu.memref_slice %arg7[%c30_i32_347, %c0_i32_348] : memref<32x256xf32, #tpu.memory_space<vmem>> -> memref<1x256xf32, #tpu.memory_space<vmem>>
      %356 = tpu.memref_slice %arg9[%c30_i32_345] : memref<32x!tpu.dma_semaphore, #tpu.memory_space<semaphore_mem>> -> memref<1x!tpu.dma_semaphore, #tpu.memory_space<semaphore_mem>>
      %357 = tpu.memref_squeeze %356 : memref<1x!tpu.dma_semaphore, #tpu.memory_space<semaphore_mem>> -> memref<!tpu.dma_semaphore, #tpu.memory_space<semaphore_mem>>
      tpu.wait_dma2 semaphore(%357 : memref<!tpu.dma_semaphore, #tpu.memory_space<semaphore_mem>>) src(%354 : memref<1x256xf32, #tpu.memory_space<any>>) dst(%355 : memref<1x256xf32, #tpu.memory_space<vmem>>)
      %c31_i32_349 = arith.constant 31 : i32
      %c0_i32_350 = arith.constant 0 : i32
      %358 = tpu.memref_slice %arg3[%229, %c0_i32_350] : memref<2048x256xf32, #tpu.memory_space<any>> -> memref<1x256xf32, #tpu.memory_space<any>>
      %c31_i32_351 = arith.constant 31 : i32
      %c0_i32_352 = arith.constant 0 : i32
      %359 = tpu.memref_slice %arg7[%c31_i32_351, %c0_i32_352] : memref<32x256xf32, #tpu.memory_space<vmem>> -> memref<1x256xf32, #tpu.memory_space<vmem>>
      %360 = tpu.memref_slice %arg9[%c31_i32_349] : memref<32x!tpu.dma_semaphore, #tpu.memory_space<semaphore_mem>> -> memref<1x!tpu.dma_semaphore, #tpu.memory_space<semaphore_mem>>
      %361 = tpu.memref_squeeze %360 : memref<1x!tpu.dma_semaphore, #tpu.memory_space<semaphore_mem>> -> memref<!tpu.dma_semaphore, #tpu.memory_space<semaphore_mem>>
      tpu.wait_dma2 semaphore(%361 : memref<!tpu.dma_semaphore, #tpu.memory_space<semaphore_mem>>) src(%358 : memref<1x256xf32, #tpu.memory_space<any>>) dst(%359 : memref<1x256xf32, #tpu.memory_space<vmem>>)
      %c0_353 = arith.constant 0 : index
      %c0_354 = arith.constant 0 : index
      %362 = vector.load %arg7[%c0_353, %c0_354] : memref<32x256xf32, #tpu.memory_space<vmem>>, vector<8x256xf32>
      %c8 = arith.constant 8 : index
      %c0_355 = arith.constant 0 : index
      %363 = vector.load %arg7[%c8, %c0_355] : memref<32x256xf32, #tpu.memory_space<vmem>>, vector<8x256xf32>
      %c16 = arith.constant 16 : index
      %c0_356 = arith.constant 0 : index
      %364 = vector.load %arg7[%c16, %c0_356] : memref<32x256xf32, #tpu.memory_space<vmem>>, vector<8x256xf32>
      %c24 = arith.constant 24 : index
      %c0_357 = arith.constant 0 : index
      %365 = vector.load %arg7[%c24, %c0_357] : memref<32x256xf32, #tpu.memory_space<vmem>>, vector<8x256xf32>
      %366 = arith.addf %362, %363 : vector<8x256xf32>
      %367 = arith.addf %364, %365 : vector<8x256xf32>
      %368 = arith.addf %366, %367 : vector<8x256xf32>
      %cst_358 = arith.constant 2.500000e-01 : f32
      %369 = vector.broadcast %cst_358 : f32 to vector<8x256xf32>
      %370 = arith.mulf %368, %369 : vector<8x256xf32>
      %371 = arith.truncf %370 : vector<8x256xf32> to vector<8x256xbf16>
      %c0_359 = arith.constant 0 : index
      %c0_360 = arith.constant 0 : index
      %372 = vector.load %arg8[%c0_359, %c0_360] : memref<8x256xbf16, #tpu.memory_space<vmem>>, vector<8x256xbf16>
      tpu.vector_store %arg8[%c0_359, %c0_360], %371 {strides = array<i32>} : memref<8x256xbf16, #tpu.memory_space<vmem>>, vector<8x256xbf16>,
    } else {
    }
    %c0 = arith.constant 0 : index
    %c0_1 = arith.constant 0 : index
    %3 = vector.load %arg8[%c0, %c0_1] : memref<8x256xbf16, #tpu.memory_space<vmem>>, vector<8x256xbf16>
    %c0_2 = arith.constant 0 : index
    %c0_3 = arith.constant 0 : index
    %4 = vector.load %arg4[%c0_2, %c0_3] : memref<256x1024xbf16, #tpu.memory_space<vmem>>, vector<256x1024xbf16>
    %cst = arith.constant dense<0.000000e+00> : vector<8x1024xf32>
    %5 = tpu.matmul %3, %4, %cst {dimension_numbers = #tpu.dot_dimension_numbers<[1], [0], [0], [1], [0, 0, 1, 1], [], []>} : vector<8x256xbf16>, vector<256x1024xbf16>, vector<8x1024xf32> -> vector<8x1024xf32>
    %c0_4 = arith.constant 0 : index
    %c0_5 = arith.constant 0 : index
    %6 = vector.load %arg5[%c0_4, %c0_5] : memref<1x1024xf32, #tpu.memory_space<vmem>>, vector<1x1024xf32>
    %7 = vector.broadcast %6 : vector<1x1024xf32> to vector<8x1024xf32>
    %8 = arith.addf %5, %7 : vector<8x1024xf32>
    %c0_6 = arith.constant 0 : index
    %c0_7 = arith.constant 0 : index
    %9 = vector.load %arg6[%c0_6, %c0_7] : memref<8x1024xf32, #tpu.memory_space<vmem>>, vector<8x1024xf32>
    tpu.vector_store %arg6[%c0_6, %c0_7], %8 {strides = array<i32>} : memref<8x1024xf32, #tpu.memory_space<vmem>>, vector<8x1024xf32>,
    return
  }
  func.func @transform_1(%arg0: i32, %arg1: i32, %arg2: memref<8x4xi32, #tpu.memory_space<smem>>) -> (i32, i32) {
    %c1_i32 = arith.constant 1 : i32
    %0 = arith.muli %arg0, %c1_i32 : i32
    %1 = arith.addi %0, %arg1 : i32
    %c0_i32 = arith.constant 0 : i32
    %c0_i32_0 = arith.constant 0 : i32
    return %c0_i32, %1 : i32, i32
  }
  func.func @transform_2(%arg0: i32, %arg1: i32, %arg2: memref<8x4xi32, #tpu.memory_space<smem>>) -> (i32, i32) {
    %c1_i32 = arith.constant 1 : i32
    %0 = arith.muli %arg0, %c1_i32 : i32
    %1 = arith.addi %0, %arg1 : i32
    %c0_i32 = arith.constant 0 : i32
    %c0_i32_0 = arith.constant 0 : i32
    return %c0_i32, %1 : i32, i32
  }
  func.func @transform_3(%arg0: i32, %arg1: i32, %arg2: memref<8x4xi32, #tpu.memory_space<smem>>) -> (i32, i32) {
    %c1_i32 = arith.constant 1 : i32
    %0 = arith.muli %arg0, %c1_i32 : i32
    %1 = arith.addi %0, %arg1 : i32
    %c0_i32 = arith.constant 0 : i32
    %c0_i32_0 = arith.constant 0 : i32
    return %c0_i32, %1 : i32, i32
  }
}

</mosaic_0001>

<llo_original>
// kernel: tpu_custom_call.1
$region0: #{tpu_custom_call.1}
  #allocation0 [shape = 'u32[]', space=smem, size = 0x4, offset = 0x4, fixed_abs, tag = 'smem constant byte address 0x4 - core index']
  #allocation1 [shape = 'u32[72,128]{1,0:T(1,128)}', space=vmem, size = 0x9000, scoped, tag = 'internal scratch']
  #allocation2 [shape = 'f32[32,256]{1,0:T(8,128)}', space=vmem, size = 0x8000, scoped, tag = 'scratch operand']
  #allocation3 [shape = 'bf16[8,256]{1,0:T(8,128)(2,1)}', space=vmem, size = 0x1000, scoped, tag = 'scratch operand']
  #allocation4 [shape = 's32[32]{0}', space=sflag, size = 0x80, scoped, tag = 'scratch operand']
  #allocation5 [shape = 's32[1]{0}', space=sflag, size = 0x4, scoped, tag = 'scoped memory for tpu_custom_call.1']
  #allocation6 [shape = 'u8[4096]{0}', space=smem, size = 0x1000, scoped, tag = 'prefetched SMEM operand 0']
  #allocation13 [shape = 's32[]', space=sflag, size = 0x4, offset = 0, fixed_abs, tag = 'sflag constant byte address 0x0 - dummy sync flag']
  #allocation14 [shape = 's32[]', space=sflag, size = 0x4, offset = 0, fixed_abs, tag = 'sflag constant byte address 0x0 - dummy sync flag']
  #allocation15 [shape = 's32[]', space=sflag, size = 0x4, offset = 0, fixed_abs, tag = 'sflag constant byte address 0x0 - dummy sync flag']
  #allocation16 [shape = 's32[]', space=sflag, size = 0x4, offset = 0, fixed_abs, tag = 'sflag constant byte address 0x0 - dummy sync flag']
  #allocation17 [shape = 's32[]', space=sflag, size = 0x4, offset = 0, fixed_abs, tag = 'sflag constant byte address 0x0 - dummy sync flag']
  #allocation18 [shape = 's32[]', space=sflag, size = 0x4, offset = 0, fixed_abs, tag = 'sflag constant byte address 0x0 - dummy sync flag']
  #allocation19 [shape = 's32[]', space=sflag, size = 0x4, offset = 0, fixed_abs, tag = 'sflag constant byte address 0x0 - dummy sync flag']
  #allocation20 [shape = 's32[]', space=sflag, size = 0x4, offset = 0, fixed_abs, tag = 'sflag constant byte address 0x0 - dummy sync flag']
  #allocation21 [shape = 's32[]', space=sflag, size = 0x4, offset = 0, fixed_abs, tag = 'sflag constant byte address 0x0 - dummy sync flag']
  #allocation22 [shape = 's32[]', space=sflag, size = 0x4, offset = 0, fixed_abs, tag = 'sflag constant byte address 0x0 - dummy sync flag']
  #allocation23 [shape = 's32[]', space=sflag, size = 0x4, offset = 0, fixed_abs, tag = 'sflag constant byte address 0x0 - dummy sync flag']
  #allocation24 [shape = 's32[]', space=sflag, size = 0x4, offset = 0, fixed_abs, tag = 'sflag constant byte address 0x0 - dummy sync flag']
  #allocation25 [shape = 's32[]', space=sflag, size = 0x4, offset = 0, fixed_abs, tag = 'sflag constant byte address 0x0 - dummy sync flag']
  #allocation26 [shape = 's32[]', space=sflag, size = 0x4, offset = 0, fixed_abs, tag = 'sflag constant byte address 0x0 - dummy sync flag']
  #allocation27 [shape = 's32[]', space=sflag, size = 0x4, offset = 0, fixed_abs, tag = 'sflag constant byte address 0x0 - dummy sync flag']
  #allocation28 [shape = 's32[]', space=sflag, size = 0x4, offset = 0, fixed_abs, tag = 'sflag constant byte address 0x0 - dummy sync flag']
  #allocation29 [shape = 's32[]', space=sflag, size = 0x4, offset = 0, fixed_abs, tag = 'sflag constant byte address 0x0 - dummy sync flag']
  #allocation30 [shape = 's32[]', space=sflag, size = 0x4, offset = 0, fixed_abs, tag = 'sflag constant byte address 0x0 - dummy sync flag']
  #allocation31 [shape = 's32[]', space=sflag, size = 0x4, offset = 0, fixed_abs, tag = 'sflag constant byte address 0x0 - dummy sync flag']
  #allocation32 [shape = 's32[]', space=sflag, size = 0x4, offset = 0, fixed_abs, tag = 'sflag constant byte address 0x0 - dummy sync flag']
  #allocation33 [shape = 's32[]', space=sflag, size = 0x4, offset = 0, fixed_abs, tag = 'sflag constant byte address 0x0 - dummy sync flag']
  #allocation34 [shape = 's32[]', space=sflag, size = 0x4, offset = 0, fixed_abs, tag = 'sflag constant byte address 0x0 - dummy sync flag']
  #allocation35 [shape = 's32[]', space=sflag, size = 0x4, offset = 0, fixed_abs, tag = 'sflag constant byte address 0x0 - dummy sync flag']
  #allocation36 [shape = 's32[]', space=sflag, size = 0x4, offset = 0, fixed_abs, tag = 'sflag constant byte address 0x0 - dummy sync flag']
  #allocation37 [shape = 's32[]', space=sflag, size = 0x4, offset = 0, fixed_abs, tag = 'sflag constant byte address 0x0 - dummy sync flag']
  #allocation38 [shape = 's32[]', space=sflag, size = 0x4, offset = 0, fixed_abs, tag = 'sflag constant byte address 0x0 - dummy sync flag']
  #allocation39 [shape = 's32[]', space=sflag, size = 0x4, offset = 0, fixed_abs, tag = 'sflag constant byte address 0x0 - dummy sync flag']
  #allocation40 [shape = 's32[]', space=sflag, size = 0x4, offset = 0, fixed_abs, tag = 'sflag constant byte address 0x0 - dummy sync flag']
  #allocation41 [shape = 's32[]', space=sflag, size = 0x4, offset = 0, fixed_abs, tag = 'sflag constant byte address 0x0 - dummy sync flag']
  #allocation42 [shape = 's32[]', space=sflag, size = 0x4, offset = 0, fixed_abs, tag = 'sflag constant byte address 0x0 - dummy sync flag']
  #allocation43 [shape = 's32[]', space=sflag, size = 0x4, offset = 0, fixed_abs, tag = 'sflag constant byte address 0x0 - dummy sync flag']
  #allocation44 [shape = 's32[]', space=sflag, size = 0x4, offset = 0, fixed_abs, tag = 'sflag constant byte address 0x0 - dummy sync flag']
  %s0 = inlined_call_operand.vmem [shape: s32[8,4], index: 0, kind: input, shape index: {}]
  %s1 = inlined_call_operand.hbm [shape: f32[2048,256], index: 1, kind: input, shape index: {}]
  %s2 = inlined_call_operand.hbm [shape: bf16[256,2048], index: 2, kind: input, shape index: {}]
  %s3 = inlined_call_operand.hbm [shape: f32[1,2048], index: 3, kind: input, shape index: {}]
  %s4 = inlined_call_operand.hbm [shape: f32[8,2048], index: 4, kind: output, shape index: {}]
  %s5 = sld [smem:[#allocation0]]
  $region53: #{tpu_custom_call.1} parent=0
    _
  %s7 = ssub.s32 1, %s5
  %s8 = scalar_select 0, %s7, %s5
  %s10 = sshll.u32 %s0, 4
  %s11 = int_to_ptr.vmem [resolvable:$true] %s10
  %13 = dma.vmem_to_smem %s11, 128, [#allocation6], [#allocation5]
  %15 = dma.done [#allocation5], 128
  %16 = sfence
  $region1: #{tpu_custom_call.1} parent=0
    #allocation7 [shape = 'u8[1048576]{0}', space=vmem, size = 0x100000, scoped, tag = 'input window, operand 2']
    #allocation8 [shape = 's32[2]{0}', space=sflag, size = 0x8, scoped, tag = 'scoped memory for tpu_custom_call.1']
    #allocation9 [shape = 's32[2]{0}', space=sflag, size = 0x8, scoped, tag = 'scoped memory for tpu_custom_call.1']
    #allocation10 [shape = 'u8[8192]{0}', space=vmem, size = 0x2000, scoped, tag = 'input window, operand 3']
    #allocation11 [shape = 's32[2]{0}', space=sflag, size = 0x8, scoped, tag = 'scoped memory for tpu_custom_call.1']
    #allocation12 [shape = 'u8[65536]{0}', space=vmem, size = 0x10000, scoped, tag = 'output window, operand 0']
    %17 = vsyncpa [#allocation8], 0
    %s18 = scalar_lea.sflag [#allocation8], 1
    %19 = vsyncpa %s18, 0
    %20 = vsyncpa [#allocation11], 0
    %s21 = scalar_lea.sflag [#allocation11], 1
    %22 = vsyncpa %s21, 0
    %23 = vsyncpa [#allocation9], 0
    %s24 = scalar_lea.sflag [#allocation9], 1
    %25 = vsyncpa %s24, 0
    loop: start=0, step=1, limit=4
    $region2: #{tpu_custom_call.1} parent=1 // loop_pre_header
      _
    $region3: #{tpu_custom_call.1} parent=1 // loop_header
      %s27 = sphi 0, %s31
      %p28 = scmp.ge.s32.totalorder %s27, 4
      %s34 = sphi 0, %s46
      %s35 = sphi 0, %s42
      %s36 = sphi 0, %s34
      %s37 = sphi 0, %s35
      %s38 = sphi 0, %s36
      %s39 = sphi 0, %s37
      %s51 = sphi 0, %s53
      %s54 = sphi 0, %s51
      %s55 = sphi 0, %s54
      %s71 = sphi 0, %s55
      %s79 = sphi 0, %s81
      %s82 = sphi 0, %s79
      %s83 = sphi 0, %s82
      %s99 = sphi 0, %s83
      %s107 = sphi 0, %s109
      %s110 = sphi 0, %s107
      %s111 = sphi 0, %s110
      %s127 = sphi 0, %s111
    $region4: #{tpu_custom_call.1} parent=1 // loop_header_branch
      %30 = sbr.rel (%p28) target = $region8
    $region5: #{tpu_custom_call.1} parent=1 // loop_body
      %s32 = ssub.s32 %s27, 1
      %s33 = ssub.s32 %s27, 2
      %s40 = sadd.s32 1, %s35
      %p41 = scmp.ge.s32.totalorder %s40, 1
      %s42 = scalar_select %p41, 0, %s40
      %s43 = sadd.s32 1, %s34
      %s44 = scalar_select %p41, %s43, %s34
      %p45 = scmp.ge.s32.totalorder %s44, 2
      %s46 = scalar_select %p45, 0, %s44
      %s47 = sadd.s32 %s34, %s35
      %s48 = sadd.s32 %s46, %s42
      %s49 = ssub.s32 %s47, %s48
      %p50 = scmp.eq.s32.totalorder %s49, 0
      %s52 = sadd.s32 %s51, 1
      %s53 = scalar_select %p50, %s51, %s52
      %p56 = pneg %p50
      %p57 = scmp.eq.s32.totalorder %s27, 1
      %p58 = por %p56, %p57
      %p59 = scmp.ne.s32.totalorder %s51, %s54
      %p60 = scmp.eq.s32.totalorder %s27, 0
      %p61 = por %p59, %p60
      %p62 = scmp.ne.s32.totalorder %s51, %s54
      %p63 = scmp.eq.s32.totalorder %s32, 1
      %p64 = por %p62, %p63
      %p65 = scmp.ne.s32.totalorder %s54, %s55
      %p66 = scmp.eq.s32.totalorder %s32, 0
      %p67 = por %p65, %p66
      %p68 = scmp.ne.s32.totalorder %s54, %s55
      %p69 = scmp.eq.s32.totalorder %s33, 1
      %p70 = por %p68, %p69
      %p72 = scmp.ne.s32.totalorder %s55, %s71
      %p73 = scmp.eq.s32.totalorder %s33, 0
      %p74 = por %p72, %p73
      %s75 = sadd.s32 %s34, %s35
      %s76 = sadd.s32 %s46, %s42
      %s77 = ssub.s32 %s75, %s76
      %p78 = scmp.eq.s32.totalorder %s77, 0
      %s80 = sadd.s32 %s79, 1
      %s81 = scalar_select %p78, %s79, %s80
      %p84 = pneg %p78
      %p85 = scmp.eq.s32.totalorder %s27, 1
      %p86 = por %p84, %p85
      %p87 = scmp.ne.s32.totalorder %s79, %s82
      %p88 = scmp.eq.s32.totalorder %s27, 0
      %p89 = por %p87, %p88
      %p90 = scmp.ne.s32.totalorder %s79, %s82
      %p91 = scmp.eq.s32.totalorder %s32, 1
      %p92 = por %p90, %p91
      %p93 = scmp.ne.s32.totalorder %s82, %s83
      %p94 = scmp.eq.s32.totalorder %s32, 0
      %p95 = por %p93, %p94
      %p96 = scmp.ne.s32.totalorder %s82, %s83
      %p97 = scmp.eq.s32.totalorder %s33, 1
      %p98 = por %p96, %p97
      %p100 = scmp.ne.s32.totalorder %s83, %s99
      %p101 = scmp.eq.s32.totalorder %s33, 0
      %p102 = por %p100, %p101
      %s103 = sadd.s32 %s34, %s35
      %s104 = sadd.s32 %s46, %s42
      %s105 = ssub.s32 %s103, %s104
      %p106 = scmp.eq.s32.totalorder %s105, 0
      %s108 = sadd.s32 %s107, 1
      %s109 = scalar_select %p106, %s107, %s108
      %p112 = pneg %p106
      %p113 = scmp.eq.s32.totalorder %s27, 1
      %p114 = por %p112, %p113
      %p115 = scmp.ne.s32.totalorder %s107, %s110
      %p116 = scmp.eq.s32.totalorder %s27, 0
      %p117 = por %p115, %p116
      %p118 = scmp.ne.s32.totalorder %s107, %s110
      %p119 = scmp.eq.s32.totalorder %s32, 1
      %p120 = por %p118, %p119
      %p121 = scmp.ne.s32.totalorder %s110, %s111
      %p122 = scmp.eq.s32.totalorder %s32, 0
      %p123 = por %p121, %p122
      %p124 = scmp.ne.s32.totalorder %s110, %s111
      %p125 = scmp.eq.s32.totalorder %s33, 1
      %p126 = por %p124, %p125
      %p128 = scmp.ne.s32.totalorder %s111, %s127
      %p129 = scmp.eq.s32.totalorder %s33, 0
      %p130 = por %p128, %p129
      %p131 = scmp.le.s32.totalorder 1, %s27
      %p132 = scmp.lt.s32.totalorder %s27, 3
      %p133 = pnand %p131, %p132
      %p134 = pneg %p133
      // Predicated region
      $region9: #{tpu_custom_call.1} parent=5 // pred_check
        _
      $region10: #{tpu_custom_call.1} parent=5 // pred_check_branch
        %136 = sbr.rel (%p133) target = $region12
      $region11: #{tpu_custom_call.1} parent=5 // pred_region
        %s137 = ssub.s32 %s27, 1
      $region12: #{tpu_custom_call.1} parent=5 // pred_fallthru
        _
      %p138 = scmp.lt.s32.totalorder %s27, 2
      // Predicated region
      $region13: #{tpu_custom_call.1} parent=5 // pred_check
        %p139 = pneg %p138
      $region14: #{tpu_custom_call.1} parent=5 // pred_check_branch
        %141 = sbr.rel (%p139) target = $region16
      $region15: #{tpu_custom_call.1} parent=5 // pred_region
        // Predicated region
        $region17: #{tpu_custom_call.1} parent=15 // pred_check
          %p142 = pneg %p61
        $region18: #{tpu_custom_call.1} parent=15 // pred_check_branch
          %144 = sbr.rel (%p142) target = $region20
        $region19: #{tpu_custom_call.1} parent=15 // pred_region
          %s145 = sand.u32 %s51, 1
          %s146 = scalar_lea.sflag [#allocation8], %s145
          %s147 = sand.u32 %s51, 1
          %s148 = smul.addr %s147, 1024
          %s149 = scalar_lea.vmem [#allocation7], %s148
          %s150 = sadd.s32 %s34, %s35
          %s151 = smul.u32 8, %s150
          %153 = vsyncadd %s146, 0
          %s154 = smul.addr %s151, 4
          %s155 = scalar_lea.hbm %s2, %s154
          %s156 = sshll.u32 %s155, 4
          %s157 = int_to_ptr.hbm [resolvable:$true] %s156
          %s158 = sshll.u32 %s149, 4
          %s159 = int_to_ptr.vmem [resolvable:$true] %s158
          %164 = dma.hbm_to_vmem [thread:$0]  %s157, 16384, %s159, %s146, 1024, 512, 32
        $region20: #{tpu_custom_call.1} parent=15 // pred_fallthru
          _
        // Predicated region
        $region21: #{tpu_custom_call.1} parent=15 // pred_check
          %p165 = pneg %p89
        $region22: #{tpu_custom_call.1} parent=15 // pred_check_branch
          %167 = sbr.rel (%p165) target = $region24
        $region23: #{tpu_custom_call.1} parent=15 // pred_region
          %s168 = sand.u32 %s79, 1
          %s169 = scalar_lea.sflag [#allocation11], %s168
          %s170 = sand.u32 %s79, 1
          %s171 = smul.addr %s170, 8
          %s172 = scalar_lea.vmem [#allocation10], %s171
          %s173 = sadd.s32 %s34, %s35
          %s174 = smul.u32 8, %s173
          %176 = vsyncadd %s169, 0
          %s177 = scalar_lea.hbm %s3, %s174
          %s179 = sshll.u32 %s177, 4
          %s180 = int_to_ptr.hbm [resolvable:$true] %s179
          %s181 = sshll.u32 %s172, 4
          %s182 = int_to_ptr.vmem [resolvable:$true] %s181
          %184 = dma.hbm_to_vmem [thread:$0]  %s180, 128, %s182, %s169
        $region24: #{tpu_custom_call.1} parent=15 // pred_fallthru
          _
      $region16: #{tpu_custom_call.1} parent=5 // pred_fallthru
        _
      %p185 = scmp.le.s32.totalorder 1, %s27
      %p186 = scmp.lt.s32.totalorder %s27, 3
      %p187 = pnand %p185, %p186
      %p188 = pneg %p187
      // Predicated region
      $region25: #{tpu_custom_call.1} parent=5 // pred_check
        _
      $region26: #{tpu_custom_call.1} parent=5 // pred_check_branch
        %190 = sbr.rel (%p187) target = $region28
      $region27: #{tpu_custom_call.1} parent=5 // pred_region
        %s191 = ssub.s32 %s27, 1
        %s192 = sand.u32 %s54, 1
        %s193 = scalar_lea.sflag [#allocation8], %s192
        %s194 = sand.u32 %s54, 1
        %s195 = smul.addr %s194, 1024
        %s196 = scalar_lea.vmem [#allocation7], %s195
        // Predicated region
        $region29: #{tpu_custom_call.1} parent=27 // pred_check
          %p197 = pneg %p67
        $region30: #{tpu_custom_call.1} parent=27 // pred_check_branch
          %199 = sbr.rel (%p197) target = $region32
        $region31: #{tpu_custom_call.1} parent=27 // pred_region
          %201 = dma.done %s193, 16384
        $region32: #{tpu_custom_call.1} parent=27 // pred_fallthru
          _
        %s202 = sand.u32 %s82, 1
        %s203 = scalar_lea.sflag [#allocation11], %s202
        %s204 = sand.u32 %s82, 1
        %s205 = smul.addr %s204, 8
        %s206 = scalar_lea.vmem [#allocation10], %s205
        // Predicated region
        $region33: #{tpu_custom_call.1} parent=27 // pred_check
          %p207 = pneg %p95
        $region34: #{tpu_custom_call.1} parent=27 // pred_check_branch
          %209 = sbr.rel (%p207) target = $region36
        $region35: #{tpu_custom_call.1} parent=27 // pred_region
          %211 = dma.done %s203, 128
        $region36: #{tpu_custom_call.1} parent=27 // pred_fallthru
          _
        %s212 = sand.u32 %s54, 1
        %s213 = scalar_lea.sflag [#allocation8], %s212
        %s214 = sand.u32 %s54, 1
        %s215 = smul.addr %s214, 1024
        %s216 = scalar_lea.vmem [#allocation7], %s215
        %p217 = pneg %p67
        %p218 = pneg %p64
        %s219 = sand.u32 %s82, 1
        %s220 = scalar_lea.sflag [#allocation11], %s219
        %s221 = sand.u32 %s82, 1
        %s222 = smul.addr %s221, 8
        %s223 = scalar_lea.vmem [#allocation10], %s222
        %p224 = pneg %p95
        %p225 = pneg %p92
        %p226 = pneg %p123
        %p227 = pneg %p120
        %s228 = sand.u32 %s110, 1
        %s229 = scalar_lea.sflag [#allocation9], %s228
        %s230 = sand.u32 %s110, 1
        %s231 = smul.addr %s230, 64
        %s232 = scalar_lea.vmem [#allocation12], %s231
        %s233 = sadd.s32 %s36, %s37
        %s234 = smul.u32 8, %s233
        %s235 = sadd.s32 %s36, %s37
        %s236 = smul.u32 8, %s235
        %s237 = sadd.s32 %s36, %s37
        %s238 = smul.u32 8, %s237
        %p239 = scmp.eq.s32.totalorder %s37, 0
        // Predicated region
        $region37: #{tpu_custom_call.1} parent=27 // pred_check
          %p240 = pneg %p239
        $region38: #{tpu_custom_call.1} parent=27 // pred_check_branch
          %242 = sbr.rel (%p240) target = $region40
        $region39: #{tpu_custom_call.1} parent=27 // pred_region
          %s243 = sld [smem:[#allocation6]]
          %p244 = scmp.gt.s32.totalorder %s243, 0
          %s245 = scalar_select %p244, %s243, 0
          %p246 = scmp.lt.s32.totalorder %s245, 2047
          %s247 = scalar_select %p246, %s245, 2047
          %s248 = sshrl.u32 %s247, 3
          %s249 = sand.u32 %s247, 7
          %s250 = smul.u32 %s248, 16
          %s251 = sadd.s32 %s249, %s250
          %s252 = scalar_lea.hbm %s1, %s251
          %s253 = sshll.u32 %s252, 4
          %s254 = int_to_ptr.hbm [resolvable:$true] %s253
          %s255 = sshll.u32 [#allocation2], 4
          %s256 = int_to_ptr.vmem [resolvable:$true] %s255
          %260 = dma.hbm_to_vmem [thread:$0]  %s254, 32, %s256, [#allocation4], 128, 128, 1
          %s261 = sld [smem:[#allocation6 + $0x80]]
          %p262 = scmp.gt.s32.totalorder %s261, 0
          %s263 = scalar_select %p262, %s261, 0
          %p264 = scmp.lt.s32.totalorder %s263, 2047
          %s265 = scalar_select %p264, %s263, 2047
          %s266 = sshrl.u32 %s265, 3
          %s267 = sand.u32 %s265, 7
          %s268 = smul.u32 %s266, 16
          %s269 = sadd.s32 %s267, %s268
          %s270 = scalar_lea.hbm %s1, %s269
          %s271 = scalar_lea.vmem [#allocation2], 1
          %s272 = scalar_lea.sflag [#allocation4], 1
          %s273 = sshll.u32 %s270, 4
          %s274 = int_to_ptr.hbm [resolvable:$true] %s273
          %s275 = sshll.u32 %s271, 4
          %s276 = int_to_ptr.vmem [resolvable:$true] %s275
          %280 = dma.hbm_to_vmem [thread:$0]  %s274, 32, %s276, %s272, 128, 128, 1
          %s281 = sld [smem:[#allocation6 + $0x100]]
          %p282 = scmp.gt.s32.totalorder %s281, 0
          %s283 = scalar_select %p282, %s281, 0
          %p284 = scmp.lt.s32.totalorder %s283, 2047
          %s285 = scalar_select %p284, %s283, 2047
          %s286 = sshrl.u32 %s285, 3
          %s287 = sand.u32 %s285, 7
          %s288 = smul.u32 %s286, 16
          %s289 = sadd.s32 %s287, %s288
          %s290 = scalar_lea.hbm %s1, %s289
          %s291 = scalar_lea.vmem [#allocation2], 2
          %s292 = scalar_lea.sflag [#allocation4], 2
          %s293 = sshll.u32 %s290, 4
          %s294 = int_to_ptr.hbm [resolvable:$true] %s293
          %s295 = sshll.u32 %s291, 4
          %s296 = int_to_ptr.vmem [resolvable:$true] %s295
          %300 = dma.hbm_to_vmem [thread:$0]  %s294, 32, %s296, %s292, 128, 128, 1
          %s301 = sld [smem:[#allocation6 + $0x180]]
          %p302 = scmp.gt.s32.totalorder %s301, 0
          %s303 = scalar_select %p302, %s301, 0
          %p304 = scmp.lt.s32.totalorder %s303, 2047
          %s305 = scalar_select %p304, %s303, 2047
          %s306 = sshrl.u32 %s305, 3
          %s307 = sand.u32 %s305, 7
          %s308 = smul.u32 %s306, 16
          %s309 = sadd.s32 %s307, %s308
          %s310 = scalar_lea.hbm %s1, %s309
          %s311 = scalar_lea.vmem [#allocation2], 3
          %s312 = scalar_lea.sflag [#allocation4], 3
          %s313 = sshll.u32 %s310, 4
          %s314 = int_to_ptr.hbm [resolvable:$true] %s313
          %s315 = sshll.u32 %s311, 4
          %s316 = int_to_ptr.vmem [resolvable:$true] %s315
          %320 = dma.hbm_to_vmem [thread:$0]  %s314, 32, %s316, %s312, 128, 128, 1
          %s321 = sld [smem:[#allocation6 + $0x200]]
          %p322 = scmp.gt.s32.totalorder %s321, 0
          %s323 = scalar_select %p322, %s321, 0
          %p324 = scmp.lt.s32.totalorder %s323, 2047
          %s325 = scalar_select %p324, %s323, 2047
          %s326 = sshrl.u32 %s325, 3
          %s327 = sand.u32 %s325, 7
          %s328 = smul.u32 %s326, 16
          %s329 = sadd.s32 %s327, %s328
          %s330 = scalar_lea.hbm %s1, %s329
          %s331 = scalar_lea.vmem [#allocation2], 4
          %s332 = scalar_lea.sflag [#allocation4], 4
          %s333 = sshll.u32 %s330, 4
          %s334 = int_to_ptr.hbm [resolvable:$true] %s333
          %s335 = sshll.u32 %s331, 4
          %s336 = int_to_ptr.vmem [resolvable:$true] %s335
          %340 = dma.hbm_to_vmem [thread:$0]  %s334, 32, %s336, %s332, 128, 128, 1
          %s341 = sld [smem:[#allocation6 + $0x280]]
          %p342 = scmp.gt.s32.totalorder %s341, 0
          %s343 = scalar_select %p342, %s341, 0
          %p344 = scmp.lt.s32.totalorder %s343, 2047
          %s345 = scalar_select %p344, %s343, 2047
          %s346 = sshrl.u32 %s345, 3
          %s347 = sand.u32 %s345, 7
          %s348 = smul.u32 %s346, 16
          %s349 = sadd.s32 %s347, %s348
          %s350 = scalar_lea.hbm %s1, %s349
          %s351 = scalar_lea.vmem [#allocation2], 5
          %s352 = scalar_lea.sflag [#allocation4], 5
          %s353 = sshll.u32 %s350, 4
          %s354 = int_to_ptr.hbm [resolvable:$true] %s353
          %s355 = sshll.u32 %s351, 4
          %s356 = int_to_ptr.vmem [resolvable:$true] %s355
          %360 = dma.hbm_to_vmem [thread:$0]  %s354, 32, %s356, %s352, 128, 128, 1
          %s361 = sld [smem:[#allocation6 + $0x300]]
          %p362 = scmp.gt.s32.totalorder %s361, 0
          %s363 = scalar_select %p362, %s361, 0
          %p364 = scmp.lt.s32.totalorder %s363, 2047
          %s365 = scalar_select %p364, %s363, 2047
          %s366 = sshrl.u32 %s365, 3
          %s367 = sand.u32 %s365, 7
          %s368 = smul.u32 %s366, 16
          %s369 = sadd.s32 %s367, %s368
          %s370 = scalar_lea.hbm %s1, %s369
          %s371 = scalar_lea.vmem [#allocation2], 6
          %s372 = scalar_lea.sflag [#allocation4], 6
          %s373 = sshll.u32 %s370, 4
          %s374 = int_to_ptr.hbm [resolvable:$true] %s373
          %s375 = sshll.u32 %s371, 4
          %s376 = int_to_ptr.vmem [resolvable:$true] %s375
          %380 = dma.hbm_to_vmem [thread:$0]  %s374, 32, %s376, %s372, 128, 128, 1
          %s381 = sld [smem:[#allocation6 + $0x380]]
          %p382 = scmp.gt.s32.totalorder %s381, 0
          %s383 = scalar_select %p382, %s381, 0
          %p384 = scmp.lt.s32.totalorder %s383, 2047
          %s385 = scalar_select %p384, %s383, 2047
          %s386 = sshrl.u32 %s385, 3
          %s387 = sand.u32 %s385, 7
          %s388 = smul.u32 %s386, 16
          %s389 = sadd.s32 %s387, %s388
          %s390 = scalar_lea.hbm %s1, %s389
          %s391 = scalar_lea.vmem [#allocation2], 7
          %s392 = scalar_lea.sflag [#allocation4], 7
          %s393 = sshll.u32 %s390, 4
          %s394 = int_to_ptr.hbm [resolvable:$true] %s393
          %s395 = sshll.u32 %s391, 4
          %s396 = int_to_ptr.vmem [resolvable:$true] %s395
          %400 = dma.hbm_to_vmem [thread:$0]  %s394, 32, %s396, %s392, 128, 128, 1
          %s401 = sld [smem:[#allocation6 + $0x1]]
          %p402 = scmp.gt.s32.totalorder %s401, 0
          %s403 = scalar_select %p402, %s401, 0
          %p404 = scmp.lt.s32.totalorder %s403, 2047
          %s405 = scalar_select %p404, %s403, 2047
          %s406 = sshrl.u32 %s405, 3
          %s407 = sand.u32 %s405, 7
          %s408 = smul.u32 %s406, 16
          %s409 = sadd.s32 %s407, %s408
          %s410 = scalar_lea.hbm %s1, %s409
          %s411 = scalar_lea.vmem [#allocation2], 16
          %s412 = scalar_lea.sflag [#allocation4], 8
          %s413 = sshll.u32 %s410, 4
          %s414 = int_to_ptr.hbm [resolvable:$true] %s413
          %s415 = sshll.u32 %s411, 4
          %s416 = int_to_ptr.vmem [resolvable:$true] %s415
          %420 = dma.hbm_to_vmem [thread:$0]  %s414, 32, %s416, %s412, 128, 128, 1
          %s421 = sld [smem:[#allocation6 + $0x81]]
          %p422 = scmp.gt.s32.totalorder %s421, 0
          %s423 = scalar_select %p422, %s421, 0
          %p424 = scmp.lt.s32.totalorder %s423, 2047
          %s425 = scalar_select %p424, %s423, 2047
          %s426 = sshrl.u32 %s425, 3
          %s427 = sand.u32 %s425, 7
          %s428 = smul.u32 %s426, 16
          %s429 = sadd.s32 %s427, %s428
          %s430 = scalar_lea.hbm %s1, %s429
          %s431 = scalar_lea.vmem [#allocation2], 17
          %s432 = scalar_lea.sflag [#allocation4], 9
          %s433 = sshll.u32 %s430, 4
          %s434 = int_to_ptr.hbm [resolvable:$true] %s433
          %s435 = sshll.u32 %s431, 4
          %s436 = int_to_ptr.vmem [resolvable:$true] %s435
          %440 = dma.hbm_to_vmem [thread:$0]  %s434, 32, %s436, %s432, 128, 128, 1
          %s441 = sld [smem:[#allocation6 + $0x101]]
          %p442 = scmp.gt.s32.totalorder %s441, 0
          %s443 = scalar_select %p442, %s441, 0
          %p444 = scmp.lt.s32.totalorder %s443, 2047
          %s445 = scalar_select %p444, %s443, 2047
          %s446 = sshrl.u32 %s445, 3
          %s447 = sand.u32 %s445, 7
          %s448 = smul.u32 %s446, 16
          %s449 = sadd.s32 %s447, %s448
          %s450 = scalar_lea.hbm %s1, %s449
          %s451 = scalar_lea.vmem [#allocation2], 18
          %s452 = scalar_lea.sflag [#allocation4], 10
          %s453 = sshll.u32 %s450, 4
          %s454 = int_to_ptr.hbm [resolvable:$true] %s453
          %s455 = sshll.u32 %s451, 4
          %s456 = int_to_ptr.vmem [resolvable:$true] %s455
          %460 = dma.hbm_to_vmem [thread:$0]  %s454, 32, %s456, %s452, 128, 128, 1
          %s461 = sld [smem:[#allocation6 + $0x181]]
          %p462 = scmp.gt.s32.totalorder %s461, 0
          %s463 = scalar_select %p462, %s461, 0
          %p464 = scmp.lt.s32.totalorder %s463, 2047
          %s465 = scalar_select %p464, %s463, 2047
          %s466 = sshrl.u32 %s465, 3
          %s467 = sand.u32 %s465, 7
          %s468 = smul.u32 %s466, 16
          %s469 = sadd.s32 %s467, %s468
          %s470 = scalar_lea.hbm %s1, %s469
          %s471 = scalar_lea.vmem [#allocation2], 19
          %s472 = scalar_lea.sflag [#allocation4], 11
          %s473 = sshll.u32 %s470, 4
          %s474 = int_to_ptr.hbm [resolvable:$true] %s473
          %s475 = sshll.u32 %s471, 4
          %s476 = int_to_ptr.vmem [resolvable:$true] %s475
          %480 = dma.hbm_to_vmem [thread:$0]  %s474, 32, %s476, %s472, 128, 128, 1
          %s481 = sld [smem:[#allocation6 + $0x201]]
          %p482 = scmp.gt.s32.totalorder %s481, 0
          %s483 = scalar_select %p482, %s481, 0
          %p484 = scmp.lt.s32.totalorder %s483, 2047
          %s485 = scalar_select %p484, %s483, 2047
          %s486 = sshrl.u32 %s485, 3
          %s487 = sand.u32 %s485, 7
          %s488 = smul.u32 %s486, 16
          %s489 = sadd.s32 %s487, %s488
          %s490 = scalar_lea.hbm %s1, %s489
          %s491 = scalar_lea.vmem [#allocation2], 20
          %s492 = scalar_lea.sflag [#allocation4], 12
          %s493 = sshll.u32 %s490, 4
          %s494 = int_to_ptr.hbm [resolvable:$true] %s493
          %s495 = sshll.u32 %s491, 4
          %s496 = int_to_ptr.vmem [resolvable:$true] %s495
          %500 = dma.hbm_to_vmem [thread:$0]  %s494, 32, %s496, %s492, 128, 128, 1
          %s501 = sld [smem:[#allocation6 + $0x281]]
          %p502 = scmp.gt.s32.totalorder %s501, 0
          %s503 = scalar_select %p502, %s501, 0
          %p504 = scmp.lt.s32.totalorder %s503, 2047
          %s505 = scalar_select %p504, %s503, 2047
          %s506 = sshrl.u32 %s505, 3
          %s507 = sand.u32 %s505, 7
          %s508 = smul.u32 %s506, 16
          %s509 = sadd.s32 %s507, %s508
          %s510 = scalar_lea.hbm %s1, %s509
          %s511 = scalar_lea.vmem [#allocation2], 21
          %s512 = scalar_lea.sflag [#allocation4], 13
          %s513 = sshll.u32 %s510, 4
          %s514 = int_to_ptr.hbm [resolvable:$true] %s513
          %s515 = sshll.u32 %s511, 4
          %s516 = int_to_ptr.vmem [resolvable:$true] %s515
          %520 = dma.hbm_to_vmem [thread:$0]  %s514, 32, %s516, %s512, 128, 128, 1
          %s521 = sld [smem:[#allocation6 + $0x301]]
          %p522 = scmp.gt.s32.totalorder %s521, 0
          %s523 = scalar_select %p522, %s521, 0
          %p524 = scmp.lt.s32.totalorder %s523, 2047
          %s525 = scalar_select %p524, %s523, 2047
          %s526 = sshrl.u32 %s525, 3
          %s527 = sand.u32 %s525, 7
          %s528 = smul.u32 %s526, 16
          %s529 = sadd.s32 %s527, %s528
          %s530 = scalar_lea.hbm %s1, %s529
          %s531 = scalar_lea.vmem [#allocation2], 22
          %s532 = scalar_lea.sflag [#allocation4], 14
          %s533 = sshll.u32 %s530, 4
          %s534 = int_to_ptr.hbm [resolvable:$true] %s533
          %s535 = sshll.u32 %s531, 4
          %s536 = int_to_ptr.vmem [resolvable:$true] %s535
          %540 = dma.hbm_to_vmem [thread:$0]  %s534, 32, %s536, %s532, 128, 128, 1
          %s541 = sld [smem:[#allocation6 + $0x381]]
          %p542 = scmp.gt.s32.totalorder %s541, 0
          %s543 = scalar_select %p542, %s541, 0
          %p544 = scmp.lt.s32.totalorder %s543, 2047
          %s545 = scalar_select %p544, %s543, 2047
          %s546 = sshrl.u32 %s545, 3
          %s547 = sand.u32 %s545, 7
          %s548 = smul.u32 %s546, 16
          %s549 = sadd.s32 %s547, %s548
          %s550 = scalar_lea.hbm %s1, %s549
          %s551 = scalar_lea.vmem [#allocation2], 23
          %s552 = scalar_lea.sflag [#allocation4], 15
          %s553 = sshll.u32 %s550, 4
          %s554 = int_to_ptr.hbm [resolvable:$true] %s553
          %s555 = sshll.u32 %s551, 4
          %s556 = int_to_ptr.vmem [resolvable:$true] %s555
          %560 = dma.hbm_to_vmem [thread:$0]  %s554, 32, %s556, %s552, 128, 128, 1
          %s561 = sld [smem:[#allocation6 + $0x2]]
          %p562 = scmp.gt.s32.totalorder %s561, 0
          %s563 = scalar_select %p562, %s561, 0
          %p564 = scmp.lt.s32.totalorder %s563, 2047
          %s565 = scalar_select %p564, %s563, 2047
          %s566 = sshrl.u32 %s565, 3
          %s567 = sand.u32 %s565, 7
          %s568 = smul.u32 %s566, 16
          %s569 = sadd.s32 %s567, %s568
          %s570 = scalar_lea.hbm %s1, %s569
          %s571 = scalar_lea.vmem [#allocation2], 32
          %s572 = scalar_lea.sflag [#allocation4], 16
          %s573 = sshll.u32 %s570, 4
          %s574 = int_to_ptr.hbm [resolvable:$true] %s573
          %s575 = sshll.u32 %s571, 4
          %s576 = int_to_ptr.vmem [resolvable:$true] %s575
          %580 = dma.hbm_to_vmem [thread:$0]  %s574, 32, %s576, %s572, 128, 128, 1
          %s581 = sld [smem:[#allocation6 + $0x82]]
          %p582 = scmp.gt.s32.totalorder %s581, 0
          %s583 = scalar_select %p582, %s581, 0
          %p584 = scmp.lt.s32.totalorder %s583, 2047
          %s585 = scalar_select %p584, %s583, 2047
          %s586 = sshrl.u32 %s585, 3
          %s587 = sand.u32 %s585, 7
          %s588 = smul.u32 %s586, 16
          %s589 = sadd.s32 %s587, %s588
          %s590 = scalar_lea.hbm %s1, %s589
          %s591 = scalar_lea.vmem [#allocation2], 33
          %s592 = scalar_lea.sflag [#allocation4], 17
          %s593 = sshll.u32 %s590, 4
          %s594 = int_to_ptr.hbm [resolvable:$true] %s593
          %s595 = sshll.u32 %s591, 4
          %s596 = int_to_ptr.vmem [resolvable:$true] %s595
          %600 = dma.hbm_to_vmem [thread:$0]  %s594, 32, %s596, %s592, 128, 128, 1
          %s601 = sld [smem:[#allocation6 + $0x102]]
          %p602 = scmp.gt.s32.totalorder %s601, 0
          %s603 = scalar_select %p602, %s601, 0
          %p604 = scmp.lt.s32.totalorder %s603, 2047
          %s605 = scalar_select %p604, %s603, 2047
          %s606 = sshrl.u32 %s605, 3
          %s607 = sand.u32 %s605, 7
          %s608 = smul.u32 %s606, 16
          %s609 = sadd.s32 %s607, %s608
          %s610 = scalar_lea.hbm %s1, %s609
          %s611 = scalar_lea.vmem [#allocation2], 34
          %s612 = scalar_lea.sflag [#allocation4], 18
          %s613 = sshll.u32 %s610, 4
          %s614 = int_to_ptr.hbm [resolvable:$true] %s613
          %s615 = sshll.u32 %s611, 4
          %s616 = int_to_ptr.vmem [resolvable:$true] %s615
          %620 = dma.hbm_to_vmem [thread:$0]  %s614, 32, %s616, %s612, 128, 128, 1
          %s621 = sld [smem:[#allocation6 + $0x182]]
          %p622 = scmp.gt.s32.totalorder %s621, 0
          %s623 = scalar_select %p622, %s621, 0
          %p624 = scmp.lt.s32.totalorder %s623, 2047
          %s625 = scalar_select %p624, %s623, 2047
          %s626 = sshrl.u32 %s625, 3
          %s627 = sand.u32 %s625, 7
          %s628 = smul.u32 %s626, 16
          %s629 = sadd.s32 %s627, %s628
          %s630 = scalar_lea.hbm %s1, %s629
          %s631 = scalar_lea.vmem [#allocation2], 35
          %s632 = scalar_lea.sflag [#allocation4], 19
          %s633 = sshll.u32 %s630, 4
          %s634 = int_to_ptr.hbm [resolvable:$true] %s633
          %s635 = sshll.u32 %s631, 4
          %s636 = int_to_ptr.vmem [resolvable:$true] %s635
          %640 = dma.hbm_to_vmem [thread:$0]  %s634, 32, %s636, %s632, 128, 128, 1
          %s641 = sld [smem:[#allocation6 + $0x202]]
          %p642 = scmp.gt.s32.totalorder %s641, 0
          %s643 = scalar_select %p642, %s641, 0
          %p644 = scmp.lt.s32.totalorder %s643, 2047
          %s645 = scalar_select %p644, %s643, 2047
          %s646 = sshrl.u32 %s645, 3
          %s647 = sand.u32 %s645, 7
          %s648 = smul.u32 %s646, 16
          %s649 = sadd.s32 %s647, %s648
          %s650 = scalar_lea.hbm %s1, %s649
          %s651 = scalar_lea.vmem [#allocation2], 36
          %s652 = scalar_lea.sflag [#allocation4], 20
          %s653 = sshll.u32 %s650, 4
          %s654 = int_to_ptr.hbm [resolvable:$true] %s653
          %s655 = sshll.u32 %s651, 4
          %s656 = int_to_ptr.vmem [resolvable:$true] %s655
          %660 = dma.hbm_to_vmem [thread:$0]  %s654, 32, %s656, %s652, 128, 128, 1
          %s661 = sld [smem:[#allocation6 + $0x282]]
          %p662 = scmp.gt.s32.totalorder %s661, 0
          %s663 = scalar_select %p662, %s661, 0
          %p664 = scmp.lt.s32.totalorder %s663, 2047
          %s665 = scalar_select %p664, %s663, 2047
          %s666 = sshrl.u32 %s665, 3
          %s667 = sand.u32 %s665, 7
          %s668 = smul.u32 %s666, 16
          %s669 = sadd.s32 %s667, %s668
          %s670 = scalar_lea.hbm %s1, %s669
          %s671 = scalar_lea.vmem [#allocation2], 37
          %s672 = scalar_lea.sflag [#allocation4], 21
          %s673 = sshll.u32 %s670, 4
          %s674 = int_to_ptr.hbm [resolvable:$true] %s673
          %s675 = sshll.u32 %s671, 4
          %s676 = int_to_ptr.vmem [resolvable:$true] %s675
          %680 = dma.hbm_to_vmem [thread:$0]  %s674, 32, %s676, %s672, 128, 128, 1
          %s681 = sld [smem:[#allocation6 + $0x302]]
          %p682 = scmp.gt.s32.totalorder %s681, 0
          %s683 = scalar_select %p682, %s681, 0
          %p684 = scmp.lt.s32.totalorder %s683, 2047
          %s685 = scalar_select %p684, %s683, 2047
          %s686 = sshrl.u32 %s685, 3
          %s687 = sand.u32 %s685, 7
          %s688 = smul.u32 %s686, 16
          %s689 = sadd.s32 %s687, %s688
          %s690 = scalar_lea.hbm %s1, %s689
          %s691 = scalar_lea.vmem [#allocation2], 38
          %s692 = scalar_lea.sflag [#allocation4], 22
          %s693 = sshll.u32 %s690, 4
          %s694 = int_to_ptr.hbm [resolvable:$true] %s693
          %s695 = sshll.u32 %s691, 4
          %s696 = int_to_ptr.vmem [resolvable:$true] %s695
          %700 = dma.hbm_to_vmem [thread:$0]  %s694, 32, %s696, %s692, 128, 128, 1
          %s701 = sld [smem:[#allocation6 + $0x382]]
          %p702 = scmp.gt.s32.totalorder %s701, 0
          %s703 = scalar_select %p702, %s701, 0
          %p704 = scmp.lt.s32.totalorder %s703, 2047
          %s705 = scalar_select %p704, %s703, 2047
          %s706 = sshrl.u32 %s705, 3
          %s707 = sand.u32 %s705, 7
          %s708 = smul.u32 %s706, 16
          %s709 = sadd.s32 %s707, %s708
          %s710 = scalar_lea.hbm %s1, %s709
          %s711 = scalar_lea.vmem [#allocation2], 39
          %s712 = scalar_lea.sflag [#allocation4], 23
          %s713 = sshll.u32 %s710, 4
          %s714 = int_to_ptr.hbm [resolvable:$true] %s713
          %s715 = sshll.u32 %s711, 4
          %s716 = int_to_ptr.vmem [resolvable:$true] %s715
          %720 = dma.hbm_to_vmem [thread:$0]  %s714, 32, %s716, %s712, 128, 128, 1
          %s721 = sld [smem:[#allocation6 + $0x3]]
          %p722 = scmp.gt.s32.totalorder %s721, 0
          %s723 = scalar_select %p722, %s721, 0
          %p724 = scmp.lt.s32.totalorder %s723, 2047
          %s725 = scalar_select %p724, %s723, 2047
          %s726 = sshrl.u32 %s725, 3
          %s727 = sand.u32 %s725, 7
          %s728 = smul.u32 %s726, 16
          %s729 = sadd.s32 %s727, %s728
          %s730 = scalar_lea.hbm %s1, %s729
          %s731 = scalar_lea.vmem [#allocation2], 48
          %s732 = scalar_lea.sflag [#allocation4], 24
          %s733 = sshll.u32 %s730, 4
          %s734 = int_to_ptr.hbm [resolvable:$true] %s733
          %s735 = sshll.u32 %s731, 4
          %s736 = int_to_ptr.vmem [resolvable:$true] %s735
          %740 = dma.hbm_to_vmem [thread:$0]  %s734, 32, %s736, %s732, 128, 128, 1
          %s741 = sld [smem:[#allocation6 + $0x83]]
          %p742 = scmp.gt.s32.totalorder %s741, 0
          %s743 = scalar_select %p742, %s741, 0
          %p744 = scmp.lt.s32.totalorder %s743, 2047
          %s745 = scalar_select %p744, %s743, 2047
          %s746 = sshrl.u32 %s745, 3
          %s747 = sand.u32 %s745, 7
          %s748 = smul.u32 %s746, 16
          %s749 = sadd.s32 %s747, %s748
          %s750 = scalar_lea.hbm %s1, %s749
          %s751 = scalar_lea.vmem [#allocation2], 49
          %s752 = scalar_lea.sflag [#allocation4], 25
          %s753 = sshll.u32 %s750, 4
          %s754 = int_to_ptr.hbm [resolvable:$true] %s753
          %s755 = sshll.u32 %s751, 4
          %s756 = int_to_ptr.vmem [resolvable:$true] %s755
          %760 = dma.hbm_to_vmem [thread:$0]  %s754, 32, %s756, %s752, 128, 128, 1
          %s761 = sld [smem:[#allocation6 + $0x103]]
          %p762 = scmp.gt.s32.totalorder %s761, 0
          %s763 = scalar_select %p762, %s761, 0
          %p764 = scmp.lt.s32.totalorder %s763, 2047
          %s765 = scalar_select %p764, %s763, 2047
          %s766 = sshrl.u32 %s765, 3
          %s767 = sand.u32 %s765, 7
          %s768 = smul.u32 %s766, 16
          %s769 = sadd.s32 %s767, %s768
          %s770 = scalar_lea.hbm %s1, %s769
          %s771 = scalar_lea.vmem [#allocation2], 50
          %s772 = scalar_lea.sflag [#allocation4], 26
          %s773 = sshll.u32 %s770, 4
          %s774 = int_to_ptr.hbm [resolvable:$true] %s773
          %s775 = sshll.u32 %s771, 4
          %s776 = int_to_ptr.vmem [resolvable:$true] %s775
          %780 = dma.hbm_to_vmem [thread:$0]  %s774, 32, %s776, %s772, 128, 128, 1
          %s781 = sld [smem:[#allocation6 + $0x183]]
          %p782 = scmp.gt.s32.totalorder %s781, 0
          %s783 = scalar_select %p782, %s781, 0
          %p784 = scmp.lt.s32.totalorder %s783, 2047
          %s785 = scalar_select %p784, %s783, 2047
          %s786 = sshrl.u32 %s785, 3
          %s787 = sand.u32 %s785, 7
          %s788 = smul.u32 %s786, 16
          %s789 = sadd.s32 %s787, %s788
          %s790 = scalar_lea.hbm %s1, %s789
          %s791 = scalar_lea.vmem [#allocation2], 51
          %s792 = scalar_lea.sflag [#allocation4], 27
          %s793 = sshll.u32 %s790, 4
          %s794 = int_to_ptr.hbm [resolvable:$true] %s793
          %s795 = sshll.u32 %s791, 4
          %s796 = int_to_ptr.vmem [resolvable:$true] %s795
          %800 = dma.hbm_to_vmem [thread:$0]  %s794, 32, %s796, %s792, 128, 128, 1
          %s801 = sld [smem:[#allocation6 + $0x203]]
          %p802 = scmp.gt.s32.totalorder %s801, 0
          %s803 = scalar_select %p802, %s801, 0
          %p804 = scmp.lt.s32.totalorder %s803, 2047
          %s805 = scalar_select %p804, %s803, 2047
          %s806 = sshrl.u32 %s805, 3
          %s807 = sand.u32 %s805, 7
          %s808 = smul.u32 %s806, 16
          %s809 = sadd.s32 %s807, %s808
          %s810 = scalar_lea.hbm %s1, %s809
          %s811 = scalar_lea.vmem [#allocation2], 52
          %s812 = scalar_lea.sflag [#allocation4], 28
          %s813 = sshll.u32 %s810, 4
          %s814 = int_to_ptr.hbm [resolvable:$true] %s813
          %s815 = sshll.u32 %s811, 4
          %s816 = int_to_ptr.vmem [resolvable:$true] %s815
          %820 = dma.hbm_to_vmem [thread:$0]  %s814, 32, %s816, %s812, 128, 128, 1
          %s821 = sld [smem:[#allocation6 + $0x283]]
          %p822 = scmp.gt.s32.totalorder %s821, 0
          %s823 = scalar_select %p822, %s821, 0
          %p824 = scmp.lt.s32.totalorder %s823, 2047
          %s825 = scalar_select %p824, %s823, 2047
          %s826 = sshrl.u32 %s825, 3
          %s827 = sand.u32 %s825, 7
          %s828 = smul.u32 %s826, 16
          %s829 = sadd.s32 %s827, %s828
          %s830 = scalar_lea.hbm %s1, %s829
          %s831 = scalar_lea.vmem [#allocation2], 53
          %s832 = scalar_lea.sflag [#allocation4], 29
          %s833 = sshll.u32 %s830, 4
          %s834 = int_to_ptr.hbm [resolvable:$true] %s833
          %s835 = sshll.u32 %s831, 4
          %s836 = int_to_ptr.vmem [resolvable:$true] %s835
          %840 = dma.hbm_to_vmem [thread:$0]  %s834, 32, %s836, %s832, 128, 128, 1
          %s841 = sld [smem:[#allocation6 + $0x303]]
          %p842 = scmp.gt.s32.totalorder %s841, 0
          %s843 = scalar_select %p842, %s841, 0
          %p844 = scmp.lt.s32.totalorder %s843, 2047
          %s845 = scalar_select %p844, %s843, 2047
          %s846 = sshrl.u32 %s845, 3
          %s847 = sand.u32 %s845, 7
          %s848 = smul.u32 %s846, 16
          %s849 = sadd.s32 %s847, %s848
          %s850 = scalar_lea.hbm %s1, %s849
          %s851 = scalar_lea.vmem [#allocation2], 54
          %s852 = scalar_lea.sflag [#allocation4], 30
          %s853 = sshll.u32 %s850, 4
          %s854 = int_to_ptr.hbm [resolvable:$true] %s853
          %s855 = sshll.u32 %s851, 4
          %s856 = int_to_ptr.vmem [resolvable:$true] %s855
          %860 = dma.hbm_to_vmem [thread:$0]  %s854, 32, %s856, %s852, 128, 128, 1
          %s861 = sld [smem:[#allocation6 + $0x383]]
          %p862 = scmp.gt.s32.totalorder %s861, 0
          %s863 = scalar_select %p862, %s861, 0
          %p864 = scmp.lt.s32.totalorder %s863, 2047
          %s865 = scalar_select %p864, %s863, 2047
          %s866 = sshrl.u32 %s865, 3
          %s867 = sand.u32 %s865, 7
          %s868 = smul.u32 %s866, 16
          %s869 = sadd.s32 %s867, %s868
          %s870 = scalar_lea.hbm %s1, %s869
          %s871 = scalar_lea.vmem [#allocation2], 55
          %s872 = scalar_lea.sflag [#allocation4], 31
          %s873 = sshll.u32 %s870, 4
          %s874 = int_to_ptr.hbm [resolvable:$true] %s873
          %s875 = sshll.u32 %s871, 4
          %s876 = int_to_ptr.vmem [resolvable:$true] %s875
          %880 = dma.hbm_to_vmem [thread:$0]  %s874, 32, %s876, %s872, 128, 128, 1
          %s881 = smul.u32 1, 2
          %s882 = sshll.u32 %s881, 4
          %883 = dma.done [#allocation4], %s882
          %s884 = sshll.u32 %s881, 4
          %885 = dma.done %s272, %s884
          %s886 = sshll.u32 %s881, 4
          %887 = dma.done %s292, %s886
          %s888 = sshll.u32 %s881, 4
          %889 = dma.done %s312, %s888
          %s890 = sshll.u32 %s881, 4
          %891 = dma.done %s332, %s890
          %s892 = sshll.u32 %s881, 4
          %893 = dma.done %s352, %s892
          %s894 = sshll.u32 %s881, 4
          %895 = dma.done %s372, %s894
          %s896 = sshll.u32 %s881, 4
          %897 = dma.done %s392, %s896
          %s898 = sshll.u32 %s881, 4
          %899 = dma.done %s412, %s898
          %s900 = sshll.u32 %s881, 4
          %901 = dma.done %s432, %s900
          %s902 = sshll.u32 %s881, 4
          %903 = dma.done %s452, %s902
          %s904 = sshll.u32 %s881, 4
          %905 = dma.done %s472, %s904
          %s906 = sshll.u32 %s881, 4
          %907 = dma.done %s492, %s906
          %s908 = sshll.u32 %s881, 4
          %909 = dma.done %s512, %s908
          %s910 = sshll.u32 %s881, 4
          %911 = dma.done %s532, %s910
          %s912 = sshll.u32 %s881, 4
          %913 = dma.done %s552, %s912
          %s914 = sshll.u32 %s881, 4
          %915 = dma.done %s572, %s914
          %s916 = sshll.u32 %s881, 4
          %917 = dma.done %s592, %s916
          %s918 = sshll.u32 %s881, 4
          %919 = dma.done %s612, %s918
          %s920 = sshll.u32 %s881, 4
          %921 = dma.done %s632, %s920
          %s922 = sshll.u32 %s881, 4
          %923 = dma.done %s652, %s922
          %s924 = sshll.u32 %s881, 4
          %925 = dma.done %s672, %s924
          %s926 = sshll.u32 %s881, 4
          %927 = dma.done %s692, %s926
          %s928 = sshll.u32 %s881, 4
          %929 = dma.done %s712, %s928
          %s930 = sshll.u32 %s881, 4
          %931 = dma.done %s732, %s930
          %s932 = sshll.u32 %s881, 4
          %933 = dma.done %s752, %s932
          %s934 = sshll.u32 %s881, 4
          %935 = dma.done %s772, %s934
          %s936 = sshll.u32 %s881, 4
          %937 = dma.done %s792, %s936
          %s938 = sshll.u32 %s881, 4
          %939 = dma.done %s812, %s938
          %s940 = sshll.u32 %s881, 4
          %941 = dma.done %s832, %s940
          %s942 = sshll.u32 %s881, 4
          %943 = dma.done %s852, %s942
          %s944 = sshll.u32 %s881, 4
          %945 = dma.done %s872, %s944
          %v946 = vld [vmem:[#allocation2] sm:$0xff]
          %v947 = vld [vmem:[#allocation2 + $0x8] sm:$0xff]
          %v948 = vld [vmem:[#allocation2 + $0x10] sm:$0xff]
          %v949 = vld [vmem:[#allocation2 + $0x18] sm:$0xff]
          %v950 = vld [vmem:[#allocation2 + $0x20] sm:$0xff]
          %v951 = vld [vmem:[#allocation2 + $0x28] sm:$0xff]
          %v952 = vld [vmem:[#allocation2 + $0x30] sm:$0xff]
          %v953 = vld [vmem:[#allocation2 + $0x38] sm:$0xff]
          %v954 = vadd.f32 %v946, %v948
          %v955 = vadd.f32 %v947, %v949
          %v956 = vadd.f32 %v950, %v952
          %v957 = vadd.f32 %v951, %v953
          %v958 = vadd.f32 %v954, %v956
          %v959 = vadd.f32 %v955, %v957
          %v960 = vmul.f32 %v958, 0.25
          %v961 = vmul.f32 %v959, 0.25
          %v962 = vpack.c.bf16 %v961, %v960
          %963 = vst [vmem:[#allocation3] sm:$0xff] %v962
        $region40: #{tpu_custom_call.1} parent=27 // pred_fallthru
          _
        %v964 = vld [vmem:[#allocation3] sm:$0xff]
        %v965 = vld [vmem:[%s196] sm:$0xff]
        %v966 = vld [vmem:[%s196 + $0x8] sm:$0xff]
        %v967 = vld [vmem:[%s196 + $0x10] sm:$0xff]
        %v968 = vld [vmem:[%s196 + $0x18] sm:$0xff]
        %v969 = vld [vmem:[%s196 + $0x20] sm:$0xff]
        %v970 = vld [vmem:[%s196 + $0x28] sm:$0xff]
        %v971 = vld [vmem:[%s196 + $0x30] sm:$0xff]
        %v972 = vld [vmem:[%s196 + $0x38] sm:$0xff]
        %v973 = vld [vmem:[%s196 + $0x40] sm:$0xff]
        %v974 = vld [vmem:[%s196 + $0x48] sm:$0xff]
        %v975 = vld [vmem:[%s196 + $0x50] sm:$0xff]
        %v976 = vld [vmem:[%s196 + $0x58] sm:$0xff]
        %v977 = vld [vmem:[%s196 + $0x60] sm:$0xff]
        %v978 = vld [vmem:[%s196 + $0x68] sm:$0xff]
        %v979 = vld [vmem:[%s196 + $0x70] sm:$0xff]
        %v980 = vld [vmem:[%s196 + $0x78] sm:$0xff]
        %v981 = vld [vmem:[%s196 + $0x80] sm:$0xff]
        %v982 = vld [vmem:[%s196 + $0x88] sm:$0xff]
        %v983 = vld [vmem:[%s196 + $0x90] sm:$0xff]
        %v984 = vld [vmem:[%s196 + $0x98] sm:$0xff]
        %v985 = vld [vmem:[%s196 + $0xa0] sm:$0xff]
        %v986 = vld [vmem:[%s196 + $0xa8] sm:$0xff]
        %v987 = vld [vmem:[%s196 + $0xb0] sm:$0xff]
        %v988 = vld [vmem:[%s196 + $0xb8] sm:$0xff]
        %v989 = vld [vmem:[%s196 + $0xc0] sm:$0xff]
        %v990 = vld [vmem:[%s196 + $0xc8] sm:$0xff]
        %v991 = vld [vmem:[%s196 + $0xd0] sm:$0xff]
        %v992 = vld [vmem:[%s196 + $0xd8] sm:$0xff]
        %v993 = vld [vmem:[%s196 + $0xe0] sm:$0xff]
        %v994 = vld [vmem:[%s196 + $0xe8] sm:$0xff]
        %v995 = vld [vmem:[%s196 + $0xf0] sm:$0xff]
        %v996 = vld [vmem:[%s196 + $0xf8] sm:$0xff]
        %v997 = vld [vmem:[%s196 + $0x100] sm:$0xff]
        %v998 = vld [vmem:[%s196 + $0x108] sm:$0xff]
        %v999 = vld [vmem:[%s196 + $0x110] sm:$0xff]
        %v1000 = vld [vmem:[%s196 + $0x118] sm:$0xff]
        %v1001 = vld [vmem:[%s196 + $0x120] sm:$0xff]
        %v1002 = vld [vmem:[%s196 + $0x128] sm:$0xff]
        %v1003 = vld [vmem:[%s196 + $0x130] sm:$0xff]
        %v1004 = vld [vmem:[%s196 + $0x138] sm:$0xff]
        %v1005 = vld [vmem:[%s196 + $0x140] sm:$0xff]
        %v1006 = vld [vmem:[%s196 + $0x148] sm:$0xff]
        %v1007 = vld [vmem:[%s196 + $0x150] sm:$0xff]
        %v1008 = vld [vmem:[%s196 + $0x158] sm:$0xff]
        %v1009 = vld [vmem:[%s196 + $0x160] sm:$0xff]
        %v1010 = vld [vmem:[%s196 + $0x168] sm:$0xff]
        %v1011 = vld [vmem:[%s196 + $0x170] sm:$0xff]
        %v1012 = vld [vmem:[%s196 + $0x178] sm:$0xff]
        %v1013 = vld [vmem:[%s196 + $0x180] sm:$0xff]
        %v1014 = vld [vmem:[%s196 + $0x188] sm:$0xff]
        %v1015 = vld [vmem:[%s196 + $0x190] sm:$0xff]
        %v1016 = vld [vmem:[%s196 + $0x198] sm:$0xff]
        %v1017 = vld [vmem:[%s196 + $0x1a0] sm:$0xff]
        %v1018 = vld [vmem:[%s196 + $0x1a8] sm:$0xff]
        %v1019 = vld [vmem:[%s196 + $0x1b0] sm:$0xff]
        %v1020 = vld [vmem:[%s196 + $0x1b8] sm:$0xff]
        %v1021 = vld [vmem:[%s196 + $0x1c0] sm:$0xff]
        %v1022 = vld [vmem:[%s196 + $0x1c8] sm:$0xff]
        %v1023 = vld [vmem:[%s196 + $0x1d0] sm:$0xff]
        %v1024 = vld [vmem:[%s196 + $0x1d8] sm:$0xff]
        %v1025 = vld [vmem:[%s196 + $0x1e0] sm:$0xff]
        %v1026 = vld [vmem:[%s196 + $0x1e8] sm:$0xff]
        %v1027 = vld [vmem:[%s196 + $0x1f0] sm:$0xff]
        %v1028 = vld [vmem:[%s196 + $0x1f8] sm:$0xff]
        %v1029 = vld [vmem:[%s196 + $0x200] sm:$0xff]
        %v1030 = vld [vmem:[%s196 + $0x208] sm:$0xff]
        %v1031 = vld [vmem:[%s196 + $0x210] sm:$0xff]
        %v1032 = vld [vmem:[%s196 + $0x218] sm:$0xff]
        %v1033 = vld [vmem:[%s196 + $0x220] sm:$0xff]
        %v1034 = vld [vmem:[%s196 + $0x228] sm:$0xff]
        %v1035 = vld [vmem:[%s196 + $0x230] sm:$0xff]
        %v1036 = vld [vmem:[%s196 + $0x238] sm:$0xff]
        %v1037 = vld [vmem:[%s196 + $0x240] sm:$0xff]
        %v1038 = vld [vmem:[%s196 + $0x248] sm:$0xff]
        %v1039 = vld [vmem:[%s196 + $0x250] sm:$0xff]
        %v1040 = vld [vmem:[%s196 + $0x258] sm:$0xff]
        %v1041 = vld [vmem:[%s196 + $0x260] sm:$0xff]
        %v1042 = vld [vmem:[%s196 + $0x268] sm:$0xff]
        %v1043 = vld [vmem:[%s196 + $0x270] sm:$0xff]
        %v1044 = vld [vmem:[%s196 + $0x278] sm:$0xff]
        %v1045 = vld [vmem:[%s196 + $0x280] sm:$0xff]
        %v1046 = vld [vmem:[%s196 + $0x288] sm:$0xff]
        %v1047 = vld [vmem:[%s196 + $0x290] sm:$0xff]
        %v1048 = vld [vmem:[%s196 + $0x298] sm:$0xff]
        %v1049 = vld [vmem:[%s196 + $0x2a0] sm:$0xff]
        %v1050 = vld [vmem:[%s196 + $0x2a8] sm:$0xff]
        %v1051 = vld [vmem:[%s196 + $0x2b0] sm:$0xff]
        %v1052 = vld [vmem:[%s196 + $0x2b8] sm:$0xff]
        %v1053 = vld [vmem:[%s196 + $0x2c0] sm:$0xff]
        %v1054 = vld [vmem:[%s196 + $0x2c8] sm:$0xff]
        %v1055 = vld [vmem:[%s196 + $0x2d0] sm:$0xff]
        %v1056 = vld [vmem:[%s196 + $0x2d8] sm:$0xff]
        %v1057 = vld [vmem:[%s196 + $0x2e0] sm:$0xff]
        %v1058 = vld [vmem:[%s196 + $0x2e8] sm:$0xff]
        %v1059 = vld [vmem:[%s196 + $0x2f0] sm:$0xff]
        %v1060 = vld [vmem:[%s196 + $0x2f8] sm:$0xff]
        %v1061 = vld [vmem:[%s196 + $0x300] sm:$0xff]
        %v1062 = vld [vmem:[%s196 + $0x308] sm:$0xff]
        %v1063 = vld [vmem:[%s196 + $0x310] sm:$0xff]
        %v1064 = vld [vmem:[%s196 + $0x318] sm:$0xff]
        %v1065 = vld [vmem:[%s196 + $0x320] sm:$0xff]
        %v1066 = vld [vmem:[%s196 + $0x328] sm:$0xff]
        %v1067 = vld [vmem:[%s196 + $0x330] sm:$0xff]
        %v1068 = vld [vmem:[%s196 + $0x338] sm:$0xff]
        %v1069 = vld [vmem:[%s196 + $0x340] sm:$0xff]
        %v1070 = vld [vmem:[%s196 + $0x348] sm:$0xff]
        %v1071 = vld [vmem:[%s196 + $0x350] sm:$0xff]
        %v1072 = vld [vmem:[%s196 + $0x358] sm:$0xff]
        %v1073 = vld [vmem:[%s196 + $0x360] sm:$0xff]
        %v1074 = vld [vmem:[%s196 + $0x368] sm:$0xff]
        %v1075 = vld [vmem:[%s196 + $0x370] sm:$0xff]
        %v1076 = vld [vmem:[%s196 + $0x378] sm:$0xff]
        %v1077 = vld [vmem:[%s196 + $0x380] sm:$0xff]
        %v1078 = vld [vmem:[%s196 + $0x388] sm:$0xff]
        %v1079 = vld [vmem:[%s196 + $0x390] sm:$0xff]
        %v1080 = vld [vmem:[%s196 + $0x398] sm:$0xff]
        %v1081 = vld [vmem:[%s196 + $0x3a0] sm:$0xff]
        %v1082 = vld [vmem:[%s196 + $0x3a8] sm:$0xff]
        %v1083 = vld [vmem:[%s196 + $0x3b0] sm:$0xff]
        %v1084 = vld [vmem:[%s196 + $0x3b8] sm:$0xff]
        %v1085 = vld [vmem:[%s196 + $0x3c0] sm:$0xff]
        %v1086 = vld [vmem:[%s196 + $0x3c8] sm:$0xff]
        %v1087 = vld [vmem:[%s196 + $0x3d0] sm:$0xff]
        %v1088 = vld [vmem:[%s196 + $0x3d8] sm:$0xff]
        %v1089 = vld [vmem:[%s196 + $0x3e0] sm:$0xff]
        %v1090 = vld [vmem:[%s196 + $0x3e8] sm:$0xff]
        %v1091 = vld [vmem:[%s196 + $0x3f0] sm:$0xff]
        %v1092 = vld [vmem:[%s196 + $0x3f8] sm:$0xff]
        %v1093 = vld [vmem:[%s206] sm:$0xff]
        %v1095 = vperm.slane %v1093, 0
        %v1096 = vperm.slane %v1093, 1
        %v1097 = vperm.slane %v1093, 2
        %v1098 = vperm.slane %v1093, 3
        %v1099 = vperm.slane %v1093, 4
        %v1100 = vperm.slane %v1093, 5
        %v1101 = vperm.slane %v1093, 6
        %v1102 = vperm.slane %v1093, 7
        %v1112 = vunpack.c.l.b16 %v964
        %v1113 = vunpack.c.h.b16 %v964
        %v1114 = vpack.c.b16 %v1112, %v1112
        %v1115 = vpack.c.b16 %v1113, %v1113
        %v1246 = vunpack.c.l.b16 %v965
        %v1247 = vunpack.c.h.b16 %v965
        %v1248 = vunpack.c.l.b16 %v966
        %v1249 = vunpack.c.h.b16 %v966
        %v1250 = vunpack.c.l.b16 %v967
        %v1251 = vunpack.c.h.b16 %v967
        %v1252 = vunpack.c.l.b16 %v968
        %v1253 = vunpack.c.h.b16 %v968
        %v1254 = vunpack.c.l.b16 %v969
        %v1255 = vunpack.c.h.b16 %v969
        %v1256 = vunpack.c.l.b16 %v970
        %v1257 = vunpack.c.h.b16 %v970
        %v1258 = vunpack.c.l.b16 %v971
        %v1259 = vunpack.c.h.b16 %v971
        %v1260 = vunpack.c.l.b16 %v972
        %v1261 = vunpack.c.h.b16 %v972
        %v1262 = vunpack.c.l.b16 %v973
        %v1263 = vunpack.c.h.b16 %v973
        %v1264 = vunpack.c.l.b16 %v974
        %v1265 = vunpack.c.h.b16 %v974
        %v1266 = vunpack.c.l.b16 %v975
        %v1267 = vunpack.c.h.b16 %v975
        %v1268 = vunpack.c.l.b16 %v976
        %v1269 = vunpack.c.h.b16 %v976
        %v1270 = vunpack.c.l.b16 %v977
        %v1271 = vunpack.c.h.b16 %v977
        %v1272 = vunpack.c.l.b16 %v978
        %v1273 = vunpack.c.h.b16 %v978
        %v1274 = vunpack.c.l.b16 %v979
        %v1275 = vunpack.c.h.b16 %v979
        %v1276 = vunpack.c.l.b16 %v980
        %v1277 = vunpack.c.h.b16 %v980
        %v1278 = vunpack.c.l.b16 %v981
        %v1279 = vunpack.c.h.b16 %v981
        %v1280 = vunpack.c.l.b16 %v982
        %v1281 = vunpack.c.h.b16 %v982
        %v1282 = vunpack.c.l.b16 %v983
        %v1283 = vunpack.c.h.b16 %v983
        %v1284 = vunpack.c.l.b16 %v984
        %v1285 = vunpack.c.h.b16 %v984
        %v1286 = vunpack.c.l.b16 %v985
        %v1287 = vunpack.c.h.b16 %v985
        %v1288 = vunpack.c.l.b16 %v986
        %v1289 = vunpack.c.h.b16 %v986
        %v1290 = vunpack.c.l.b16 %v987
        %v1291 = vunpack.c.h.b16 %v987
        %v1292 = vunpack.c.l.b16 %v988
        %v1293 = vunpack.c.h.b16 %v988
        %v1294 = vunpack.c.l.b16 %v989
        %v1295 = vunpack.c.h.b16 %v989
        %v1296 = vunpack.c.l.b16 %v990
        %v1297 = vunpack.c.h.b16 %v990
        %v1298 = vunpack.c.l.b16 %v991
        %v1299 = vunpack.c.h.b16 %v991
        %v1300 = vunpack.c.l.b16 %v992
        %v1301 = vunpack.c.h.b16 %v992
        %v1302 = vunpack.c.l.b16 %v993
        %v1303 = vunpack.c.h.b16 %v993
        %v1304 = vunpack.c.l.b16 %v994
        %v1305 = vunpack.c.h.b16 %v994
        %v1306 = vunpack.c.l.b16 %v995
        %v1307 = vunpack.c.h.b16 %v995
        %v1308 = vunpack.c.l.b16 %v996
        %v1309 = vunpack.c.h.b16 %v996
        %v1310 = vunpack.c.l.b16 %v997
        %v1311 = vunpack.c.h.b16 %v997
        %v1312 = vunpack.c.l.b16 %v998
        %v1313 = vunpack.c.h.b16 %v998
        %v1314 = vunpack.c.l.b16 %v999
        %v1315 = vunpack.c.h.b16 %v999
        %v1316 = vunpack.c.l.b16 %v1000
        %v1317 = vunpack.c.h.b16 %v1000
        %v1318 = vunpack.c.l.b16 %v1001
        %v1319 = vunpack.c.h.b16 %v1001
        %v1320 = vunpack.c.l.b16 %v1002
        %v1321 = vunpack.c.h.b16 %v1002
        %v1322 = vunpack.c.l.b16 %v1003
        %v1323 = vunpack.c.h.b16 %v1003
        %v1324 = vunpack.c.l.b16 %v1004
        %v1325 = vunpack.c.h.b16 %v1004
        %v1326 = vunpack.c.l.b16 %v1005
        %v1327 = vunpack.c.h.b16 %v1005
        %v1328 = vunpack.c.l.b16 %v1006
        %v1329 = vunpack.c.h.b16 %v1006
        %v1330 = vunpack.c.l.b16 %v1007
        %v1331 = vunpack.c.h.b16 %v1007
        %v1332 = vunpack.c.l.b16 %v1008
        %v1333 = vunpack.c.h.b16 %v1008
        %v1334 = vunpack.c.l.b16 %v1009
        %v1335 = vunpack.c.h.b16 %v1009
        %v1336 = vunpack.c.l.b16 %v1010
        %v1337 = vunpack.c.h.b16 %v1010
        %v1338 = vunpack.c.l.b16 %v1011
        %v1339 = vunpack.c.h.b16 %v1011
        %v1340 = vunpack.c.l.b16 %v1012
        %v1341 = vunpack.c.h.b16 %v1012
        %v1342 = vunpack.c.l.b16 %v1013
        %v1343 = vunpack.c.h.b16 %v1013
        %v1344 = vunpack.c.l.b16 %v1014
        %v1345 = vunpack.c.h.b16 %v1014
        %v1346 = vunpack.c.l.b16 %v1015
        %v1347 = vunpack.c.h.b16 %v1015
        %v1348 = vunpack.c.l.b16 %v1016
        %v1349 = vunpack.c.h.b16 %v1016
        %v1350 = vunpack.c.l.b16 %v1017
        %v1351 = vunpack.c.h.b16 %v1017
        %v1352 = vunpack.c.l.b16 %v1018
        %v1353 = vunpack.c.h.b16 %v1018
        %v1354 = vunpack.c.l.b16 %v1019
        %v1355 = vunpack.c.h.b16 %v1019
        %v1356 = vunpack.c.l.b16 %v1020
        %v1357 = vunpack.c.h.b16 %v1020
        %v1358 = vunpack.c.l.b16 %v1021
        %v1359 = vunpack.c.h.b16 %v1021
        %v1360 = vunpack.c.l.b16 %v1022
        %v1361 = vunpack.c.h.b16 %v1022
        %v1362 = vunpack.c.l.b16 %v1023
        %v1363 = vunpack.c.h.b16 %v1023
        %v1364 = vunpack.c.l.b16 %v1024
        %v1365 = vunpack.c.h.b16 %v1024
        %v1366 = vunpack.c.l.b16 %v1025
        %v1367 = vunpack.c.h.b16 %v1025
        %v1368 = vunpack.c.l.b16 %v1026
        %v1369 = vunpack.c.h.b16 %v1026
        %v1370 = vunpack.c.l.b16 %v1027
        %v1371 = vunpack.c.h.b16 %v1027
        %v1372 = vunpack.c.l.b16 %v1028
        %v1373 = vunpack.c.h.b16 %v1028
        %v1374 = vunpack.c.l.b16 %v1029
        %v1375 = vunpack.c.h.b16 %v1029
        %v1376 = vunpack.c.l.b16 %v1030
        %v1377 = vunpack.c.h.b16 %v1030
        %v1378 = vunpack.c.l.b16 %v1031
        %v1379 = vunpack.c.h.b16 %v1031
        %v1380 = vunpack.c.l.b16 %v1032
        %v1381 = vunpack.c.h.b16 %v1032
        %v1382 = vunpack.c.l.b16 %v1033
        %v1383 = vunpack.c.h.b16 %v1033
        %v1384 = vunpack.c.l.b16 %v1034
        %v1385 = vunpack.c.h.b16 %v1034
        %v1386 = vunpack.c.l.b16 %v1035
        %v1387 = vunpack.c.h.b16 %v1035
        %v1388 = vunpack.c.l.b16 %v1036
        %v1389 = vunpack.c.h.b16 %v1036
        %v1390 = vunpack.c.l.b16 %v1037
        %v1391 = vunpack.c.h.b16 %v1037
        %v1392 = vunpack.c.l.b16 %v1038
        %v1393 = vunpack.c.h.b16 %v1038
        %v1394 = vunpack.c.l.b16 %v1039
        %v1395 = vunpack.c.h.b16 %v1039
        %v1396 = vunpack.c.l.b16 %v1040
        %v1397 = vunpack.c.h.b16 %v1040
        %v1398 = vunpack.c.l.b16 %v1041
        %v1399 = vunpack.c.h.b16 %v1041
        %v1400 = vunpack.c.l.b16 %v1042
        %v1401 = vunpack.c.h.b16 %v1042
        %v1402 = vunpack.c.l.b16 %v1043
        %v1403 = vunpack.c.h.b16 %v1043
        %v1404 = vunpack.c.l.b16 %v1044
        %v1405 = vunpack.c.h.b16 %v1044
        %v1406 = vunpack.c.l.b16 %v1045
        %v1407 = vunpack.c.h.b16 %v1045
        %v1408 = vunpack.c.l.b16 %v1046
        %v1409 = vunpack.c.h.b16 %v1046
        %v1410 = vunpack.c.l.b16 %v1047
        %v1411 = vunpack.c.h.b16 %v1047
        %v1412 = vunpack.c.l.b16 %v1048
        %v1413 = vunpack.c.h.b16 %v1048
        %v1414 = vunpack.c.l.b16 %v1049
        %v1415 = vunpack.c.h.b16 %v1049
        %v1416 = vunpack.c.l.b16 %v1050
        %v1417 = vunpack.c.h.b16 %v1050
        %v1418 = vunpack.c.l.b16 %v1051
        %v1419 = vunpack.c.h.b16 %v1051
        %v1420 = vunpack.c.l.b16 %v1052
        %v1421 = vunpack.c.h.b16 %v1052
        %v1422 = vunpack.c.l.b16 %v1053
        %v1423 = vunpack.c.h.b16 %v1053
        %v1424 = vunpack.c.l.b16 %v1054
        %v1425 = vunpack.c.h.b16 %v1054
        %v1426 = vunpack.c.l.b16 %v1055
        %v1427 = vunpack.c.h.b16 %v1055
        %v1428 = vunpack.c.l.b16 %v1056
        %v1429 = vunpack.c.h.b16 %v1056
        %v1430 = vunpack.c.l.b16 %v1057
        %v1431 = vunpack.c.h.b16 %v1057
        %v1432 = vunpack.c.l.b16 %v1058
        %v1433 = vunpack.c.h.b16 %v1058
        %v1434 = vunpack.c.l.b16 %v1059
        %v1435 = vunpack.c.h.b16 %v1059
        %v1436 = vunpack.c.l.b16 %v1060
        %v1437 = vunpack.c.h.b16 %v1060
        %v1438 = vunpack.c.l.b16 %v1061
        %v1439 = vunpack.c.h.b16 %v1061
        %v1440 = vunpack.c.l.b16 %v1062
        %v1441 = vunpack.c.h.b16 %v1062
        %v1442 = vunpack.c.l.b16 %v1063
        %v1443 = vunpack.c.h.b16 %v1063
        %v1444 = vunpack.c.l.b16 %v1064
        %v1445 = vunpack.c.h.b16 %v1064
        %v1446 = vunpack.c.l.b16 %v1065
        %v1447 = vunpack.c.h.b16 %v1065
        %v1448 = vunpack.c.l.b16 %v1066
        %v1449 = vunpack.c.h.b16 %v1066
        %v1450 = vunpack.c.l.b16 %v1067
        %v1451 = vunpack.c.h.b16 %v1067
        %v1452 = vunpack.c.l.b16 %v1068
        %v1453 = vunpack.c.h.b16 %v1068
        %v1454 = vunpack.c.l.b16 %v1069
        %v1455 = vunpack.c.h.b16 %v1069
        %v1456 = vunpack.c.l.b16 %v1070
        %v1457 = vunpack.c.h.b16 %v1070
        %v1458 = vunpack.c.l.b16 %v1071
        %v1459 = vunpack.c.h.b16 %v1071
        %v1460 = vunpack.c.l.b16 %v1072
        %v1461 = vunpack.c.h.b16 %v1072
        %v1462 = vunpack.c.l.b16 %v1073
        %v1463 = vunpack.c.h.b16 %v1073
        %v1464 = vunpack.c.l.b16 %v1074
        %v1465 = vunpack.c.h.b16 %v1074
        %v1466 = vunpack.c.l.b16 %v1075
        %v1467 = vunpack.c.h.b16 %v1075
        %v1468 = vunpack.c.l.b16 %v1076
        %v1469 = vunpack.c.h.b16 %v1076
        %v1470 = vunpack.c.l.b16 %v1077
        %v1471 = vunpack.c.h.b16 %v1077
        %v1472 = vunpack.c.l.b16 %v1078
        %v1473 = vunpack.c.h.b16 %v1078
        %v1474 = vunpack.c.l.b16 %v1079
        %v1475 = vunpack.c.h.b16 %v1079
        %v1476 = vunpack.c.l.b16 %v1080
        %v1477 = vunpack.c.h.b16 %v1080
        %v1478 = vunpack.c.l.b16 %v1081
        %v1479 = vunpack.c.h.b16 %v1081
        %v1480 = vunpack.c.l.b16 %v1082
        %v1481 = vunpack.c.h.b16 %v1082
        %v1482 = vunpack.c.l.b16 %v1083
        %v1483 = vunpack.c.h.b16 %v1083
        %v1484 = vunpack.c.l.b16 %v1084
        %v1485 = vunpack.c.h.b16 %v1084
        %v1486 = vunpack.c.l.b16 %v1085
        %v1487 = vunpack.c.h.b16 %v1085
        %v1488 = vunpack.c.l.b16 %v1086
        %v1489 = vunpack.c.h.b16 %v1086
        %v1490 = vunpack.c.l.b16 %v1087
        %v1491 = vunpack.c.h.b16 %v1087
        %v1492 = vunpack.c.l.b16 %v1088
        %v1493 = vunpack.c.h.b16 %v1088
        %v1494 = vunpack.c.l.b16 %v1089
        %v1495 = vunpack.c.h.b16 %v1089
        %v1496 = vunpack.c.l.b16 %v1090
        %v1497 = vunpack.c.h.b16 %v1090
        %v1498 = vunpack.c.l.b16 %v1091
        %v1499 = vunpack.c.h.b16 %v1091
        %v1500 = vunpack.c.l.b16 %v1092
        %v1501 = vunpack.c.h.b16 %v1092
        %v1502 = vpack.c.b16 %v1254, %v1246
        %v1503 = vpack.c.b16 %v1255, %v1247
        %v1504 = vpack.c.b16 %v1256, %v1248
        %v1505 = vpack.c.b16 %v1257, %v1249
        %v1506 = vpack.c.b16 %v1258, %v1250
        %v1507 = vpack.c.b16 %v1259, %v1251
        %v1508 = vpack.c.b16 %v1260, %v1252
        %v1509 = vpack.c.b16 %v1261, %v1253
        %v1510 = vpack.c.b16 %v1270, %v1262
        %v1511 = vpack.c.b16 %v1271, %v1263
        %v1512 = vpack.c.b16 %v1272, %v1264
        %v1513 = vpack.c.b16 %v1273, %v1265
        %v1514 = vpack.c.b16 %v1274, %v1266
        %v1515 = vpack.c.b16 %v1275, %v1267
        %v1516 = vpack.c.b16 %v1276, %v1268
        %v1517 = vpack.c.b16 %v1277, %v1269
        %v1518 = vpack.c.b16 %v1286, %v1278
        %v1519 = vpack.c.b16 %v1287, %v1279
        %v1520 = vpack.c.b16 %v1288, %v1280
        %v1521 = vpack.c.b16 %v1289, %v1281
        %v1522 = vpack.c.b16 %v1290, %v1282
        %v1523 = vpack.c.b16 %v1291, %v1283
        %v1524 = vpack.c.b16 %v1292, %v1284
        %v1525 = vpack.c.b16 %v1293, %v1285
        %v1526 = vpack.c.b16 %v1302, %v1294
        %v1527 = vpack.c.b16 %v1303, %v1295
        %v1528 = vpack.c.b16 %v1304, %v1296
        %v1529 = vpack.c.b16 %v1305, %v1297
        %v1530 = vpack.c.b16 %v1306, %v1298
        %v1531 = vpack.c.b16 %v1307, %v1299
        %v1532 = vpack.c.b16 %v1308, %v1300
        %v1533 = vpack.c.b16 %v1309, %v1301
        %v1534 = vpack.c.b16 %v1318, %v1310
        %v1535 = vpack.c.b16 %v1319, %v1311
        %v1536 = vpack.c.b16 %v1320, %v1312
        %v1537 = vpack.c.b16 %v1321, %v1313
        %v1538 = vpack.c.b16 %v1322, %v1314
        %v1539 = vpack.c.b16 %v1323, %v1315
        %v1540 = vpack.c.b16 %v1324, %v1316
        %v1541 = vpack.c.b16 %v1325, %v1317
        %v1542 = vpack.c.b16 %v1334, %v1326
        %v1543 = vpack.c.b16 %v1335, %v1327
        %v1544 = vpack.c.b16 %v1336, %v1328
        %v1545 = vpack.c.b16 %v1337, %v1329
        %v1546 = vpack.c.b16 %v1338, %v1330
        %v1547 = vpack.c.b16 %v1339, %v1331
        %v1548 = vpack.c.b16 %v1340, %v1332
        %v1549 = vpack.c.b16 %v1341, %v1333
        %v1550 = vpack.c.b16 %v1350, %v1342
        %v1551 = vpack.c.b16 %v1351, %v1343
        %v1552 = vpack.c.b16 %v1352, %v1344
        %v1553 = vpack.c.b16 %v1353, %v1345
        %v1554 = vpack.c.b16 %v1354, %v1346
        %v1555 = vpack.c.b16 %v1355, %v1347
        %v1556 = vpack.c.b16 %v1356, %v1348
        %v1557 = vpack.c.b16 %v1357, %v1349
        %v1558 = vpack.c.b16 %v1366, %v1358
        %v1559 = vpack.c.b16 %v1367, %v1359
        %v1560 = vpack.c.b16 %v1368, %v1360
        %v1561 = vpack.c.b16 %v1369, %v1361
        %v1562 = vpack.c.b16 %v1370, %v1362
        %v1563 = vpack.c.b16 %v1371, %v1363
        %v1564 = vpack.c.b16 %v1372, %v1364
        %v1565 = vpack.c.b16 %v1373, %v1365
        %v1566 = vpack.c.b16 %v1382, %v1374
        %v1567 = vpack.c.b16 %v1383, %v1375
        %v1568 = vpack.c.b16 %v1384, %v1376
        %v1569 = vpack.c.b16 %v1385, %v1377
        %v1570 = vpack.c.b16 %v1386, %v1378
        %v1571 = vpack.c.b16 %v1387, %v1379
        %v1572 = vpack.c.b16 %v1388, %v1380
        %v1573 = vpack.c.b16 %v1389, %v1381
        %v1574 = vpack.c.b16 %v1398, %v1390
        %v1575 = vpack.c.b16 %v1399, %v1391
        %v1576 = vpack.c.b16 %v1400, %v1392
        %v1577 = vpack.c.b16 %v1401, %v1393
        %v1578 = vpack.c.b16 %v1402, %v1394
        %v1579 = vpack.c.b16 %v1403, %v1395
        %v1580 = vpack.c.b16 %v1404, %v1396
        %v1581 = vpack.c.b16 %v1405, %v1397
        %v1582 = vpack.c.b16 %v1414, %v1406
        %v1583 = vpack.c.b16 %v1415, %v1407
        %v1584 = vpack.c.b16 %v1416, %v1408
        %v1585 = vpack.c.b16 %v1417, %v1409
        %v1586 = vpack.c.b16 %v1418, %v1410
        %v1587 = vpack.c.b16 %v1419, %v1411
        %v1588 = vpack.c.b16 %v1420, %v1412
        %v1589 = vpack.c.b16 %v1421, %v1413
        %v1590 = vpack.c.b16 %v1430, %v1422
        %v1591 = vpack.c.b16 %v1431, %v1423
        %v1592 = vpack.c.b16 %v1432, %v1424
        %v1593 = vpack.c.b16 %v1433, %v1425
        %v1594 = vpack.c.b16 %v1434, %v1426
        %v1595 = vpack.c.b16 %v1435, %v1427
        %v1596 = vpack.c.b16 %v1436, %v1428
        %v1597 = vpack.c.b16 %v1437, %v1429
        %v1598 = vpack.c.b16 %v1446, %v1438
        %v1599 = vpack.c.b16 %v1447, %v1439
        %v1600 = vpack.c.b16 %v1448, %v1440
        %v1601 = vpack.c.b16 %v1449, %v1441
        %v1602 = vpack.c.b16 %v1450, %v1442
        %v1603 = vpack.c.b16 %v1451, %v1443
        %v1604 = vpack.c.b16 %v1452, %v1444
        %v1605 = vpack.c.b16 %v1453, %v1445
        %v1606 = vpack.c.b16 %v1462, %v1454
        %v1607 = vpack.c.b16 %v1463, %v1455
        %v1608 = vpack.c.b16 %v1464, %v1456
        %v1609 = vpack.c.b16 %v1465, %v1457
        %v1610 = vpack.c.b16 %v1466, %v1458
        %v1611 = vpack.c.b16 %v1467, %v1459
        %v1612 = vpack.c.b16 %v1468, %v1460
        %v1613 = vpack.c.b16 %v1469, %v1461
        %v1614 = vpack.c.b16 %v1478, %v1470
        %v1615 = vpack.c.b16 %v1479, %v1471
        %v1616 = vpack.c.b16 %v1480, %v1472
        %v1617 = vpack.c.b16 %v1481, %v1473
        %v1618 = vpack.c.b16 %v1482, %v1474
        %v1619 = vpack.c.b16 %v1483, %v1475
        %v1620 = vpack.c.b16 %v1484, %v1476
        %v1621 = vpack.c.b16 %v1485, %v1477
        %v1622 = vpack.c.b16 %v1494, %v1486
        %v1623 = vpack.c.b16 %v1495, %v1487
        %v1624 = vpack.c.b16 %v1496, %v1488
        %v1625 = vpack.c.b16 %v1497, %v1489
        %v1626 = vpack.c.b16 %v1498, %v1490
        %v1627 = vpack.c.b16 %v1499, %v1491
        %v1628 = vpack.c.b16 %v1500, %v1492
        %v1629 = vpack.c.b16 %v1501, %v1493
        %1758 = vmatpush.bf16.msra.mxu0 %v1558
        %1759 = vmatpush.bf16.msra.mxu0 %v1550
        %1760 = vmatpush.bf16.msra.mxu0 %v1542
        %1761 = vmatpush.bf16.msra.mxu0 %v1534
        %1762 = vmatpush.bf16.msra.mxu0 %v1526
        %1763 = vmatpush.bf16.msra.mxu0 %v1518
        %1764 = vmatpush.bf16.msra.mxu0 %v1510
        %1765 = vmatpush.bf16.msra.mxu0 %v1502
        %1766 = vmatmul.bf16.gmra.mxu0 %v1114
        %v1767 = vpop.f32.mrf.mxu0
        %v1768 = vadd.f32 %v1095, %v1767
        %v1769 = vpop.f32.mrf.mxu0
        %1770 = vdwg.mxu0
        %1771 = vmatpush.bf16.msra.mxu0 %v1622
        %1772 = vmatpush.bf16.msra.mxu0 %v1614
        %1773 = vmatpush.bf16.msra.mxu0 %v1606
        %1774 = vmatpush.bf16.msra.mxu0 %v1598
        %1775 = vmatpush.bf16.msra.mxu0 %v1590
        %1776 = vmatpush.bf16.msra.mxu0 %v1582
        %1777 = vmatpush.bf16.msra.mxu0 %v1574
        %1778 = vmatpush.bf16.msra.mxu0 %v1566
        %1779 = vmatmul.bf16.gmra.mxu0 %v1115
        %v1780 = vpop.f32.mrf.mxu0
        %v1781 = vadd.f32 %v1768, %v1780
        %v1782 = vpop.f32.mrf.mxu0
        %1783 = vdwg.mxu0
        %1784 = vmatpush.bf16.msra.mxu0 %v1559
        %1785 = vmatpush.bf16.msra.mxu0 %v1551
        %1786 = vmatpush.bf16.msra.mxu0 %v1543
        %1787 = vmatpush.bf16.msra.mxu0 %v1535
        %1788 = vmatpush.bf16.msra.mxu0 %v1527
        %1789 = vmatpush.bf16.msra.mxu0 %v1519
        %1790 = vmatpush.bf16.msra.mxu0 %v1511
        %1791 = vmatpush.bf16.msra.mxu0 %v1503
        %1792 = vmatmul.bf16.gmra.mxu0 %v1114
        %v1793 = vpop.f32.mrf.mxu0
        %v1794 = vadd.f32 %v1096, %v1793
        %v1795 = vpop.f32.mrf.mxu0
        %1796 = vdwg.mxu0
        %1797 = vmatpush.bf16.msra.mxu0 %v1623
        %1798 = vmatpush.bf16.msra.mxu0 %v1615
        %1799 = vmatpush.bf16.msra.mxu0 %v1607
        %1800 = vmatpush.bf16.msra.mxu0 %v1599
        %1801 = vmatpush.bf16.msra.mxu0 %v1591
        %1802 = vmatpush.bf16.msra.mxu0 %v1583
        %1803 = vmatpush.bf16.msra.mxu0 %v1575
        %1804 = vmatpush.bf16.msra.mxu0 %v1567
        %1805 = vmatmul.bf16.gmra.mxu0 %v1115
        %v1806 = vpop.f32.mrf.mxu0
        %v1807 = vadd.f32 %v1794, %v1806
        %v1808 = vpop.f32.mrf.mxu0
        %1809 = vdwg.mxu0
        %1810 = vmatpush.bf16.msra.mxu0 %v1560
        %1811 = vmatpush.bf16.msra.mxu0 %v1552
        %1812 = vmatpush.bf16.msra.mxu0 %v1544
        %1813 = vmatpush.bf16.msra.mxu0 %v1536
        %1814 = vmatpush.bf16.msra.mxu0 %v1528
        %1815 = vmatpush.bf16.msra.mxu0 %v1520
        %1816 = vmatpush.bf16.msra.mxu0 %v1512
        %1817 = vmatpush.bf16.msra.mxu0 %v1504
        %1818 = vmatmul.bf16.gmra.mxu0 %v1114
        %v1819 = vpop.f32.mrf.mxu0
        %v1820 = vadd.f32 %v1097, %v1819
        %v1821 = vpop.f32.mrf.mxu0
        %1822 = vdwg.mxu0
        %1823 = vmatpush.bf16.msra.mxu0 %v1624
        %1824 = vmatpush.bf16.msra.mxu0 %v1616
        %1825 = vmatpush.bf16.msra.mxu0 %v1608
        %1826 = vmatpush.bf16.msra.mxu0 %v1600
        %1827 = vmatpush.bf16.msra.mxu0 %v1592
        %1828 = vmatpush.bf16.msra.mxu0 %v1584
        %1829 = vmatpush.bf16.msra.mxu0 %v1576
        %1830 = vmatpush.bf16.msra.mxu0 %v1568
        %1831 = vmatmul.bf16.gmra.mxu0 %v1115
        %v1832 = vpop.f32.mrf.mxu0
        %v1833 = vadd.f32 %v1820, %v1832
        %v1834 = vpop.f32.mrf.mxu0
        %1835 = vdwg.mxu0
        %1836 = vmatpush.bf16.msra.mxu0 %v1561
        %1837 = vmatpush.bf16.msra.mxu0 %v1553
        %1838 = vmatpush.bf16.msra.mxu0 %v1545
        %1839 = vmatpush.bf16.msra.mxu0 %v1537
        %1840 = vmatpush.bf16.msra.mxu0 %v1529
        %1841 = vmatpush.bf16.msra.mxu0 %v1521
        %1842 = vmatpush.bf16.msra.mxu0 %v1513
        %1843 = vmatpush.bf16.msra.mxu0 %v1505
        %1844 = vmatmul.bf16.gmra.mxu0 %v1114
        %v1845 = vpop.f32.mrf.mxu0
        %v1846 = vadd.f32 %v1098, %v1845
        %v1847 = vpop.f32.mrf.mxu0
        %1848 = vdwg.mxu0
        %1849 = vmatpush.bf16.msra.mxu0 %v1625
        %1850 = vmatpush.bf16.msra.mxu0 %v1617
        %1851 = vmatpush.bf16.msra.mxu0 %v1609
        %1852 = vmatpush.bf16.msra.mxu0 %v1601
        %1853 = vmatpush.bf16.msra.mxu0 %v1593
        %1854 = vmatpush.bf16.msra.mxu0 %v1585
        %1855 = vmatpush.bf16.msra.mxu0 %v1577
        %1856 = vmatpush.bf16.msra.mxu0 %v1569
        %1857 = vmatmul.bf16.gmra.mxu0 %v1115
        %v1858 = vpop.f32.mrf.mxu0
        %v1859 = vadd.f32 %v1846, %v1858
        %v1860 = vpop.f32.mrf.mxu0
        %1861 = vdwg.mxu0
        %1862 = vmatpush.bf16.msra.mxu0 %v1562
        %1863 = vmatpush.bf16.msra.mxu0 %v1554
        %1864 = vmatpush.bf16.msra.mxu0 %v1546
        %1865 = vmatpush.bf16.msra.mxu0 %v1538
        %1866 = vmatpush.bf16.msra.mxu0 %v1530
        %1867 = vmatpush.bf16.msra.mxu0 %v1522
        %1868 = vmatpush.bf16.msra.mxu0 %v1514
        %1869 = vmatpush.bf16.msra.mxu0 %v1506
        %1870 = vmatmul.bf16.gmra.mxu0 %v1114
        %v1871 = vpop.f32.mrf.mxu0
        %v1872 = vadd.f32 %v1099, %v1871
        %v1873 = vpop.f32.mrf.mxu0
        %1874 = vdwg.mxu0
        %1875 = vmatpush.bf16.msra.mxu0 %v1626
        %1876 = vmatpush.bf16.msra.mxu0 %v1618
        %1877 = vmatpush.bf16.msra.mxu0 %v1610
        %1878 = vmatpush.bf16.msra.mxu0 %v1602
        %1879 = vmatpush.bf16.msra.mxu0 %v1594
        %1880 = vmatpush.bf16.msra.mxu0 %v1586
        %1881 = vmatpush.bf16.msra.mxu0 %v1578
        %1882 = vmatpush.bf16.msra.mxu0 %v1570
        %1883 = vmatmul.bf16.gmra.mxu0 %v1115
        %v1884 = vpop.f32.mrf.mxu0
        %v1885 = vadd.f32 %v1872, %v1884
        %v1886 = vpop.f32.mrf.mxu0
        %1887 = vdwg.mxu0
        %1888 = vmatpush.bf16.msra.mxu0 %v1563
        %1889 = vmatpush.bf16.msra.mxu0 %v1555
        %1890 = vmatpush.bf16.msra.mxu0 %v1547
        %1891 = vmatpush.bf16.msra.mxu0 %v1539
        %1892 = vmatpush.bf16.msra.mxu0 %v1531
        %1893 = vmatpush.bf16.msra.mxu0 %v1523
        %1894 = vmatpush.bf16.msra.mxu0 %v1515
        %1895 = vmatpush.bf16.msra.mxu0 %v1507
        %1896 = vmatmul.bf16.gmra.mxu0 %v1114
        %v1897 = vpop.f32.mrf.mxu0
        %v1898 = vadd.f32 %v1100, %v1897
        %v1899 = vpop.f32.mrf.mxu0
        %1900 = vdwg.mxu0
        %1901 = vmatpush.bf16.msra.mxu0 %v1627
        %1902 = vmatpush.bf16.msra.mxu0 %v1619
        %1903 = vmatpush.bf16.msra.mxu0 %v1611
        %1904 = vmatpush.bf16.msra.mxu0 %v1603
        %1905 = vmatpush.bf16.msra.mxu0 %v1595
        %1906 = vmatpush.bf16.msra.mxu0 %v1587
        %1907 = vmatpush.bf16.msra.mxu0 %v1579
        %1908 = vmatpush.bf16.msra.mxu0 %v1571
        %1909 = vmatmul.bf16.gmra.mxu0 %v1115
        %v1910 = vpop.f32.mrf.mxu0
        %v1911 = vadd.f32 %v1898, %v1910
        %v1912 = vpop.f32.mrf.mxu0
        %1913 = vdwg.mxu0
        %1914 = vmatpush.bf16.msra.mxu0 %v1564
        %1915 = vmatpush.bf16.msra.mxu0 %v1556
        %1916 = vmatpush.bf16.msra.mxu0 %v1548
        %1917 = vmatpush.bf16.msra.mxu0 %v1540
        %1918 = vmatpush.bf16.msra.mxu0 %v1532
        %1919 = vmatpush.bf16.msra.mxu0 %v1524
        %1920 = vmatpush.bf16.msra.mxu0 %v1516
        %1921 = vmatpush.bf16.msra.mxu0 %v1508
        %1922 = vmatmul.bf16.gmra.mxu0 %v1114
        %v1923 = vpop.f32.mrf.mxu0
        %v1924 = vadd.f32 %v1101, %v1923
        %v1925 = vpop.f32.mrf.mxu0
        %1926 = vdwg.mxu0
        %1927 = vmatpush.bf16.msra.mxu0 %v1628
        %1928 = vmatpush.bf16.msra.mxu0 %v1620
        %1929 = vmatpush.bf16.msra.mxu0 %v1612
        %1930 = vmatpush.bf16.msra.mxu0 %v1604
        %1931 = vmatpush.bf16.msra.mxu0 %v1596
        %1932 = vmatpush.bf16.msra.mxu0 %v1588
        %1933 = vmatpush.bf16.msra.mxu0 %v1580
        %1934 = vmatpush.bf16.msra.mxu0 %v1572
        %1935 = vmatmul.bf16.gmra.mxu0 %v1115
        %v1936 = vpop.f32.mrf.mxu0
        %v1937 = vadd.f32 %v1924, %v1936
        %v1938 = vpop.f32.mrf.mxu0
        %1939 = vdwg.mxu0
        %1940 = vmatpush.bf16.msra.mxu0 %v1565
        %1941 = vmatpush.bf16.msra.mxu0 %v1557
        %1942 = vmatpush.bf16.msra.mxu0 %v1549
        %1943 = vmatpush.bf16.msra.mxu0 %v1541
        %1944 = vmatpush.bf16.msra.mxu0 %v1533
        %1945 = vmatpush.bf16.msra.mxu0 %v1525
        %1946 = vmatpush.bf16.msra.mxu0 %v1517
        %1947 = vmatpush.bf16.msra.mxu0 %v1509
        %1948 = vmatmul.bf16.gmra.mxu0 %v1114
        %v1949 = vpop.f32.mrf.mxu0
        %v1950 = vadd.f32 %v1102, %v1949
        %v1951 = vpop.f32.mrf.mxu0
        %1952 = vdwg.mxu0
        %1953 = vmatpush.bf16.msra.mxu0 %v1629
        %1954 = vmatpush.bf16.msra.mxu0 %v1621
        %1955 = vmatpush.bf16.msra.mxu0 %v1613
        %1956 = vmatpush.bf16.msra.mxu0 %v1605
        %1957 = vmatpush.bf16.msra.mxu0 %v1597
        %1958 = vmatpush.bf16.msra.mxu0 %v1589
        %1959 = vmatpush.bf16.msra.mxu0 %v1581
        %1960 = vmatpush.bf16.msra.mxu0 %v1573
        %1961 = vmatmul.bf16.gmra.mxu0 %v1115
        %v1962 = vpop.f32.mrf.mxu0
        %v1963 = vadd.f32 %v1950, %v1962
        %v1964 = vpop.f32.mrf.mxu0
        %1965 = vdwg.mxu0
        %1966 = vst [vmem:[%s232] sm:$0xff] %v1781
        %1967 = vst [vmem:[%s232 + $0x8] sm:$0xff] %v1807
        %1968 = vst [vmem:[%s232 + $0x10] sm:$0xff] %v1833
        %1969 = vst [vmem:[%s232 + $0x18] sm:$0xff] %v1859
        %1970 = vst [vmem:[%s232 + $0x20] sm:$0xff] %v1885
        %1971 = vst [vmem:[%s232 + $0x28] sm:$0xff] %v1911
        %1972 = vst [vmem:[%s232 + $0x30] sm:$0xff] %v1937
        %1973 = vst [vmem:[%s232 + $0x38] sm:$0xff] %v1963
        %s1974 = sand.u32 %s110, 1
        %s1975 = scalar_lea.sflag [#allocation9], %s1974
        %s1976 = sand.u32 %s110, 1
        %s1977 = smul.addr %s1976, 64
        %s1978 = scalar_lea.vmem [#allocation12], %s1977
        // Predicated region
        $region41: #{tpu_custom_call.1} parent=27 // pred_check
          %p1979 = pneg %p120
        $region42: #{tpu_custom_call.1} parent=27 // pred_check_branch
          %1981 = sbr.rel (%p1979) target = $region44
        $region43: #{tpu_custom_call.1} parent=27 // pred_region
          %s1982 = sadd.s32 %s36, %s37
          %s1983 = smul.u32 8, %s1982
          %1985 = vsyncadd %s1975, 0
          %s1986 = smul.addr %s1983, 8
          %s1987 = scalar_lea.hbm %s4, %s1986
          %s1989 = sshll.u32 %s1978, 4
          %s1990 = int_to_ptr.vmem [resolvable:$true] %s1989
          %s1991 = sshll.u32 %s1987, 4
          %s1992 = int_to_ptr.hbm [resolvable:$true] %s1991
          %1994 = dma.vmem_to_hbm [thread:$0]  %s1990, 1024, %s1992, %s1975
        $region44: #{tpu_custom_call.1} parent=27 // pred_fallthru
          _
      $region28: #{tpu_custom_call.1} parent=5 // pred_fallthru
        _
      %p1995 = scmp.le.s32.totalorder 2, %s27
      // Predicated region
      $region45: #{tpu_custom_call.1} parent=5 // pred_check
        %p1996 = pneg %p1995
      $region46: #{tpu_custom_call.1} parent=5 // pred_check_branch
        %1998 = sbr.rel (%p1996) target = $region48
      $region47: #{tpu_custom_call.1} parent=5 // pred_region
        %s1999 = ssub.s32 %s27, 2
        // Predicated region
        $region49: #{tpu_custom_call.1} parent=47 // pred_check
          %p2000 = pneg %p126
        $region50: #{tpu_custom_call.1} parent=47 // pred_check_branch
          %2002 = sbr.rel (%p2000) target = $region52
        $region51: #{tpu_custom_call.1} parent=47 // pred_region
          %s2003 = sand.u32 %s111, 1
          %s2004 = scalar_lea.sflag [#allocation9], %s2003
          %s2005 = sand.u32 %s111, 1
          %s2006 = smul.addr %s2005, 64
          %s2007 = scalar_lea.vmem [#allocation12], %s2006
          %2009 = dma.done %s2004, 1024
        $region52: #{tpu_custom_call.1} parent=47 // pred_fallthru
          _
      $region48: #{tpu_custom_call.1} parent=5 // pred_fallthru
        _
    $region6: #{tpu_custom_call.1} parent=1 // loop_footer
      %s31 = sadd.s32 1, %s27
    $region7: #{tpu_custom_call.1} parent=1 // loop_footer_branch
      %26 = sbr.rel target = $region3
    $region8: #{tpu_custom_call.1} parent=1 // loop_exit
      _
    %2010 = vsyncpa [#allocation8], 1
    %s2011 = scalar_lea.sflag [#allocation8], 1
    %2012 = vsyncpa %s2011, 1
    %2013 = vsyncpa [#allocation11], 1
    %s2014 = scalar_lea.sflag [#allocation11], 1
    %2015 = vsyncpa %s2014, 1
    %2016 = vsyncpa [#allocation9], 1
    %s2017 = scalar_lea.sflag [#allocation9], 1
    %2018 = vsyncpa %s2017, 1
  %2019 = vsyncmov [#allocation4]
  %s2020 = vpop.sfrf %2019
  %p2021 = scmp.eq.s32.totalorder %s2020, 0
  %p2022 = pneg %p2021
  %2024 = shalt.err (%p2022)
  %s2025 = scalar_lea.sflag [#allocation4], 1
  %2026 = vsyncmov %s2025
  %s2027 = vpop.sfrf %2026
  %p2028 = scmp.eq.s32.totalorder %s2027, 0
  %p2029 = pneg %p2028
  %2031 = shalt.err (%p2029)
  %s2032 = scalar_lea.sflag [#allocation4], 2
  %2033 = vsyncmov %s2032
  %s2034 = vpop.sfrf %2033
  %p2035 = scmp.eq.s32.totalorder %s2034, 0
  %p2036 = pneg %p2035
  %2038 = shalt.err (%p2036)
  %s2039 = scalar_lea.sflag [#allocation4], 3
  %2040 = vsyncmov %s2039
  %s2041 = vpop.sfrf %2040
  %p2042 = scmp.eq.s32.totalorder %s2041, 0
  %p2043 = pneg %p2042
  %2045 = shalt.err (%p2043)
  %s2046 = scalar_lea.sflag [#allocation4], 4
  %2047 = vsyncmov %s2046
  %s2048 = vpop.sfrf %2047
  %p2049 = scmp.eq.s32.totalorder %s2048, 0
  %p2050 = pneg %p2049
  %2052 = shalt.err (%p2050)
  %s2053 = scalar_lea.sflag [#allocation4], 5
  %2054 = vsyncmov %s2053
  %s2055 = vpop.sfrf %2054
  %p2056 = scmp.eq.s32.totalorder %s2055, 0
  %p2057 = pneg %p2056
  %2059 = shalt.err (%p2057)
  %s2060 = scalar_lea.sflag [#allocation4], 6
  %2061 = vsyncmov %s2060
  %s2062 = vpop.sfrf %2061
  %p2063 = scmp.eq.s32.totalorder %s2062, 0
  %p2064 = pneg %p2063
  %2066 = shalt.err (%p2064)
  %s2067 = scalar_lea.sflag [#allocation4], 7
  %2068 = vsyncmov %s2067
  %s2069 = vpop.sfrf %2068
  %p2070 = scmp.eq.s32.totalorder %s2069, 0
  %p2071 = pneg %p2070
  %2073 = shalt.err (%p2071)
  %s2074 = scalar_lea.sflag [#allocation4], 8
  %2075 = vsyncmov %s2074
  %s2076 = vpop.sfrf %2075
  %p2077 = scmp.eq.s32.totalorder %s2076, 0
  %p2078 = pneg %p2077
  %2080 = shalt.err (%p2078)
  %s2081 = scalar_lea.sflag [#allocation4], 9
  %2082 = vsyncmov %s2081
  %s2083 = vpop.sfrf %2082
  %p2084 = scmp.eq.s32.totalorder %s2083, 0
  %p2085 = pneg %p2084
  %2087 = shalt.err (%p2085)
  %s2088 = scalar_lea.sflag [#allocation4], 10
  %2089 = vsyncmov %s2088
  %s2090 = vpop.sfrf %2089
  %p2091 = scmp.eq.s32.totalorder %s2090, 0
  %p2092 = pneg %p2091
  %2094 = shalt.err (%p2092)
  %s2095 = scalar_lea.sflag [#allocation4], 11
  %2096 = vsyncmov %s2095
  %s2097 = vpop.sfrf %2096
  %p2098 = scmp.eq.s32.totalorder %s2097, 0
  %p2099 = pneg %p2098
  %2101 = shalt.err (%p2099)
  %s2102 = scalar_lea.sflag [#allocation4], 12
  %2103 = vsyncmov %s2102
  %s2104 = vpop.sfrf %2103
  %p2105 = scmp.eq.s32.totalorder %s2104, 0
  %p2106 = pneg %p2105
  %2108 = shalt.err (%p2106)
  %s2109 = scalar_lea.sflag [#allocation4], 13
  %2110 = vsyncmov %s2109
  %s2111 = vpop.sfrf %2110
  %p2112 = scmp.eq.s32.totalorder %s2111, 0
  %p2113 = pneg %p2112
  %2115 = shalt.err (%p2113)
  %s2116 = scalar_lea.sflag [#allocation4], 14
  %2117 = vsyncmov %s2116
  %s2118 = vpop.sfrf %2117
  %p2119 = scmp.eq.s32.totalorder %s2118, 0
  %p2120 = pneg %p2119
  %2122 = shalt.err (%p2120)
  %s2123 = scalar_lea.sflag [#allocation4], 15
  %2124 = vsyncmov %s2123
  %s2125 = vpop.sfrf %2124
  %p2126 = scmp.eq.s32.totalorder %s2125, 0
  %p2127 = pneg %p2126
  %2129 = shalt.err (%p2127)
  %s2130 = scalar_lea.sflag [#allocation4], 16
  %2131 = vsyncmov %s2130
  %s2132 = vpop.sfrf %2131
  %p2133 = scmp.eq.s32.totalorder %s2132, 0
  %p2134 = pneg %p2133
  %2136 = shalt.err (%p2134)
  %s2137 = scalar_lea.sflag [#allocation4], 17
  %2138 = vsyncmov %s2137
  %s2139 = vpop.sfrf %2138
  %p2140 = scmp.eq.s32.totalorder %s2139, 0
  %p2141 = pneg %p2140
  %2143 = shalt.err (%p2141)
  %s2144 = scalar_lea.sflag [#allocation4], 18
  %2145 = vsyncmov %s2144
  %s2146 = vpop.sfrf %2145
  %p2147 = scmp.eq.s32.totalorder %s2146, 0
  %p2148 = pneg %p2147
  %2150 = shalt.err (%p2148)
  %s2151 = scalar_lea.sflag [#allocation4], 19
  %2152 = vsyncmov %s2151
  %s2153 = vpop.sfrf %2152
  %p2154 = scmp.eq.s32.totalorder %s2153, 0
  %p2155 = pneg %p2154
  %2157 = shalt.err (%p2155)
  %s2158 = scalar_lea.sflag [#allocation4], 20
  %2159 = vsyncmov %s2158
  %s2160 = vpop.sfrf %2159
  %p2161 = scmp.eq.s32.totalorder %s2160, 0
  %p2162 = pneg %p2161
  %2164 = shalt.err (%p2162)
  %s2165 = scalar_lea.sflag [#allocation4], 21
  %2166 = vsyncmov %s2165
  %s2167 = vpop.sfrf %2166
  %p2168 = scmp.eq.s32.totalorder %s2167, 0
  %p2169 = pneg %p2168
  %2171 = shalt.err (%p2169)
  %s2172 = scalar_lea.sflag [#allocation4], 22
  %2173 = vsyncmov %s2172
  %s2174 = vpop.sfrf %2173
  %p2175 = scmp.eq.s32.totalorder %s2174, 0
  %p2176 = pneg %p2175
  %2178 = shalt.err (%p2176)
  %s2179 = scalar_lea.sflag [#allocation4], 23
  %2180 = vsyncmov %s2179
  %s2181 = vpop.sfrf %2180
  %p2182 = scmp.eq.s32.totalorder %s2181, 0
  %p2183 = pneg %p2182
  %2185 = shalt.err (%p2183)
  %s2186 = scalar_lea.sflag [#allocation4], 24
  %2187 = vsyncmov %s2186
  %s2188 = vpop.sfrf %2187
  %p2189 = scmp.eq.s32.totalorder %s2188, 0
  %p2190 = pneg %p2189
  %2192 = shalt.err (%p2190)
  %s2193 = scalar_lea.sflag [#allocation4], 25
  %2194 = vsyncmov %s2193
  %s2195 = vpop.sfrf %2194
  %p2196 = scmp.eq.s32.totalorder %s2195, 0
  %p2197 = pneg %p2196
  %2199 = shalt.err (%p2197)
  %s2200 = scalar_lea.sflag [#allocation4], 26
  %2201 = vsyncmov %s2200
  %s2202 = vpop.sfrf %2201
  %p2203 = scmp.eq.s32.totalorder %s2202, 0
  %p2204 = pneg %p2203
  %2206 = shalt.err (%p2204)
  %s2207 = scalar_lea.sflag [#allocation4], 27
  %2208 = vsyncmov %s2207
  %s2209 = vpop.sfrf %2208
  %p2210 = scmp.eq.s32.totalorder %s2209, 0
  %p2211 = pneg %p2210
  %2213 = shalt.err (%p2211)
  %s2214 = scalar_lea.sflag [#allocation4], 28
  %2215 = vsyncmov %s2214
  %s2216 = vpop.sfrf %2215
  %p2217 = scmp.eq.s32.totalorder %s2216, 0
  %p2218 = pneg %p2217
  %2220 = shalt.err (%p2218)
  %s2221 = scalar_lea.sflag [#allocation4], 29
  %2222 = vsyncmov %s2221
  %s2223 = vpop.sfrf %2222
  %p2224 = scmp.eq.s32.totalorder %s2223, 0
  %p2225 = pneg %p2224
  %2227 = shalt.err (%p2225)
  %s2228 = scalar_lea.sflag [#allocation4], 30
  %2229 = vsyncmov %s2228
  %s2230 = vpop.sfrf %2229
  %p2231 = scmp.eq.s32.totalorder %s2230, 0
  %p2232 = pneg %p2231
  %2234 = shalt.err (%p2232)
  %s2235 = scalar_lea.sflag [#allocation4], 31
  %2236 = vsyncmov %s2235
  %s2237 = vpop.sfrf %2236
  %p2238 = scmp.eq.s32.totalorder %s2237, 0
  %p2239 = pneg %p2238
  %2241 = shalt.err (%p2239)

</llo_original>
